<compile_context>
chip_gen: v5e
topology: v5e:2x2
jax: 0.10.0
libtpu: 0.0.40
codegen_flags: <defaults>
</compile_context>

<pallas_src>
import functools

import jax
import jax.numpy as jnp
from jax.experimental import pallas as pl
from jax.experimental.pallas import tpu as pltpu

EPS = 1e-5  # tg.nn.norm.InstanceNorm default eps


# ---------------------------------------------------------------------------
# Fused AggBinarizationLayer kernel (channels-first: x is [dim, Npad]).
# ---------------------------------------------------------------------------
def _agg_layer_kernel(x_ref, m_ref, mask_ref, wc_ref, bc_ref, wf_ref, bf_ref,
                      o_ref, *, inv_n, num_conv, n_hops, n_fc):
    mask = mask_ref[...]            # [1, Npad]  1.0 for real nodes
    mprop = m_ref[...]              # [Npad, Npad]  (x_cf @ mprop) == (A_hat @ x)
    x = x_ref[...]                  # [dim, Npad]

    for i in range(num_conv):
        # --- InstanceNorm (affine=False): per-channel mean/var over real nodes,
        #     single pass: mu = E[x], var = E[x^2] - mu^2 (clamped at 0).
        xm = x * mask
        mu = jnp.sum(xm, axis=1, keepdims=True) * inv_n
        ex2 = jnp.sum(xm * x, axis=1, keepdims=True) * inv_n
        var = jnp.maximum(ex2 - mu * mu, 0.0)
        x = (x - mu) * jax.lax.rsqrt(var + EPS)
        # Padded node columns hold garbage from here on, but it never reaches a
        # real node: mprop's padded rows/cols are zero and W @ x acts per column.

        # --- TAGConv (K = n_hops-1):  out = sum_k W_k (A_hat^k x) + b
        out = jnp.dot(wc_ref[i, 0], x, preferred_element_type=jnp.float32)
        for kk in range(1, n_hops):
            x = jnp.dot(x, mprop, preferred_element_type=jnp.float32)
            out = out + jnp.dot(wc_ref[i, kk], x,
                                preferred_element_type=jnp.float32)
        x = jnp.maximum(out + bc_ref[i], 0.0)     # bias [dim,1] lane-broadcast + ReLU

        # --- fcs[i]: n_fc x (Linear + ReLU)  (last layer of last conv maps dim->1,
        #     zero-padded to dim rows at init so shapes stay uniform).
        for j in range(n_fc):
            x = jnp.maximum(
                jnp.dot(wf_ref[i, j], x, preferred_element_type=jnp.float32)
                + bf_ref[i, j], 0.0)

    o_ref[...] = x                                # [dim, Npad] lane-dense store


def agg_binarization_layer(x_node, mprop, mask, params, n_real, k_top):
    """One AggBinarizationLayer: fused Pallas kernel + topk binarization."""
    num_conv, n_hops, dim, _ = params["wc"].shape
    n_fc = params["wf"].shape[1]
    n_pad = mprop.shape[0]

    # channels-first input, row 0 is the single real input channel.
    x_cf = jnp.zeros((dim, n_pad), jnp.float32).at[0, :n_real].set(x_node)

    kernel = functools.partial(
        _agg_layer_kernel,
        inv_n=1.0 / float(n_real), num_conv=num_conv, n_hops=n_hops, n_fc=n_fc)

    out = pl.pallas_call(
        kernel,
        out_shape=jax.ShapeDtypeStruct((dim, n_pad), jnp.float32),
        in_specs=[pl.BlockSpec(memory_space=pltpu.MemorySpace.VMEM)] * 7,
        out_specs=pl.BlockSpec(memory_space=pltpu.MemorySpace.VMEM),
        compiler_params=pltpu.CompilerParams(vmem_limit_bytes=32 << 20),
    )(x_cf, mprop, mask, params["wc"], params["bc"], params["wf"], params["bf"])

    scores = out[0, :n_real]                      # real output channel, real nodes
    # topk_vec: 1.0 at the k largest entries, 0.0 elsewhere (plain JAX top_k).
    _, idx = jax.lax.top_k(scores, k_top)
    return jnp.zeros((n_real,), jnp.float32).at[idx].set(1.0)


# ---------------------------------------------------------------------------
# Graph preprocessing (gcn_norm, add_self_loops=False) -> dense propagation mat.
# Built once; edge_attr never changes inside AggNet so it is shared by all calls.
# ---------------------------------------------------------------------------
def build_propagation_matrix(edge_index, edge_weight, n_real, n_pad):
    row = edge_index[0]
    col = edge_index[1]
    w = edge_weight.reshape(-1).astype(jnp.float32)
    deg = jnp.zeros((n_real,), jnp.float32).at[col].add(w)
    dis = jnp.where(deg > 0, deg, 1.0) ** -0.5
    dis = jnp.where(deg > 0, dis, 0.0)
    w_hat = dis[row] * w * dis[col]
    # M[j, i] = sum_{edges j->i} w_hat  so that (x_cf @ M)[:, i] = (A_hat x)[i, :]
    return jnp.zeros((n_pad, n_pad), jnp.float32).at[row, col].add(w_hat)


# ---------------------------------------------------------------------------
# Deterministic parameter construction (shapes match AggBinarizationLayer),
# stacked & zero-padded to uniform [dim, dim] so one kernel covers every conv.
# ---------------------------------------------------------------------------
def init_agg_binarization_params(key, dim, num_conv=6, K=3, n_fc=5):
    keys = jax.random.split(key, num_conv)
    wc_l, bc_l, wf_l, bf_l = [], [], [], []
    for i in range(num_conv):
        kconv, kfc = jax.random.split(keys[i])
        in_ch = 1 if i == 0 else dim              # TAGConv(1, dim) for the first conv
        hop_keys = jax.random.split(kconv, K + 2)
        hops = []
        for kk in range(K + 1):                   # K+1 hop weights, bias separate
            w = jax.random.normal(hop_keys[kk], (dim, in_ch), jnp.float32)
            w = w * (in_ch ** -0.5)
            hops.append(jnp.pad(w, ((0, 0), (0, dim - in_ch))))
        wc_l.append(jnp.stack(hops))                                  # [K+1, dim, dim]
        bc_l.append(jax.random.normal(hop_keys[K + 1], (dim, 1), jnp.float32) * 0.1)

        fc_keys = jax.random.split(kfc, 2 * n_fc)
        fws, fbs = [], []
        for j in range(n_fc):
            out_ch = 1 if (i == num_conv - 1 and j == n_fc - 1) else dim
            w = jax.random.normal(fc_keys[2 * j], (out_ch, dim), jnp.float32)
            w = w * (dim ** -0.5)
            b = jax.random.normal(fc_keys[2 * j + 1], (out_ch, 1), jnp.float32) * 0.1
            fws.append(jnp.pad(w, ((0, dim - out_ch), (0, 0))))
            fbs.append(jnp.pad(b, ((0, dim - out_ch), (0, 0))))
        wf_l.append(jnp.stack(fws))                                   # [n_fc, dim, dim]
        bf_l.append(jnp.stack(fbs))                                   # [n_fc, dim, 1]
    return dict(wc=jnp.stack(wc_l), bc=jnp.stack(bc_l),
                wf=jnp.stack(wf_l), bf=jnp.stack(bf_l))


# ---------------------------------------------------------------------------
# AggNet.forward
# ---------------------------------------------------------------------------
def agg_net_forward(params_list, x_nodes, edge_index, edge_attr, k_top):
    n_real = x_nodes.shape[0]
    n_pad = pl.cdiv(n_real, 128) * 128            # lane-dense node axis
    mprop = build_propagation_matrix(edge_index, edge_attr, n_real, n_pad)
    mask = jnp.zeros((1, n_pad), jnp.float32).at[0, :n_real].set(1.0)

    x = x_nodes.astype(jnp.float32)
    for p in params_list:                         # one fused kernel per iteration
        x = agg_binarization_layer(x, mprop, mask, p, n_real, k_top)
    return x, edge_attr                           # edge_attr unchanged, as in reference


# ---------------------------------------------------------------------------
if __name__ == "__main__":
    key = jax.random.PRNGKey(0)
    N, E, DIM = 100, 320, 8
    ITERATIONS, NUM_CONV, K_TOP = 2, 6, 10

    k_x, k_ei, k_ea, k_p = jax.random.split(key, 4)
    x_nodes = jax.random.normal(k_x, (N,), jnp.float32)
    edge_index = jax.random.randint(k_ei, (2, E), 0, N, dtype=jnp.int32)
    edge_attr = jax.random.uniform(k_ea, (E,), jnp.float32, 0.5, 1.5)  # positive edge weights

    layer_keys = jax.random.split(k_p, ITERATIONS)
    params_list = [init_agg_binarization_params(layer_keys[i], DIM, NUM_CONV)
                   for i in range(ITERATIONS)]

    x_out, e_out = agg_net_forward(params_list, x_nodes, edge_index, edge_attr, K_TOP)
    jax.block_until_ready((x_out, e_out))

    assert x_out.shape == (N,)
    assert e_out.shape == (E,)
    assert int(jnp.sum(x_out)) == K_TOP
    assert bool(jnp.all((x_out == 0.0) | (x_out == 1.0)))
    print("KERNEL_OK")
</pallas_src>

<mosaic_0001>
module attributes {stable_mosaic.version = 11 : i64} {
  func.func @_agg_layer_kernel(%arg0: memref<8x128xf32, #tpu.memory_space<vmem>>, %arg1: memref<128x128xf32, #tpu.memory_space<vmem>>, %arg2: memref<1x128xf32, #tpu.memory_space<vmem>>, %arg3: memref<6x4x8x8xf32, #tpu.memory_space<vmem>>, %arg4: memref<6x8x1xf32, #tpu.memory_space<vmem>>, %arg5: memref<6x5x8x8xf32, #tpu.memory_space<vmem>>, %arg6: memref<6x5x8x1xf32, #tpu.memory_space<vmem>>, %arg7: memref<8x128xf32, #tpu.memory_space<vmem>>) attributes {dimension_semantics = [], scalar_prefetch = 0 : i64, scratch_operands = 0 : i64, tpu.core_type = #tpu.core_type<tc>} {
    %c0 = arith.constant 0 : index
    %c0_0 = arith.constant 0 : index
    %0 = vector.load %arg2[%c0, %c0_0] : memref<1x128xf32, #tpu.memory_space<vmem>>, vector<1x128xf32>
    %c0_1 = arith.constant 0 : index
    %c0_2 = arith.constant 0 : index
    %1 = vector.load %arg1[%c0_1, %c0_2] : memref<128x128xf32, #tpu.memory_space<vmem>>, vector<128x128xf32>
    %c0_3 = arith.constant 0 : index
    %c0_4 = arith.constant 0 : index
    %2 = vector.load %arg0[%c0_3, %c0_4] : memref<8x128xf32, #tpu.memory_space<vmem>>, vector<8x128xf32>
    %3 = vector.broadcast %0 : vector<1x128xf32> to vector<8x128xf32>
    %4 = arith.mulf %2, %3 : vector<8x128xf32>
    %cst = arith.constant dense<0.000000e+00> : vector<8xf32>
    %5 = vector.multi_reduction <add>, %4, %cst [1] : vector<8x128xf32> to vector<8xf32>
    %6 = vector.shape_cast %5 : vector<8xf32> to vector<8x1xf32>
    %cst_5 = arith.constant 0.00999999977 : f32
    %7 = vector.broadcast %cst_5 : f32 to vector<8x1xf32>
    %8 = arith.mulf %6, %7 : vector<8x1xf32>
    %9 = arith.mulf %4, %2 : vector<8x128xf32>
    %cst_6 = arith.constant dense<0.000000e+00> : vector<8xf32>
    %10 = vector.multi_reduction <add>, %9, %cst_6 [1] : vector<8x128xf32> to vector<8xf32>
    %11 = vector.shape_cast %10 : vector<8xf32> to vector<8x1xf32>
    %cst_7 = arith.constant 0.00999999977 : f32
    %12 = vector.broadcast %cst_7 : f32 to vector<8x1xf32>
    %13 = arith.mulf %11, %12 : vector<8x1xf32>
    %14 = arith.mulf %8, %8 : vector<8x1xf32>
    %15 = arith.subf %13, %14 : vector<8x1xf32>
    %cst_8 = arith.constant 0.000000e+00 : f32
    %16 = vector.broadcast %cst_8 : f32 to vector<8x1xf32>
    %17 = arith.maximumf %15, %16 : vector<8x1xf32>
    %18 = vector.broadcast %8 : vector<8x1xf32> to vector<8x128xf32>
    %19 = arith.subf %2, %18 : vector<8x128xf32>
    %cst_9 = arith.constant 9.99999974E-6 : f32
    %20 = vector.broadcast %cst_9 : f32 to vector<8x1xf32>
    %21 = arith.addf %17, %20 : vector<8x1xf32>
    %22 = math.rsqrt %21 : vector<8x1xf32>
    %23 = vector.broadcast %22 : vector<8x1xf32> to vector<8x128xf32>
    %24 = arith.mulf %19, %23 : vector<8x128xf32>
    %c0_10 = arith.constant 0 : index
    %c0_11 = arith.constant 0 : index
    %c0_12 = arith.constant 0 : index
    %c0_13 = arith.constant 0 : index
    %25 = vector.load %arg3[%c0_10, %c0_11, %c0_12, %c0_13] : memref<6x4x8x8xf32, #tpu.memory_space<vmem>>, vector<1x1x8x8xf32>
    %26 = vector.shape_cast %25 : vector<1x1x8x8xf32> to vector<8x8xf32>
    %cst_14 = arith.constant dense<0.000000e+00> : vector<8x128xf32>
    %27 = tpu.matmul %26, %24, %cst_14 {dimension_numbers = #tpu.dot_dimension_numbers<[1], [0], [0], [1], [0, 0, 1, 1], [], []>} : vector<8x8xf32>, vector<8x128xf32>, vector<8x128xf32> -> vector<8x128xf32>
    %cst_15 = arith.constant dense<0.000000e+00> : vector<8x128xf32>
    %28 = tpu.matmul %24, %1, %cst_15 {dimension_numbers = #tpu.dot_dimension_numbers<[1], [0], [0], [1], [0, 0, 1, 1], [], []>} : vector<8x128xf32>, vector<128x128xf32>, vector<8x128xf32> -> vector<8x128xf32>
    %c0_16 = arith.constant 0 : index
    %c1 = arith.constant 1 : index
    %c0_17 = arith.constant 0 : index
    %c0_18 = arith.constant 0 : index
    %29 = vector.load %arg3[%c0_16, %c1, %c0_17, %c0_18] : memref<6x4x8x8xf32, #tpu.memory_space<vmem>>, vector<1x1x8x8xf32>
    %30 = vector.shape_cast %29 : vector<1x1x8x8xf32> to vector<8x8xf32>
    %cst_19 = arith.constant dense<0.000000e+00> : vector<8x128xf32>
    %31 = tpu.matmul %30, %28, %cst_19 {dimension_numbers = #tpu.dot_dimension_numbers<[1], [0], [0], [1], [0, 0, 1, 1], [], []>} : vector<8x8xf32>, vector<8x128xf32>, vector<8x128xf32> -> vector<8x128xf32>
    %32 = arith.addf %27, %31 : vector<8x128xf32>
    %cst_20 = arith.constant dense<0.000000e+00> : vector<8x128xf32>
    %33 = tpu.matmul %28, %1, %cst_20 {dimension_numbers = #tpu.dot_dimension_numbers<[1], [0], [0], [1], [0, 0, 1, 1], [], []>} : vector<8x128xf32>, vector<128x128xf32>, vector<8x128xf32> -> vector<8x128xf32>
    %c0_21 = arith.constant 0 : index
    %c2 = arith.constant 2 : index
    %c0_22 = arith.constant 0 : index
    %c0_23 = arith.constant 0 : index
    %34 = vector.load %arg3[%c0_21, %c2, %c0_22, %c0_23] : memref<6x4x8x8xf32, #tpu.memory_space<vmem>>, vector<1x1x8x8xf32>
    %35 = vector.shape_cast %34 : vector<1x1x8x8xf32> to vector<8x8xf32>
    %cst_24 = arith.constant dense<0.000000e+00> : vector<8x128xf32>
    %36 = tpu.matmul %35, %33, %cst_24 {dimension_numbers = #tpu.dot_dimension_numbers<[1], [0], [0], [1], [0, 0, 1, 1], [], []>} : vector<8x8xf32>, vector<8x128xf32>, vector<8x128xf32> -> vector<8x128xf32>
    %37 = arith.addf %32, %36 : vector<8x128xf32>
    %cst_25 = arith.constant dense<0.000000e+00> : vector<8x128xf32>
    %38 = tpu.matmul %33, %1, %cst_25 {dimension_numbers = #tpu.dot_dimension_numbers<[1], [0], [0], [1], [0, 0, 1, 1], [], []>} : vector<8x128xf32>, vector<128x128xf32>, vector<8x128xf32> -> vector<8x128xf32>
    %c0_26 = arith.constant 0 : index
    %c3 = arith.constant 3 : index
    %c0_27 = arith.constant 0 : index
    %c0_28 = arith.constant 0 : index
    %39 = vector.load %arg3[%c0_26, %c3, %c0_27, %c0_28] : memref<6x4x8x8xf32, #tpu.memory_space<vmem>>, vector<1x1x8x8xf32>
    %40 = vector.shape_cast %39 : vector<1x1x8x8xf32> to vector<8x8xf32>
    %cst_29 = arith.constant dense<0.000000e+00> : vector<8x128xf32>
    %41 = tpu.matmul %40, %38, %cst_29 {dimension_numbers = #tpu.dot_dimension_numbers<[1], [0], [0], [1], [0, 0, 1, 1], [], []>} : vector<8x8xf32>, vector<8x128xf32>, vector<8x128xf32> -> vector<8x128xf32>
    %42 = arith.addf %37, %41 : vector<8x128xf32>
    %c0_30 = arith.constant 0 : index
    %c0_31 = arith.constant 0 : index
    %c0_32 = arith.constant 0 : index
    %43 = vector.load %arg4[%c0_30, %c0_31, %c0_32] : memref<6x8x1xf32, #tpu.memory_space<vmem>>, vector<1x8x1xf32>
    %44 = vector.shape_cast %43 : vector<1x8x1xf32> to vector<8x1xf32>
    %45 = vector.broadcast %44 : vector<8x1xf32> to vector<8x128xf32>
    %46 = arith.addf %42, %45 : vector<8x128xf32>
    %cst_33 = arith.constant 0.000000e+00 : f32
    %47 = vector.broadcast %cst_33 : f32 to vector<8x128xf32>
    %48 = arith.maximumf %46, %47 : vector<8x128xf32>
    %c0_34 = arith.constant 0 : index
    %c0_35 = arith.constant 0 : index
    %c0_36 = arith.constant 0 : index
    %c0_37 = arith.constant 0 : index
    %49 = vector.load %arg5[%c0_34, %c0_35, %c0_36, %c0_37] : memref<6x5x8x8xf32, #tpu.memory_space<vmem>>, vector<1x1x8x8xf32>
    %50 = vector.shape_cast %49 : vector<1x1x8x8xf32> to vector<8x8xf32>
    %cst_38 = arith.constant dense<0.000000e+00> : vector<8x128xf32>
    %51 = tpu.matmul %50, %48, %cst_38 {dimension_numbers = #tpu.dot_dimension_numbers<[1], [0], [0], [1], [0, 0, 1, 1], [], []>} : vector<8x8xf32>, vector<8x128xf32>, vector<8x128xf32> -> vector<8x128xf32>
    %c0_39 = arith.constant 0 : index
    %c0_40 = arith.constant 0 : index
    %c0_41 = arith.constant 0 : index
    %c0_42 = arith.constant 0 : index
    %52 = vector.load %arg6[%c0_39, %c0_40, %c0_41, %c0_42] : memref<6x5x8x1xf32, #tpu.memory_space<vmem>>, vector<1x1x8x1xf32>
    %53 = vector.shape_cast %52 : vector<1x1x8x1xf32> to vector<8x1xf32>
    %54 = vector.broadcast %53 : vector<8x1xf32> to vector<8x128xf32>
    %55 = arith.addf %51, %54 : vector<8x128xf32>
    %cst_43 = arith.constant 0.000000e+00 : f32
    %56 = vector.broadcast %cst_43 : f32 to vector<8x128xf32>
    %57 = arith.maximumf %55, %56 : vector<8x128xf32>
    %c0_44 = arith.constant 0 : index
    %c1_45 = arith.constant 1 : index
    %c0_46 = arith.constant 0 : index
    %c0_47 = arith.constant 0 : index
    %58 = vector.load %arg5[%c0_44, %c1_45, %c0_46, %c0_47] : memref<6x5x8x8xf32, #tpu.memory_space<vmem>>, vector<1x1x8x8xf32>
    %59 = vector.shape_cast %58 : vector<1x1x8x8xf32> to vector<8x8xf32>
    %cst_48 = arith.constant dense<0.000000e+00> : vector<8x128xf32>
    %60 = tpu.matmul %59, %57, %cst_48 {dimension_numbers = #tpu.dot_dimension_numbers<[1], [0], [0], [1], [0, 0, 1, 1], [], []>} : vector<8x8xf32>, vector<8x128xf32>, vector<8x128xf32> -> vector<8x128xf32>
    %c0_49 = arith.constant 0 : index
    %c1_50 = arith.constant 1 : index
    %c0_51 = arith.constant 0 : index
    %c0_52 = arith.constant 0 : index
    %61 = vector.load %arg6[%c0_49, %c1_50, %c0_51, %c0_52] : memref<6x5x8x1xf32, #tpu.memory_space<vmem>>, vector<1x1x8x1xf32>
    %62 = vector.shape_cast %61 : vector<1x1x8x1xf32> to vector<8x1xf32>
    %63 = vector.broadcast %62 : vector<8x1xf32> to vector<8x128xf32>
    %64 = arith.addf %60, %63 : vector<8x128xf32>
    %cst_53 = arith.constant 0.000000e+00 : f32
    %65 = vector.broadcast %cst_53 : f32 to vector<8x128xf32>
    %66 = arith.maximumf %64, %65 : vector<8x128xf32>
    %c0_54 = arith.constant 0 : index
    %c2_55 = arith.constant 2 : index
    %c0_56 = arith.constant 0 : index
    %c0_57 = arith.constant 0 : index
    %67 = vector.load %arg5[%c0_54, %c2_55, %c0_56, %c0_57] : memref<6x5x8x8xf32, #tpu.memory_space<vmem>>, vector<1x1x8x8xf32>
    %68 = vector.shape_cast %67 : vector<1x1x8x8xf32> to vector<8x8xf32>
    %cst_58 = arith.constant dense<0.000000e+00> : vector<8x128xf32>
    %69 = tpu.matmul %68, %66, %cst_58 {dimension_numbers = #tpu.dot_dimension_numbers<[1], [0], [0], [1], [0, 0, 1, 1], [], []>} : vector<8x8xf32>, vector<8x128xf32>, vector<8x128xf32> -> vector<8x128xf32>
    %c0_59 = arith.constant 0 : index
    %c2_60 = arith.constant 2 : index
    %c0_61 = arith.constant 0 : index
    %c0_62 = arith.constant 0 : index
    %70 = vector.load %arg6[%c0_59, %c2_60, %c0_61, %c0_62] : memref<6x5x8x1xf32, #tpu.memory_space<vmem>>, vector<1x1x8x1xf32>
    %71 = vector.shape_cast %70 : vector<1x1x8x1xf32> to vector<8x1xf32>
    %72 = vector.broadcast %71 : vector<8x1xf32> to vector<8x128xf32>
    %73 = arith.addf %69, %72 : vector<8x128xf32>
    %cst_63 = arith.constant 0.000000e+00 : f32
    %74 = vector.broadcast %cst_63 : f32 to vector<8x128xf32>
    %75 = arith.maximumf %73, %74 : vector<8x128xf32>
    %c0_64 = arith.constant 0 : index
    %c3_65 = arith.constant 3 : index
    %c0_66 = arith.constant 0 : index
    %c0_67 = arith.constant 0 : index
    %76 = vector.load %arg5[%c0_64, %c3_65, %c0_66, %c0_67] : memref<6x5x8x8xf32, #tpu.memory_space<vmem>>, vector<1x1x8x8xf32>
    %77 = vector.shape_cast %76 : vector<1x1x8x8xf32> to vector<8x8xf32>
    %cst_68 = arith.constant dense<0.000000e+00> : vector<8x128xf32>
    %78 = tpu.matmul %77, %75, %cst_68 {dimension_numbers = #tpu.dot_dimension_numbers<[1], [0], [0], [1], [0, 0, 1, 1], [], []>} : vector<8x8xf32>, vector<8x128xf32>, vector<8x128xf32> -> vector<8x128xf32>
    %c0_69 = arith.constant 0 : index
    %c3_70 = arith.constant 3 : index
    %c0_71 = arith.constant 0 : index
    %c0_72 = arith.constant 0 : index
    %79 = vector.load %arg6[%c0_69, %c3_70, %c0_71, %c0_72] : memref<6x5x8x1xf32, #tpu.memory_space<vmem>>, vector<1x1x8x1xf32>
    %80 = vector.shape_cast %79 : vector<1x1x8x1xf32> to vector<8x1xf32>
    %81 = vector.broadcast %80 : vector<8x1xf32> to vector<8x128xf32>
    %82 = arith.addf %78, %81 : vector<8x128xf32>
    %cst_73 = arith.constant 0.000000e+00 : f32
    %83 = vector.broadcast %cst_73 : f32 to vector<8x128xf32>
    %84 = arith.maximumf %82, %83 : vector<8x128xf32>
    %c0_74 = arith.constant 0 : index
    %c4 = arith.constant 4 : index
    %c0_75 = arith.constant 0 : index
    %c0_76 = arith.constant 0 : index
    %85 = vector.load %arg5[%c0_74, %c4, %c0_75, %c0_76] : memref<6x5x8x8xf32, #tpu.memory_space<vmem>>, vector<1x1x8x8xf32>
    %86 = vector.shape_cast %85 : vector<1x1x8x8xf32> to vector<8x8xf32>
    %cst_77 = arith.constant dense<0.000000e+00> : vector<8x128xf32>
    %87 = tpu.matmul %86, %84, %cst_77 {dimension_numbers = #tpu.dot_dimension_numbers<[1], [0], [0], [1], [0, 0, 1, 1], [], []>} : vector<8x8xf32>, vector<8x128xf32>, vector<8x128xf32> -> vector<8x128xf32>
    %c0_78 = arith.constant 0 : index
    %c4_79 = arith.constant 4 : index
    %c0_80 = arith.constant 0 : index
    %c0_81 = arith.constant 0 : index
    %88 = vector.load %arg6[%c0_78, %c4_79, %c0_80, %c0_81] : memref<6x5x8x1xf32, #tpu.memory_space<vmem>>, vector<1x1x8x1xf32>
    %89 = vector.shape_cast %88 : vector<1x1x8x1xf32> to vector<8x1xf32>
    %90 = vector.broadcast %89 : vector<8x1xf32> to vector<8x128xf32>
    %91 = arith.addf %87, %90 : vector<8x128xf32>
    %cst_82 = arith.constant 0.000000e+00 : f32
    %92 = vector.broadcast %cst_82 : f32 to vector<8x128xf32>
    %93 = arith.maximumf %91, %92 : vector<8x128xf32>
    %94 = vector.broadcast %0 : vector<1x128xf32> to vector<8x128xf32>
    %95 = arith.mulf %93, %94 : vector<8x128xf32>
    %cst_83 = arith.constant dense<0.000000e+00> : vector<8xf32>
    %96 = vector.multi_reduction <add>, %95, %cst_83 [1] : vector<8x128xf32> to vector<8xf32>
    %97 = vector.shape_cast %96 : vector<8xf32> to vector<8x1xf32>
    %cst_84 = arith.constant 0.00999999977 : f32
    %98 = vector.broadcast %cst_84 : f32 to vector<8x1xf32>
    %99 = arith.mulf %97, %98 : vector<8x1xf32>
    %100 = arith.mulf %95, %93 : vector<8x128xf32>
    %cst_85 = arith.constant dense<0.000000e+00> : vector<8xf32>
    %101 = vector.multi_reduction <add>, %100, %cst_85 [1] : vector<8x128xf32> to vector<8xf32>
    %102 = vector.shape_cast %101 : vector<8xf32> to vector<8x1xf32>
    %cst_86 = arith.constant 0.00999999977 : f32
    %103 = vector.broadcast %cst_86 : f32 to vector<8x1xf32>
    %104 = arith.mulf %102, %103 : vector<8x1xf32>
    %105 = arith.mulf %99, %99 : vector<8x1xf32>
    %106 = arith.subf %104, %105 : vector<8x1xf32>
    %cst_87 = arith.constant 0.000000e+00 : f32
    %107 = vector.broadcast %cst_87 : f32 to vector<8x1xf32>
    %108 = arith.maximumf %106, %107 : vector<8x1xf32>
    %109 = vector.broadcast %99 : vector<8x1xf32> to vector<8x128xf32>
    %110 = arith.subf %93, %109 : vector<8x128xf32>
    %cst_88 = arith.constant 9.99999974E-6 : f32
    %111 = vector.broadcast %cst_88 : f32 to vector<8x1xf32>
    %112 = arith.addf %108, %111 : vector<8x1xf32>
    %113 = math.rsqrt %112 : vector<8x1xf32>
    %114 = vector.broadcast %113 : vector<8x1xf32> to vector<8x128xf32>
    %115 = arith.mulf %110, %114 : vector<8x128xf32>
    %c1_89 = arith.constant 1 : index
    %c0_90 = arith.constant 0 : index
    %c0_91 = arith.constant 0 : index
    %c0_92 = arith.constant 0 : index
    %116 = vector.load %arg3[%c1_89, %c0_90, %c0_91, %c0_92] : memref<6x4x8x8xf32, #tpu.memory_space<vmem>>, vector<1x1x8x8xf32>
    %117 = vector.shape_cast %116 : vector<1x1x8x8xf32> to vector<8x8xf32>
    %cst_93 = arith.constant dense<0.000000e+00> : vector<8x128xf32>
    %118 = tpu.matmul %117, %115, %cst_93 {dimension_numbers = #tpu.dot_dimension_numbers<[1], [0], [0], [1], [0, 0, 1, 1], [], []>} : vector<8x8xf32>, vector<8x128xf32>, vector<8x128xf32> -> vector<8x128xf32>
    %cst_94 = arith.constant dense<0.000000e+00> : vector<8x128xf32>
    %119 = tpu.matmul %115, %1, %cst_94 {dimension_numbers = #tpu.dot_dimension_numbers<[1], [0], [0], [1], [0, 0, 1, 1], [], []>} : vector<8x128xf32>, vector<128x128xf32>, vector<8x128xf32> -> vector<8x128xf32>
    %c1_95 = arith.constant 1 : index
    %c1_96 = arith.constant 1 : index
    %c0_97 = arith.constant 0 : index
    %c0_98 = arith.constant 0 : index
    %120 = vector.load %arg3[%c1_95, %c1_96, %c0_97, %c0_98] : memref<6x4x8x8xf32, #tpu.memory_space<vmem>>, vector<1x1x8x8xf32>
    %121 = vector.shape_cast %120 : vector<1x1x8x8xf32> to vector<8x8xf32>
    %cst_99 = arith.constant dense<0.000000e+00> : vector<8x128xf32>
    %122 = tpu.matmul %121, %119, %cst_99 {dimension_numbers = #tpu.dot_dimension_numbers<[1], [0], [0], [1], [0, 0, 1, 1], [], []>} : vector<8x8xf32>, vector<8x128xf32>, vector<8x128xf32> -> vector<8x128xf32>
    %123 = arith.addf %118, %122 : vector<8x128xf32>
    %cst_100 = arith.constant dense<0.000000e+00> : vector<8x128xf32>
    %124 = tpu.matmul %119, %1, %cst_100 {dimension_numbers = #tpu.dot_dimension_numbers<[1], [0], [0], [1], [0, 0, 1, 1], [], []>} : vector<8x128xf32>, vector<128x128xf32>, vector<8x128xf32> -> vector<8x128xf32>
    %c1_101 = arith.constant 1 : index
    %c2_102 = arith.constant 2 : index
    %c0_103 = arith.constant 0 : index
    %c0_104 = arith.constant 0 : index
    %125 = vector.load %arg3[%c1_101, %c2_102, %c0_103, %c0_104] : memref<6x4x8x8xf32, #tpu.memory_space<vmem>>, vector<1x1x8x8xf32>
    %126 = vector.shape_cast %125 : vector<1x1x8x8xf32> to vector<8x8xf32>
    %cst_105 = arith.constant dense<0.000000e+00> : vector<8x128xf32>
    %127 = tpu.matmul %126, %124, %cst_105 {dimension_numbers = #tpu.dot_dimension_numbers<[1], [0], [0], [1], [0, 0, 1, 1], [], []>} : vector<8x8xf32>, vector<8x128xf32>, vector<8x128xf32> -> vector<8x128xf32>
    %128 = arith.addf %123, %127 : vector<8x128xf32>
    %cst_106 = arith.constant dense<0.000000e+00> : vector<8x128xf32>
    %129 = tpu.matmul %124, %1, %cst_106 {dimension_numbers = #tpu.dot_dimension_numbers<[1], [0], [0], [1], [0, 0, 1, 1], [], []>} : vector<8x128xf32>, vector<128x128xf32>, vector<8x128xf32> -> vector<8x128xf32>
    %c1_107 = arith.constant 1 : index
    %c3_108 = arith.constant 3 : index
    %c0_109 = arith.constant 0 : index
    %c0_110 = arith.constant 0 : index
    %130 = vector.load %arg3[%c1_107, %c3_108, %c0_109, %c0_110] : memref<6x4x8x8xf32, #tpu.memory_space<vmem>>, vector<1x1x8x8xf32>
    %131 = vector.shape_cast %130 : vector<1x1x8x8xf32> to vector<8x8xf32>
    %cst_111 = arith.constant dense<0.000000e+00> : vector<8x128xf32>
    %132 = tpu.matmul %131, %129, %cst_111 {dimension_numbers = #tpu.dot_dimension_numbers<[1], [0], [0], [1], [0, 0, 1, 1], [], []>} : vector<8x8xf32>, vector<8x128xf32>, vector<8x128xf32> -> vector<8x128xf32>
    %133 = arith.addf %128, %132 : vector<8x128xf32>
    %c1_112 = arith.constant 1 : index
    %c0_113 = arith.constant 0 : index
    %c0_114 = arith.constant 0 : index
    %134 = vector.load %arg4[%c1_112, %c0_113, %c0_114] : memref<6x8x1xf32, #tpu.memory_space<vmem>>, vector<1x8x1xf32>
    %135 = vector.shape_cast %134 : vector<1x8x1xf32> to vector<8x1xf32>
    %136 = vector.broadcast %135 : vector<8x1xf32> to vector<8x128xf32>
    %137 = arith.addf %133, %136 : vector<8x128xf32>
    %cst_115 = arith.constant 0.000000e+00 : f32
    %138 = vector.broadcast %cst_115 : f32 to vector<8x128xf32>
    %139 = arith.maximumf %137, %138 : vector<8x128xf32>
    %c1_116 = arith.constant 1 : index
    %c0_117 = arith.constant 0 : index
    %c0_118 = arith.constant 0 : index
    %c0_119 = arith.constant 0 : index
    %140 = vector.load %arg5[%c1_116, %c0_117, %c0_118, %c0_119] : memref<6x5x8x8xf32, #tpu.memory_space<vmem>>, vector<1x1x8x8xf32>
    %141 = vector.shape_cast %140 : vector<1x1x8x8xf32> to vector<8x8xf32>
    %cst_120 = arith.constant dense<0.000000e+00> : vector<8x128xf32>
    %142 = tpu.matmul %141, %139, %cst_120 {dimension_numbers = #tpu.dot_dimension_numbers<[1], [0], [0], [1], [0, 0, 1, 1], [], []>} : vector<8x8xf32>, vector<8x128xf32>, vector<8x128xf32> -> vector<8x128xf32>
    %c1_121 = arith.constant 1 : index
    %c0_122 = arith.constant 0 : index
    %c0_123 = arith.constant 0 : index
    %c0_124 = arith.constant 0 : index
    %143 = vector.load %arg6[%c1_121, %c0_122, %c0_123, %c0_124] : memref<6x5x8x1xf32, #tpu.memory_space<vmem>>, vector<1x1x8x1xf32>
    %144 = vector.shape_cast %143 : vector<1x1x8x1xf32> to vector<8x1xf32>
    %145 = vector.broadcast %144 : vector<8x1xf32> to vector<8x128xf32>
    %146 = arith.addf %142, %145 : vector<8x128xf32>
    %cst_125 = arith.constant 0.000000e+00 : f32
    %147 = vector.broadcast %cst_125 : f32 to vector<8x128xf32>
    %148 = arith.maximumf %146, %147 : vector<8x128xf32>
    %c1_126 = arith.constant 1 : index
    %c1_127 = arith.constant 1 : index
    %c0_128 = arith.constant 0 : index
    %c0_129 = arith.constant 0 : index
    %149 = vector.load %arg5[%c1_126, %c1_127, %c0_128, %c0_129] : memref<6x5x8x8xf32, #tpu.memory_space<vmem>>, vector<1x1x8x8xf32>
    %150 = vector.shape_cast %149 : vector<1x1x8x8xf32> to vector<8x8xf32>
    %cst_130 = arith.constant dense<0.000000e+00> : vector<8x128xf32>
    %151 = tpu.matmul %150, %148, %cst_130 {dimension_numbers = #tpu.dot_dimension_numbers<[1], [0], [0], [1], [0, 0, 1, 1], [], []>} : vector<8x8xf32>, vector<8x128xf32>, vector<8x128xf32> -> vector<8x128xf32>
    %c1_131 = arith.constant 1 : index
    %c1_132 = arith.constant 1 : index
    %c0_133 = arith.constant 0 : index
    %c0_134 = arith.constant 0 : index
    %152 = vector.load %arg6[%c1_131, %c1_132, %c0_133, %c0_134] : memref<6x5x8x1xf32, #tpu.memory_space<vmem>>, vector<1x1x8x1xf32>
    %153 = vector.shape_cast %152 : vector<1x1x8x1xf32> to vector<8x1xf32>
    %154 = vector.broadcast %153 : vector<8x1xf32> to vector<8x128xf32>
    %155 = arith.addf %151, %154 : vector<8x128xf32>
    %cst_135 = arith.constant 0.000000e+00 : f32
    %156 = vector.broadcast %cst_135 : f32 to vector<8x128xf32>
    %157 = arith.maximumf %155, %156 : vector<8x128xf32>
    %c1_136 = arith.constant 1 : index
    %c2_137 = arith.constant 2 : index
    %c0_138 = arith.constant 0 : index
    %c0_139 = arith.constant 0 : index
    %158 = vector.load %arg5[%c1_136, %c2_137, %c0_138, %c0_139] : memref<6x5x8x8xf32, #tpu.memory_space<vmem>>, vector<1x1x8x8xf32>
    %159 = vector.shape_cast %158 : vector<1x1x8x8xf32> to vector<8x8xf32>
    %cst_140 = arith.constant dense<0.000000e+00> : vector<8x128xf32>
    %160 = tpu.matmul %159, %157, %cst_140 {dimension_numbers = #tpu.dot_dimension_numbers<[1], [0], [0], [1], [0, 0, 1, 1], [], []>} : vector<8x8xf32>, vector<8x128xf32>, vector<8x128xf32> -> vector<8x128xf32>
    %c1_141 = arith.constant 1 : index
    %c2_142 = arith.constant 2 : index
    %c0_143 = arith.constant 0 : index
    %c0_144 = arith.constant 0 : index
    %161 = vector.load %arg6[%c1_141, %c2_142, %c0_143, %c0_144] : memref<6x5x8x1xf32, #tpu.memory_space<vmem>>, vector<1x1x8x1xf32>
    %162 = vector.shape_cast %161 : vector<1x1x8x1xf32> to vector<8x1xf32>
    %163 = vector.broadcast %162 : vector<8x1xf32> to vector<8x128xf32>
    %164 = arith.addf %160, %163 : vector<8x128xf32>
    %cst_145 = arith.constant 0.000000e+00 : f32
    %165 = vector.broadcast %cst_145 : f32 to vector<8x128xf32>
    %166 = arith.maximumf %164, %165 : vector<8x128xf32>
    %c1_146 = arith.constant 1 : index
    %c3_147 = arith.constant 3 : index
    %c0_148 = arith.constant 0 : index
    %c0_149 = arith.constant 0 : index
    %167 = vector.load %arg5[%c1_146, %c3_147, %c0_148, %c0_149] : memref<6x5x8x8xf32, #tpu.memory_space<vmem>>, vector<1x1x8x8xf32>
    %168 = vector.shape_cast %167 : vector<1x1x8x8xf32> to vector<8x8xf32>
    %cst_150 = arith.constant dense<0.000000e+00> : vector<8x128xf32>
    %169 = tpu.matmul %168, %166, %cst_150 {dimension_numbers = #tpu.dot_dimension_numbers<[1], [0], [0], [1], [0, 0, 1, 1], [], []>} : vector<8x8xf32>, vector<8x128xf32>, vector<8x128xf32> -> vector<8x128xf32>
    %c1_151 = arith.constant 1 : index
    %c3_152 = arith.constant 3 : index
    %c0_153 = arith.constant 0 : index
    %c0_154 = arith.constant 0 : index
    %170 = vector.load %arg6[%c1_151, %c3_152, %c0_153, %c0_154] : memref<6x5x8x1xf32, #tpu.memory_space<vmem>>, vector<1x1x8x1xf32>
    %171 = vector.shape_cast %170 : vector<1x1x8x1xf32> to vector<8x1xf32>
    %172 = vector.broadcast %171 : vector<8x1xf32> to vector<8x128xf32>
    %173 = arith.addf %169, %172 : vector<8x128xf32>
    %cst_155 = arith.constant 0.000000e+00 : f32
    %174 = vector.broadcast %cst_155 : f32 to vector<8x128xf32>
    %175 = arith.maximumf %173, %174 : vector<8x128xf32>
    %c1_156 = arith.constant 1 : index
    %c4_157 = arith.constant 4 : index
    %c0_158 = arith.constant 0 : index
    %c0_159 = arith.constant 0 : index
    %176 = vector.load %arg5[%c1_156, %c4_157, %c0_158, %c0_159] : memref<6x5x8x8xf32, #tpu.memory_space<vmem>>, vector<1x1x8x8xf32>
    %177 = vector.shape_cast %176 : vector<1x1x8x8xf32> to vector<8x8xf32>
    %cst_160 = arith.constant dense<0.000000e+00> : vector<8x128xf32>
    %178 = tpu.matmul %177, %175, %cst_160 {dimension_numbers = #tpu.dot_dimension_numbers<[1], [0], [0], [1], [0, 0, 1, 1], [], []>} : vector<8x8xf32>, vector<8x128xf32>, vector<8x128xf32> -> vector<8x128xf32>
    %c1_161 = arith.constant 1 : index
    %c4_162 = arith.constant 4 : index
    %c0_163 = arith.constant 0 : index
    %c0_164 = arith.constant 0 : index
    %179 = vector.load %arg6[%c1_161, %c4_162, %c0_163, %c0_164] : memref<6x5x8x1xf32, #tpu.memory_space<vmem>>, vector<1x1x8x1xf32>
    %180 = vector.shape_cast %179 : vector<1x1x8x1xf32> to vector<8x1xf32>
    %181 = vector.broadcast %180 : vector<8x1xf32> to vector<8x128xf32>
    %182 = arith.addf %178, %181 : vector<8x128xf32>
    %cst_165 = arith.constant 0.000000e+00 : f32
    %183 = vector.broadcast %cst_165 : f32 to vector<8x128xf32>
    %184 = arith.maximumf %182, %183 : vector<8x128xf32>
    %185 = vector.broadcast %0 : vector<1x128xf32> to vector<8x128xf32>
    %186 = arith.mulf %184, %185 : vector<8x128xf32>
    %cst_166 = arith.constant dense<0.000000e+00> : vector<8xf32>
    %187 = vector.multi_reduction <add>, %186, %cst_166 [1] : vector<8x128xf32> to vector<8xf32>
    %188 = vector.shape_cast %187 : vector<8xf32> to vector<8x1xf32>
    %cst_167 = arith.constant 0.00999999977 : f32
    %189 = vector.broadcast %cst_167 : f32 to vector<8x1xf32>
    %190 = arith.mulf %188, %189 : vector<8x1xf32>
    %191 = arith.mulf %186, %184 : vector<8x128xf32>
    %cst_168 = arith.constant dense<0.000000e+00> : vector<8xf32>
    %192 = vector.multi_reduction <add>, %191, %cst_168 [1] : vector<8x128xf32> to vector<8xf32>
    %193 = vector.shape_cast %192 : vector<8xf32> to vector<8x1xf32>
    %cst_169 = arith.constant 0.00999999977 : f32
    %194 = vector.broadcast %cst_169 : f32 to vector<8x1xf32>
    %195 = arith.mulf %193, %194 : vector<8x1xf32>
    %196 = arith.mulf %190, %190 : vector<8x1xf32>
    %197 = arith.subf %195, %196 : vector<8x1xf32>
    %cst_170 = arith.constant 0.000000e+00 : f32
    %198 = vector.broadcast %cst_170 : f32 to vector<8x1xf32>
    %199 = arith.maximumf %197, %198 : vector<8x1xf32>
    %200 = vector.broadcast %190 : vector<8x1xf32> to vector<8x128xf32>
    %201 = arith.subf %184, %200 : vector<8x128xf32>
    %cst_171 = arith.constant 9.99999974E-6 : f32
    %202 = vector.broadcast %cst_171 : f32 to vector<8x1xf32>
    %203 = arith.addf %199, %202 : vector<8x1xf32>
    %204 = math.rsqrt %203 : vector<8x1xf32>
    %205 = vector.broadcast %204 : vector<8x1xf32> to vector<8x128xf32>
    %206 = arith.mulf %201, %205 : vector<8x128xf32>
    %c2_172 = arith.constant 2 : index
    %c0_173 = arith.constant 0 : index
    %c0_174 = arith.constant 0 : index
    %c0_175 = arith.constant 0 : index
    %207 = vector.load %arg3[%c2_172, %c0_173, %c0_174, %c0_175] : memref<6x4x8x8xf32, #tpu.memory_space<vmem>>, vector<1x1x8x8xf32>
    %208 = vector.shape_cast %207 : vector<1x1x8x8xf32> to vector<8x8xf32>
    %cst_176 = arith.constant dense<0.000000e+00> : vector<8x128xf32>
    %209 = tpu.matmul %208, %206, %cst_176 {dimension_numbers = #tpu.dot_dimension_numbers<[1], [0], [0], [1], [0, 0, 1, 1], [], []>} : vector<8x8xf32>, vector<8x128xf32>, vector<8x128xf32> -> vector<8x128xf32>
    %cst_177 = arith.constant dense<0.000000e+00> : vector<8x128xf32>
    %210 = tpu.matmul %206, %1, %cst_177 {dimension_numbers = #tpu.dot_dimension_numbers<[1], [0], [0], [1], [0, 0, 1, 1], [], []>} : vector<8x128xf32>, vector<128x128xf32>, vector<8x128xf32> -> vector<8x128xf32>
    %c2_178 = arith.constant 2 : index
    %c1_179 = arith.constant 1 : index
    %c0_180 = arith.constant 0 : index
    %c0_181 = arith.constant 0 : index
    %211 = vector.load %arg3[%c2_178, %c1_179, %c0_180, %c0_181] : memref<6x4x8x8xf32, #tpu.memory_space<vmem>>, vector<1x1x8x8xf32>
    %212 = vector.shape_cast %211 : vector<1x1x8x8xf32> to vector<8x8xf32>
    %cst_182 = arith.constant dense<0.000000e+00> : vector<8x128xf32>
    %213 = tpu.matmul %212, %210, %cst_182 {dimension_numbers = #tpu.dot_dimension_numbers<[1], [0], [0], [1], [0, 0, 1, 1], [], []>} : vector<8x8xf32>, vector<8x128xf32>, vector<8x128xf32> -> vector<8x128xf32>
    %214 = arith.addf %209, %213 : vector<8x128xf32>
    %cst_183 = arith.constant dense<0.000000e+00> : vector<8x128xf32>
    %215 = tpu.matmul %210, %1, %cst_183 {dimension_numbers = #tpu.dot_dimension_numbers<[1], [0], [0], [1], [0, 0, 1, 1], [], []>} : vector<8x128xf32>, vector<128x128xf32>, vector<8x128xf32> -> vector<8x128xf32>
    %c2_184 = arith.constant 2 : index
    %c2_185 = arith.constant 2 : index
    %c0_186 = arith.constant 0 : index
    %c0_187 = arith.constant 0 : index
    %216 = vector.load %arg3[%c2_184, %c2_185, %c0_186, %c0_187] : memref<6x4x8x8xf32, #tpu.memory_space<vmem>>, vector<1x1x8x8xf32>
    %217 = vector.shape_cast %216 : vector<1x1x8x8xf32> to vector<8x8xf32>
    %cst_188 = arith.constant dense<0.000000e+00> : vector<8x128xf32>
    %218 = tpu.matmul %217, %215, %cst_188 {dimension_numbers = #tpu.dot_dimension_numbers<[1], [0], [0], [1], [0, 0, 1, 1], [], []>} : vector<8x8xf32>, vector<8x128xf32>, vector<8x128xf32> -> vector<8x128xf32>
    %219 = arith.addf %214, %218 : vector<8x128xf32>
    %cst_189 = arith.constant dense<0.000000e+00> : vector<8x128xf32>
    %220 = tpu.matmul %215, %1, %cst_189 {dimension_numbers = #tpu.dot_dimension_numbers<[1], [0], [0], [1], [0, 0, 1, 1], [], []>} : vector<8x128xf32>, vector<128x128xf32>, vector<8x128xf32> -> vector<8x128xf32>
    %c2_190 = arith.constant 2 : index
    %c3_191 = arith.constant 3 : index
    %c0_192 = arith.constant 0 : index
    %c0_193 = arith.constant 0 : index
    %221 = vector.load %arg3[%c2_190, %c3_191, %c0_192, %c0_193] : memref<6x4x8x8xf32, #tpu.memory_space<vmem>>, vector<1x1x8x8xf32>
    %222 = vector.shape_cast %221 : vector<1x1x8x8xf32> to vector<8x8xf32>
    %cst_194 = arith.constant dense<0.000000e+00> : vector<8x128xf32>
    %223 = tpu.matmul %222, %220, %cst_194 {dimension_numbers = #tpu.dot_dimension_numbers<[1], [0], [0], [1], [0, 0, 1, 1], [], []>} : vector<8x8xf32>, vector<8x128xf32>, vector<8x128xf32> -> vector<8x128xf32>
    %224 = arith.addf %219, %223 : vector<8x128xf32>
    %c2_195 = arith.constant 2 : index
    %c0_196 = arith.constant 0 : index
    %c0_197 = arith.constant 0 : index
    %225 = vector.load %arg4[%c2_195, %c0_196, %c0_197] : memref<6x8x1xf32, #tpu.memory_space<vmem>>, vector<1x8x1xf32>
    %226 = vector.shape_cast %225 : vector<1x8x1xf32> to vector<8x1xf32>
    %227 = vector.broadcast %226 : vector<8x1xf32> to vector<8x128xf32>
    %228 = arith.addf %224, %227 : vector<8x128xf32>
    %cst_198 = arith.constant 0.000000e+00 : f32
    %229 = vector.broadcast %cst_198 : f32 to vector<8x128xf32>
    %230 = arith.maximumf %228, %229 : vector<8x128xf32>
    %c2_199 = arith.constant 2 : index
    %c0_200 = arith.constant 0 : index
    %c0_201 = arith.constant 0 : index
    %c0_202 = arith.constant 0 : index
    %231 = vector.load %arg5[%c2_199, %c0_200, %c0_201, %c0_202] : memref<6x5x8x8xf32, #tpu.memory_space<vmem>>, vector<1x1x8x8xf32>
    %232 = vector.shape_cast %231 : vector<1x1x8x8xf32> to vector<8x8xf32>
    %cst_203 = arith.constant dense<0.000000e+00> : vector<8x128xf32>
    %233 = tpu.matmul %232, %230, %cst_203 {dimension_numbers = #tpu.dot_dimension_numbers<[1], [0], [0], [1], [0, 0, 1, 1], [], []>} : vector<8x8xf32>, vector<8x128xf32>, vector<8x128xf32> -> vector<8x128xf32>
    %c2_204 = arith.constant 2 : index
    %c0_205 = arith.constant 0 : index
    %c0_206 = arith.constant 0 : index
    %c0_207 = arith.constant 0 : index
    %234 = vector.load %arg6[%c2_204, %c0_205, %c0_206, %c0_207] : memref<6x5x8x1xf32, #tpu.memory_space<vmem>>, vector<1x1x8x1xf32>
    %235 = vector.shape_cast %234 : vector<1x1x8x1xf32> to vector<8x1xf32>
    %236 = vector.broadcast %235 : vector<8x1xf32> to vector<8x128xf32>
    %237 = arith.addf %233, %236 : vector<8x128xf32>
    %cst_208 = arith.constant 0.000000e+00 : f32
    %238 = vector.broadcast %cst_208 : f32 to vector<8x128xf32>
    %239 = arith.maximumf %237, %238 : vector<8x128xf32>
    %c2_209 = arith.constant 2 : index
    %c1_210 = arith.constant 1 : index
    %c0_211 = arith.constant 0 : index
    %c0_212 = arith.constant 0 : index
    %240 = vector.load %arg5[%c2_209, %c1_210, %c0_211, %c0_212] : memref<6x5x8x8xf32, #tpu.memory_space<vmem>>, vector<1x1x8x8xf32>
    %241 = vector.shape_cast %240 : vector<1x1x8x8xf32> to vector<8x8xf32>
    %cst_213 = arith.constant dense<0.000000e+00> : vector<8x128xf32>
    %242 = tpu.matmul %241, %239, %cst_213 {dimension_numbers = #tpu.dot_dimension_numbers<[1], [0], [0], [1], [0, 0, 1, 1], [], []>} : vector<8x8xf32>, vector<8x128xf32>, vector<8x128xf32> -> vector<8x128xf32>
    %c2_214 = arith.constant 2 : index
    %c1_215 = arith.constant 1 : index
    %c0_216 = arith.constant 0 : index
    %c0_217 = arith.constant 0 : index
    %243 = vector.load %arg6[%c2_214, %c1_215, %c0_216, %c0_217] : memref<6x5x8x1xf32, #tpu.memory_space<vmem>>, vector<1x1x8x1xf32>
    %244 = vector.shape_cast %243 : vector<1x1x8x1xf32> to vector<8x1xf32>
    %245 = vector.broadcast %244 : vector<8x1xf32> to vector<8x128xf32>
    %246 = arith.addf %242, %245 : vector<8x128xf32>
    %cst_218 = arith.constant 0.000000e+00 : f32
    %247 = vector.broadcast %cst_218 : f32 to vector<8x128xf32>
    %248 = arith.maximumf %246, %247 : vector<8x128xf32>
    %c2_219 = arith.constant 2 : index
    %c2_220 = arith.constant 2 : index
    %c0_221 = arith.constant 0 : index
    %c0_222 = arith.constant 0 : index
    %249 = vector.load %arg5[%c2_219, %c2_220, %c0_221, %c0_222] : memref<6x5x8x8xf32, #tpu.memory_space<vmem>>, vector<1x1x8x8xf32>
    %250 = vector.shape_cast %249 : vector<1x1x8x8xf32> to vector<8x8xf32>
    %cst_223 = arith.constant dense<0.000000e+00> : vector<8x128xf32>
    %251 = tpu.matmul %250, %248, %cst_223 {dimension_numbers = #tpu.dot_dimension_numbers<[1], [0], [0], [1], [0, 0, 1, 1], [], []>} : vector<8x8xf32>, vector<8x128xf32>, vector<8x128xf32> -> vector<8x128xf32>
    %c2_224 = arith.constant 2 : index
    %c2_225 = arith.constant 2 : index
    %c0_226 = arith.constant 0 : index
    %c0_227 = arith.constant 0 : index
    %252 = vector.load %arg6[%c2_224, %c2_225, %c0_226, %c0_227] : memref<6x5x8x1xf32, #tpu.memory_space<vmem>>, vector<1x1x8x1xf32>
    %253 = vector.shape_cast %252 : vector<1x1x8x1xf32> to vector<8x1xf32>
    %254 = vector.broadcast %253 : vector<8x1xf32> to vector<8x128xf32>
    %255 = arith.addf %251, %254 : vector<8x128xf32>
    %cst_228 = arith.constant 0.000000e+00 : f32
    %256 = vector.broadcast %cst_228 : f32 to vector<8x128xf32>
    %257 = arith.maximumf %255, %256 : vector<8x128xf32>
    %c2_229 = arith.constant 2 : index
    %c3_230 = arith.constant 3 : index
    %c0_231 = arith.constant 0 : index
    %c0_232 = arith.constant 0 : index
    %258 = vector.load %arg5[%c2_229, %c3_230, %c0_231, %c0_232] : memref<6x5x8x8xf32, #tpu.memory_space<vmem>>, vector<1x1x8x8xf32>
    %259 = vector.shape_cast %258 : vector<1x1x8x8xf32> to vector<8x8xf32>
    %cst_233 = arith.constant dense<0.000000e+00> : vector<8x128xf32>
    %260 = tpu.matmul %259, %257, %cst_233 {dimension_numbers = #tpu.dot_dimension_numbers<[1], [0], [0], [1], [0, 0, 1, 1], [], []>} : vector<8x8xf32>, vector<8x128xf32>, vector<8x128xf32> -> vector<8x128xf32>
    %c2_234 = arith.constant 2 : index
    %c3_235 = arith.constant 3 : index
    %c0_236 = arith.constant 0 : index
    %c0_237 = arith.constant 0 : index
    %261 = vector.load %arg6[%c2_234, %c3_235, %c0_236, %c0_237] : memref<6x5x8x1xf32, #tpu.memory_space<vmem>>, vector<1x1x8x1xf32>
    %262 = vector.shape_cast %261 : vector<1x1x8x1xf32> to vector<8x1xf32>
    %263 = vector.broadcast %262 : vector<8x1xf32> to vector<8x128xf32>
    %264 = arith.addf %260, %263 : vector<8x128xf32>
    %cst_238 = arith.constant 0.000000e+00 : f32
    %265 = vector.broadcast %cst_238 : f32 to vector<8x128xf32>
    %266 = arith.maximumf %264, %265 : vector<8x128xf32>
    %c2_239 = arith.constant 2 : index
    %c4_240 = arith.constant 4 : index
    %c0_241 = arith.constant 0 : index
    %c0_242 = arith.constant 0 : index
    %267 = vector.load %arg5[%c2_239, %c4_240, %c0_241, %c0_242] : memref<6x5x8x8xf32, #tpu.memory_space<vmem>>, vector<1x1x8x8xf32>
    %268 = vector.shape_cast %267 : vector<1x1x8x8xf32> to vector<8x8xf32>
    %cst_243 = arith.constant dense<0.000000e+00> : vector<8x128xf32>
    %269 = tpu.matmul %268, %266, %cst_243 {dimension_numbers = #tpu.dot_dimension_numbers<[1], [0], [0], [1], [0, 0, 1, 1], [], []>} : vector<8x8xf32>, vector<8x128xf32>, vector<8x128xf32> -> vector<8x128xf32>
    %c2_244 = arith.constant 2 : index
    %c4_245 = arith.constant 4 : index
    %c0_246 = arith.constant 0 : index
    %c0_247 = arith.constant 0 : index
    %270 = vector.load %arg6[%c2_244, %c4_245, %c0_246, %c0_247] : memref<6x5x8x1xf32, #tpu.memory_space<vmem>>, vector<1x1x8x1xf32>
    %271 = vector.shape_cast %270 : vector<1x1x8x1xf32> to vector<8x1xf32>
    %272 = vector.broadcast %271 : vector<8x1xf32> to vector<8x128xf32>
    %273 = arith.addf %269, %272 : vector<8x128xf32>
    %cst_248 = arith.constant 0.000000e+00 : f32
    %274 = vector.broadcast %cst_248 : f32 to vector<8x128xf32>
    %275 = arith.maximumf %273, %274 : vector<8x128xf32>
    %276 = vector.broadcast %0 : vector<1x128xf32> to vector<8x128xf32>
    %277 = arith.mulf %275, %276 : vector<8x128xf32>
    %cst_249 = arith.constant dense<0.000000e+00> : vector<8xf32>
    %278 = vector.multi_reduction <add>, %277, %cst_249 [1] : vector<8x128xf32> to vector<8xf32>
    %279 = vector.shape_cast %278 : vector<8xf32> to vector<8x1xf32>
    %cst_250 = arith.constant 0.00999999977 : f32
    %280 = vector.broadcast %cst_250 : f32 to vector<8x1xf32>
    %281 = arith.mulf %279, %280 : vector<8x1xf32>
    %282 = arith.mulf %277, %275 : vector<8x128xf32>
    %cst_251 = arith.constant dense<0.000000e+00> : vector<8xf32>
    %283 = vector.multi_reduction <add>, %282, %cst_251 [1] : vector<8x128xf32> to vector<8xf32>
    %284 = vector.shape_cast %283 : vector<8xf32> to vector<8x1xf32>
    %cst_252 = arith.constant 0.00999999977 : f32
    %285 = vector.broadcast %cst_252 : f32 to vector<8x1xf32>
    %286 = arith.mulf %284, %285 : vector<8x1xf32>
    %287 = arith.mulf %281, %281 : vector<8x1xf32>
    %288 = arith.subf %286, %287 : vector<8x1xf32>
    %cst_253 = arith.constant 0.000000e+00 : f32
    %289 = vector.broadcast %cst_253 : f32 to vector<8x1xf32>
    %290 = arith.maximumf %288, %289 : vector<8x1xf32>
    %291 = vector.broadcast %281 : vector<8x1xf32> to vector<8x128xf32>
    %292 = arith.subf %275, %291 : vector<8x128xf32>
    %cst_254 = arith.constant 9.99999974E-6 : f32
    %293 = vector.broadcast %cst_254 : f32 to vector<8x1xf32>
    %294 = arith.addf %290, %293 : vector<8x1xf32>
    %295 = math.rsqrt %294 : vector<8x1xf32>
    %296 = vector.broadcast %295 : vector<8x1xf32> to vector<8x128xf32>
    %297 = arith.mulf %292, %296 : vector<8x128xf32>
    %c3_255 = arith.constant 3 : index
    %c0_256 = arith.constant 0 : index
    %c0_257 = arith.constant 0 : index
    %c0_258 = arith.constant 0 : index
    %298 = vector.load %arg3[%c3_255, %c0_256, %c0_257, %c0_258] : memref<6x4x8x8xf32, #tpu.memory_space<vmem>>, vector<1x1x8x8xf32>
    %299 = vector.shape_cast %298 : vector<1x1x8x8xf32> to vector<8x8xf32>
    %cst_259 = arith.constant dense<0.000000e+00> : vector<8x128xf32>
    %300 = tpu.matmul %299, %297, %cst_259 {dimension_numbers = #tpu.dot_dimension_numbers<[1], [0], [0], [1], [0, 0, 1, 1], [], []>} : vector<8x8xf32>, vector<8x128xf32>, vector<8x128xf32> -> vector<8x128xf32>
    %cst_260 = arith.constant dense<0.000000e+00> : vector<8x128xf32>
    %301 = tpu.matmul %297, %1, %cst_260 {dimension_numbers = #tpu.dot_dimension_numbers<[1], [0], [0], [1], [0, 0, 1, 1], [], []>} : vector<8x128xf32>, vector<128x128xf32>, vector<8x128xf32> -> vector<8x128xf32>
    %c3_261 = arith.constant 3 : index
    %c1_262 = arith.constant 1 : index
    %c0_263 = arith.constant 0 : index
    %c0_264 = arith.constant 0 : index
    %302 = vector.load %arg3[%c3_261, %c1_262, %c0_263, %c0_264] : memref<6x4x8x8xf32, #tpu.memory_space<vmem>>, vector<1x1x8x8xf32>
    %303 = vector.shape_cast %302 : vector<1x1x8x8xf32> to vector<8x8xf32>
    %cst_265 = arith.constant dense<0.000000e+00> : vector<8x128xf32>
    %304 = tpu.matmul %303, %301, %cst_265 {dimension_numbers = #tpu.dot_dimension_numbers<[1], [0], [0], [1], [0, 0, 1, 1], [], []>} : vector<8x8xf32>, vector<8x128xf32>, vector<8x128xf32> -> vector<8x128xf32>
    %305 = arith.addf %300, %304 : vector<8x128xf32>
    %cst_266 = arith.constant dense<0.000000e+00> : vector<8x128xf32>
    %306 = tpu.matmul %301, %1, %cst_266 {dimension_numbers = #tpu.dot_dimension_numbers<[1], [0], [0], [1], [0, 0, 1, 1], [], []>} : vector<8x128xf32>, vector<128x128xf32>, vector<8x128xf32> -> vector<8x128xf32>
    %c3_267 = arith.constant 3 : index
    %c2_268 = arith.constant 2 : index
    %c0_269 = arith.constant 0 : index
    %c0_270 = arith.constant 0 : index
    %307 = vector.load %arg3[%c3_267, %c2_268, %c0_269, %c0_270] : memref<6x4x8x8xf32, #tpu.memory_space<vmem>>, vector<1x1x8x8xf32>
    %308 = vector.shape_cast %307 : vector<1x1x8x8xf32> to vector<8x8xf32>
    %cst_271 = arith.constant dense<0.000000e+00> : vector<8x128xf32>
    %309 = tpu.matmul %308, %306, %cst_271 {dimension_numbers = #tpu.dot_dimension_numbers<[1], [0], [0], [1], [0, 0, 1, 1], [], []>} : vector<8x8xf32>, vector<8x128xf32>, vector<8x128xf32> -> vector<8x128xf32>
    %310 = arith.addf %305, %309 : vector<8x128xf32>
    %cst_272 = arith.constant dense<0.000000e+00> : vector<8x128xf32>
    %311 = tpu.matmul %306, %1, %cst_272 {dimension_numbers = #tpu.dot_dimension_numbers<[1], [0], [0], [1], [0, 0, 1, 1], [], []>} : vector<8x128xf32>, vector<128x128xf32>, vector<8x128xf32> -> vector<8x128xf32>
    %c3_273 = arith.constant 3 : index
    %c3_274 = arith.constant 3 : index
    %c0_275 = arith.constant 0 : index
    %c0_276 = arith.constant 0 : index
    %312 = vector.load %arg3[%c3_273, %c3_274, %c0_275, %c0_276] : memref<6x4x8x8xf32, #tpu.memory_space<vmem>>, vector<1x1x8x8xf32>
    %313 = vector.shape_cast %312 : vector<1x1x8x8xf32> to vector<8x8xf32>
    %cst_277 = arith.constant dense<0.000000e+00> : vector<8x128xf32>
    %314 = tpu.matmul %313, %311, %cst_277 {dimension_numbers = #tpu.dot_dimension_numbers<[1], [0], [0], [1], [0, 0, 1, 1], [], []>} : vector<8x8xf32>, vector<8x128xf32>, vector<8x128xf32> -> vector<8x128xf32>
    %315 = arith.addf %310, %314 : vector<8x128xf32>
    %c3_278 = arith.constant 3 : index
    %c0_279 = arith.constant 0 : index
    %c0_280 = arith.constant 0 : index
    %316 = vector.load %arg4[%c3_278, %c0_279, %c0_280] : memref<6x8x1xf32, #tpu.memory_space<vmem>>, vector<1x8x1xf32>
    %317 = vector.shape_cast %316 : vector<1x8x1xf32> to vector<8x1xf32>
    %318 = vector.broadcast %317 : vector<8x1xf32> to vector<8x128xf32>
    %319 = arith.addf %315, %318 : vector<8x128xf32>
    %cst_281 = arith.constant 0.000000e+00 : f32
    %320 = vector.broadcast %cst_281 : f32 to vector<8x128xf32>
    %321 = arith.maximumf %319, %320 : vector<8x128xf32>
    %c3_282 = arith.constant 3 : index
    %c0_283 = arith.constant 0 : index
    %c0_284 = arith.constant 0 : index
    %c0_285 = arith.constant 0 : index
    %322 = vector.load %arg5[%c3_282, %c0_283, %c0_284, %c0_285] : memref<6x5x8x8xf32, #tpu.memory_space<vmem>>, vector<1x1x8x8xf32>
    %323 = vector.shape_cast %322 : vector<1x1x8x8xf32> to vector<8x8xf32>
    %cst_286 = arith.constant dense<0.000000e+00> : vector<8x128xf32>
    %324 = tpu.matmul %323, %321, %cst_286 {dimension_numbers = #tpu.dot_dimension_numbers<[1], [0], [0], [1], [0, 0, 1, 1], [], []>} : vector<8x8xf32>, vector<8x128xf32>, vector<8x128xf32> -> vector<8x128xf32>
    %c3_287 = arith.constant 3 : index
    %c0_288 = arith.constant 0 : index
    %c0_289 = arith.constant 0 : index
    %c0_290 = arith.constant 0 : index
    %325 = vector.load %arg6[%c3_287, %c0_288, %c0_289, %c0_290] : memref<6x5x8x1xf32, #tpu.memory_space<vmem>>, vector<1x1x8x1xf32>
    %326 = vector.shape_cast %325 : vector<1x1x8x1xf32> to vector<8x1xf32>
    %327 = vector.broadcast %326 : vector<8x1xf32> to vector<8x128xf32>
    %328 = arith.addf %324, %327 : vector<8x128xf32>
    %cst_291 = arith.constant 0.000000e+00 : f32
    %329 = vector.broadcast %cst_291 : f32 to vector<8x128xf32>
    %330 = arith.maximumf %328, %329 : vector<8x128xf32>
    %c3_292 = arith.constant 3 : index
    %c1_293 = arith.constant 1 : index
    %c0_294 = arith.constant 0 : index
    %c0_295 = arith.constant 0 : index
    %331 = vector.load %arg5[%c3_292, %c1_293, %c0_294, %c0_295] : memref<6x5x8x8xf32, #tpu.memory_space<vmem>>, vector<1x1x8x8xf32>
    %332 = vector.shape_cast %331 : vector<1x1x8x8xf32> to vector<8x8xf32>
    %cst_296 = arith.constant dense<0.000000e+00> : vector<8x128xf32>
    %333 = tpu.matmul %332, %330, %cst_296 {dimension_numbers = #tpu.dot_dimension_numbers<[1], [0], [0], [1], [0, 0, 1, 1], [], []>} : vector<8x8xf32>, vector<8x128xf32>, vector<8x128xf32> -> vector<8x128xf32>
    %c3_297 = arith.constant 3 : index
    %c1_298 = arith.constant 1 : index
    %c0_299 = arith.constant 0 : index
    %c0_300 = arith.constant 0 : index
    %334 = vector.load %arg6[%c3_297, %c1_298, %c0_299, %c0_300] : memref<6x5x8x1xf32, #tpu.memory_space<vmem>>, vector<1x1x8x1xf32>
    %335 = vector.shape_cast %334 : vector<1x1x8x1xf32> to vector<8x1xf32>
    %336 = vector.broadcast %335 : vector<8x1xf32> to vector<8x128xf32>
    %337 = arith.addf %333, %336 : vector<8x128xf32>
    %cst_301 = arith.constant 0.000000e+00 : f32
    %338 = vector.broadcast %cst_301 : f32 to vector<8x128xf32>
    %339 = arith.maximumf %337, %338 : vector<8x128xf32>
    %c3_302 = arith.constant 3 : index
    %c2_303 = arith.constant 2 : index
    %c0_304 = arith.constant 0 : index
    %c0_305 = arith.constant 0 : index
    %340 = vector.load %arg5[%c3_302, %c2_303, %c0_304, %c0_305] : memref<6x5x8x8xf32, #tpu.memory_space<vmem>>, vector<1x1x8x8xf32>
    %341 = vector.shape_cast %340 : vector<1x1x8x8xf32> to vector<8x8xf32>
    %cst_306 = arith.constant dense<0.000000e+00> : vector<8x128xf32>
    %342 = tpu.matmul %341, %339, %cst_306 {dimension_numbers = #tpu.dot_dimension_numbers<[1], [0], [0], [1], [0, 0, 1, 1], [], []>} : vector<8x8xf32>, vector<8x128xf32>, vector<8x128xf32> -> vector<8x128xf32>
    %c3_307 = arith.constant 3 : index
    %c2_308 = arith.constant 2 : index
    %c0_309 = arith.constant 0 : index
    %c0_310 = arith.constant 0 : index
    %343 = vector.load %arg6[%c3_307, %c2_308, %c0_309, %c0_310] : memref<6x5x8x1xf32, #tpu.memory_space<vmem>>, vector<1x1x8x1xf32>
    %344 = vector.shape_cast %343 : vector<1x1x8x1xf32> to vector<8x1xf32>
    %345 = vector.broadcast %344 : vector<8x1xf32> to vector<8x128xf32>
    %346 = arith.addf %342, %345 : vector<8x128xf32>
    %cst_311 = arith.constant 0.000000e+00 : f32
    %347 = vector.broadcast %cst_311 : f32 to vector<8x128xf32>
    %348 = arith.maximumf %346, %347 : vector<8x128xf32>
    %c3_312 = arith.constant 3 : index
    %c3_313 = arith.constant 3 : index
    %c0_314 = arith.constant 0 : index
    %c0_315 = arith.constant 0 : index
    %349 = vector.load %arg5[%c3_312, %c3_313, %c0_314, %c0_315] : memref<6x5x8x8xf32, #tpu.memory_space<vmem>>, vector<1x1x8x8xf32>
    %350 = vector.shape_cast %349 : vector<1x1x8x8xf32> to vector<8x8xf32>
    %cst_316 = arith.constant dense<0.000000e+00> : vector<8x128xf32>
    %351 = tpu.matmul %350, %348, %cst_316 {dimension_numbers = #tpu.dot_dimension_numbers<[1], [0], [0], [1], [0, 0, 1, 1], [], []>} : vector<8x8xf32>, vector<8x128xf32>, vector<8x128xf32> -> vector<8x128xf32>
    %c3_317 = arith.constant 3 : index
    %c3_318 = arith.constant 3 : index
    %c0_319 = arith.constant 0 : index
    %c0_320 = arith.constant 0 : index
    %352 = vector.load %arg6[%c3_317, %c3_318, %c0_319, %c0_320] : memref<6x5x8x1xf32, #tpu.memory_space<vmem>>, vector<1x1x8x1xf32>
    %353 = vector.shape_cast %352 : vector<1x1x8x1xf32> to vector<8x1xf32>
    %354 = vector.broadcast %353 : vector<8x1xf32> to vector<8x128xf32>
    %355 = arith.addf %351, %354 : vector<8x128xf32>
    %cst_321 = arith.constant 0.000000e+00 : f32
    %356 = vector.broadcast %cst_321 : f32 to vector<8x128xf32>
    %357 = arith.maximumf %355, %356 : vector<8x128xf32>
    %c3_322 = arith.constant 3 : index
    %c4_323 = arith.constant 4 : index
    %c0_324 = arith.constant 0 : index
    %c0_325 = arith.constant 0 : index
    %358 = vector.load %arg5[%c3_322, %c4_323, %c0_324, %c0_325] : memref<6x5x8x8xf32, #tpu.memory_space<vmem>>, vector<1x1x8x8xf32>
    %359 = vector.shape_cast %358 : vector<1x1x8x8xf32> to vector<8x8xf32>
    %cst_326 = arith.constant dense<0.000000e+00> : vector<8x128xf32>
    %360 = tpu.matmul %359, %357, %cst_326 {dimension_numbers = #tpu.dot_dimension_numbers<[1], [0], [0], [1], [0, 0, 1, 1], [], []>} : vector<8x8xf32>, vector<8x128xf32>, vector<8x128xf32> -> vector<8x128xf32>
    %c3_327 = arith.constant 3 : index
    %c4_328 = arith.constant 4 : index
    %c0_329 = arith.constant 0 : index
    %c0_330 = arith.constant 0 : index
    %361 = vector.load %arg6[%c3_327, %c4_328, %c0_329, %c0_330] : memref<6x5x8x1xf32, #tpu.memory_space<vmem>>, vector<1x1x8x1xf32>
    %362 = vector.shape_cast %361 : vector<1x1x8x1xf32> to vector<8x1xf32>
    %363 = vector.broadcast %362 : vector<8x1xf32> to vector<8x128xf32>
    %364 = arith.addf %360, %363 : vector<8x128xf32>
    %cst_331 = arith.constant 0.000000e+00 : f32
    %365 = vector.broadcast %cst_331 : f32 to vector<8x128xf32>
    %366 = arith.maximumf %364, %365 : vector<8x128xf32>
    %367 = vector.broadcast %0 : vector<1x128xf32> to vector<8x128xf32>
    %368 = arith.mulf %366, %367 : vector<8x128xf32>
    %cst_332 = arith.constant dense<0.000000e+00> : vector<8xf32>
    %369 = vector.multi_reduction <add>, %368, %cst_332 [1] : vector<8x128xf32> to vector<8xf32>
    %370 = vector.shape_cast %369 : vector<8xf32> to vector<8x1xf32>
    %cst_333 = arith.constant 0.00999999977 : f32
    %371 = vector.broadcast %cst_333 : f32 to vector<8x1xf32>
    %372 = arith.mulf %370, %371 : vector<8x1xf32>
    %373 = arith.mulf %368, %366 : vector<8x128xf32>
    %cst_334 = arith.constant dense<0.000000e+00> : vector<8xf32>
    %374 = vector.multi_reduction <add>, %373, %cst_334 [1] : vector<8x128xf32> to vector<8xf32>
    %375 = vector.shape_cast %374 : vector<8xf32> to vector<8x1xf32>
    %cst_335 = arith.constant 0.00999999977 : f32
    %376 = vector.broadcast %cst_335 : f32 to vector<8x1xf32>
    %377 = arith.mulf %375, %376 : vector<8x1xf32>
    %378 = arith.mulf %372, %372 : vector<8x1xf32>
    %379 = arith.subf %377, %378 : vector<8x1xf32>
    %cst_336 = arith.constant 0.000000e+00 : f32
    %380 = vector.broadcast %cst_336 : f32 to vector<8x1xf32>
    %381 = arith.maximumf %379, %380 : vector<8x1xf32>
    %382 = vector.broadcast %372 : vector<8x1xf32> to vector<8x128xf32>
    %383 = arith.subf %366, %382 : vector<8x128xf32>
    %cst_337 = arith.constant 9.99999974E-6 : f32
    %384 = vector.broadcast %cst_337 : f32 to vector<8x1xf32>
    %385 = arith.addf %381, %384 : vector<8x1xf32>
    %386 = math.rsqrt %385 : vector<8x1xf32>
    %387 = vector.broadcast %386 : vector<8x1xf32> to vector<8x128xf32>
    %388 = arith.mulf %383, %387 : vector<8x128xf32>
    %c4_338 = arith.constant 4 : index
    %c0_339 = arith.constant 0 : index
    %c0_340 = arith.constant 0 : index
    %c0_341 = arith.constant 0 : index
    %389 = vector.load %arg3[%c4_338, %c0_339, %c0_340, %c0_341] : memref<6x4x8x8xf32, #tpu.memory_space<vmem>>, vector<1x1x8x8xf32>
    %390 = vector.shape_cast %389 : vector<1x1x8x8xf32> to vector<8x8xf32>
    %cst_342 = arith.constant dense<0.000000e+00> : vector<8x128xf32>
    %391 = tpu.matmul %390, %388, %cst_342 {dimension_numbers = #tpu.dot_dimension_numbers<[1], [0], [0], [1], [0, 0, 1, 1], [], []>} : vector<8x8xf32>, vector<8x128xf32>, vector<8x128xf32> -> vector<8x128xf32>
    %cst_343 = arith.constant dense<0.000000e+00> : vector<8x128xf32>
    %392 = tpu.matmul %388, %1, %cst_343 {dimension_numbers = #tpu.dot_dimension_numbers<[1], [0], [0], [1], [0, 0, 1, 1], [], []>} : vector<8x128xf32>, vector<128x128xf32>, vector<8x128xf32> -> vector<8x128xf32>
    %c4_344 = arith.constant 4 : index
    %c1_345 = arith.constant 1 : index
    %c0_346 = arith.constant 0 : index
    %c0_347 = arith.constant 0 : index
    %393 = vector.load %arg3[%c4_344, %c1_345, %c0_346, %c0_347] : memref<6x4x8x8xf32, #tpu.memory_space<vmem>>, vector<1x1x8x8xf32>
    %394 = vector.shape_cast %393 : vector<1x1x8x8xf32> to vector<8x8xf32>
    %cst_348 = arith.constant dense<0.000000e+00> : vector<8x128xf32>
    %395 = tpu.matmul %394, %392, %cst_348 {dimension_numbers = #tpu.dot_dimension_numbers<[1], [0], [0], [1], [0, 0, 1, 1], [], []>} : vector<8x8xf32>, vector<8x128xf32>, vector<8x128xf32> -> vector<8x128xf32>
    %396 = arith.addf %391, %395 : vector<8x128xf32>
    %cst_349 = arith.constant dense<0.000000e+00> : vector<8x128xf32>
    %397 = tpu.matmul %392, %1, %cst_349 {dimension_numbers = #tpu.dot_dimension_numbers<[1], [0], [0], [1], [0, 0, 1, 1], [], []>} : vector<8x128xf32>, vector<128x128xf32>, vector<8x128xf32> -> vector<8x128xf32>
    %c4_350 = arith.constant 4 : index
    %c2_351 = arith.constant 2 : index
    %c0_352 = arith.constant 0 : index
    %c0_353 = arith.constant 0 : index
    %398 = vector.load %arg3[%c4_350, %c2_351, %c0_352, %c0_353] : memref<6x4x8x8xf32, #tpu.memory_space<vmem>>, vector<1x1x8x8xf32>
    %399 = vector.shape_cast %398 : vector<1x1x8x8xf32> to vector<8x8xf32>
    %cst_354 = arith.constant dense<0.000000e+00> : vector<8x128xf32>
    %400 = tpu.matmul %399, %397, %cst_354 {dimension_numbers = #tpu.dot_dimension_numbers<[1], [0], [0], [1], [0, 0, 1, 1], [], []>} : vector<8x8xf32>, vector<8x128xf32>, vector<8x128xf32> -> vector<8x128xf32>
    %401 = arith.addf %396, %400 : vector<8x128xf32>
    %cst_355 = arith.constant dense<0.000000e+00> : vector<8x128xf32>
    %402 = tpu.matmul %397, %1, %cst_355 {dimension_numbers = #tpu.dot_dimension_numbers<[1], [0], [0], [1], [0, 0, 1, 1], [], []>} : vector<8x128xf32>, vector<128x128xf32>, vector<8x128xf32> -> vector<8x128xf32>
    %c4_356 = arith.constant 4 : index
    %c3_357 = arith.constant 3 : index
    %c0_358 = arith.constant 0 : index
    %c0_359 = arith.constant 0 : index
    %403 = vector.load %arg3[%c4_356, %c3_357, %c0_358, %c0_359] : memref<6x4x8x8xf32, #tpu.memory_space<vmem>>, vector<1x1x8x8xf32>
    %404 = vector.shape_cast %403 : vector<1x1x8x8xf32> to vector<8x8xf32>
    %cst_360 = arith.constant dense<0.000000e+00> : vector<8x128xf32>
    %405 = tpu.matmul %404, %402, %cst_360 {dimension_numbers = #tpu.dot_dimension_numbers<[1], [0], [0], [1], [0, 0, 1, 1], [], []>} : vector<8x8xf32>, vector<8x128xf32>, vector<8x128xf32> -> vector<8x128xf32>
    %406 = arith.addf %401, %405 : vector<8x128xf32>
    %c4_361 = arith.constant 4 : index
    %c0_362 = arith.constant 0 : index
    %c0_363 = arith.constant 0 : index
    %407 = vector.load %arg4[%c4_361, %c0_362, %c0_363] : memref<6x8x1xf32, #tpu.memory_space<vmem>>, vector<1x8x1xf32>
    %408 = vector.shape_cast %407 : vector<1x8x1xf32> to vector<8x1xf32>
    %409 = vector.broadcast %408 : vector<8x1xf32> to vector<8x128xf32>
    %410 = arith.addf %406, %409 : vector<8x128xf32>
    %cst_364 = arith.constant 0.000000e+00 : f32
    %411 = vector.broadcast %cst_364 : f32 to vector<8x128xf32>
    %412 = arith.maximumf %410, %411 : vector<8x128xf32>
    %c4_365 = arith.constant 4 : index
    %c0_366 = arith.constant 0 : index
    %c0_367 = arith.constant 0 : index
    %c0_368 = arith.constant 0 : index
    %413 = vector.load %arg5[%c4_365, %c0_366, %c0_367, %c0_368] : memref<6x5x8x8xf32, #tpu.memory_space<vmem>>, vector<1x1x8x8xf32>
    %414 = vector.shape_cast %413 : vector<1x1x8x8xf32> to vector<8x8xf32>
    %cst_369 = arith.constant dense<0.000000e+00> : vector<8x128xf32>
    %415 = tpu.matmul %414, %412, %cst_369 {dimension_numbers = #tpu.dot_dimension_numbers<[1], [0], [0], [1], [0, 0, 1, 1], [], []>} : vector<8x8xf32>, vector<8x128xf32>, vector<8x128xf32> -> vector<8x128xf32>
    %c4_370 = arith.constant 4 : index
    %c0_371 = arith.constant 0 : index
    %c0_372 = arith.constant 0 : index
    %c0_373 = arith.constant 0 : index
    %416 = vector.load %arg6[%c4_370, %c0_371, %c0_372, %c0_373] : memref<6x5x8x1xf32, #tpu.memory_space<vmem>>, vector<1x1x8x1xf32>
    %417 = vector.shape_cast %416 : vector<1x1x8x1xf32> to vector<8x1xf32>
    %418 = vector.broadcast %417 : vector<8x1xf32> to vector<8x128xf32>
    %419 = arith.addf %415, %418 : vector<8x128xf32>
    %cst_374 = arith.constant 0.000000e+00 : f32
    %420 = vector.broadcast %cst_374 : f32 to vector<8x128xf32>
    %421 = arith.maximumf %419, %420 : vector<8x128xf32>
    %c4_375 = arith.constant 4 : index
    %c1_376 = arith.constant 1 : index
    %c0_377 = arith.constant 0 : index
    %c0_378 = arith.constant 0 : index
    %422 = vector.load %arg5[%c4_375, %c1_376, %c0_377, %c0_378] : memref<6x5x8x8xf32, #tpu.memory_space<vmem>>, vector<1x1x8x8xf32>
    %423 = vector.shape_cast %422 : vector<1x1x8x8xf32> to vector<8x8xf32>
    %cst_379 = arith.constant dense<0.000000e+00> : vector<8x128xf32>
    %424 = tpu.matmul %423, %421, %cst_379 {dimension_numbers = #tpu.dot_dimension_numbers<[1], [0], [0], [1], [0, 0, 1, 1], [], []>} : vector<8x8xf32>, vector<8x128xf32>, vector<8x128xf32> -> vector<8x128xf32>
    %c4_380 = arith.constant 4 : index
    %c1_381 = arith.constant 1 : index
    %c0_382 = arith.constant 0 : index
    %c0_383 = arith.constant 0 : index
    %425 = vector.load %arg6[%c4_380, %c1_381, %c0_382, %c0_383] : memref<6x5x8x1xf32, #tpu.memory_space<vmem>>, vector<1x1x8x1xf32>
    %426 = vector.shape_cast %425 : vector<1x1x8x1xf32> to vector<8x1xf32>
    %427 = vector.broadcast %426 : vector<8x1xf32> to vector<8x128xf32>
    %428 = arith.addf %424, %427 : vector<8x128xf32>
    %cst_384 = arith.constant 0.000000e+00 : f32
    %429 = vector.broadcast %cst_384 : f32 to vector<8x128xf32>
    %430 = arith.maximumf %428, %429 : vector<8x128xf32>
    %c4_385 = arith.constant 4 : index
    %c2_386 = arith.constant 2 : index
    %c0_387 = arith.constant 0 : index
    %c0_388 = arith.constant 0 : index
    %431 = vector.load %arg5[%c4_385, %c2_386, %c0_387, %c0_388] : memref<6x5x8x8xf32, #tpu.memory_space<vmem>>, vector<1x1x8x8xf32>
    %432 = vector.shape_cast %431 : vector<1x1x8x8xf32> to vector<8x8xf32>
    %cst_389 = arith.constant dense<0.000000e+00> : vector<8x128xf32>
    %433 = tpu.matmul %432, %430, %cst_389 {dimension_numbers = #tpu.dot_dimension_numbers<[1], [0], [0], [1], [0, 0, 1, 1], [], []>} : vector<8x8xf32>, vector<8x128xf32>, vector<8x128xf32> -> vector<8x128xf32>
    %c4_390 = arith.constant 4 : index
    %c2_391 = arith.constant 2 : index
    %c0_392 = arith.constant 0 : index
    %c0_393 = arith.constant 0 : index
    %434 = vector.load %arg6[%c4_390, %c2_391, %c0_392, %c0_393] : memref<6x5x8x1xf32, #tpu.memory_space<vmem>>, vector<1x1x8x1xf32>
    %435 = vector.shape_cast %434 : vector<1x1x8x1xf32> to vector<8x1xf32>
    %436 = vector.broadcast %435 : vector<8x1xf32> to vector<8x128xf32>
    %437 = arith.addf %433, %436 : vector<8x128xf32>
    %cst_394 = arith.constant 0.000000e+00 : f32
    %438 = vector.broadcast %cst_394 : f32 to vector<8x128xf32>
    %439 = arith.maximumf %437, %438 : vector<8x128xf32>
    %c4_395 = arith.constant 4 : index
    %c3_396 = arith.constant 3 : index
    %c0_397 = arith.constant 0 : index
    %c0_398 = arith.constant 0 : index
    %440 = vector.load %arg5[%c4_395, %c3_396, %c0_397, %c0_398] : memref<6x5x8x8xf32, #tpu.memory_space<vmem>>, vector<1x1x8x8xf32>
    %441 = vector.shape_cast %440 : vector<1x1x8x8xf32> to vector<8x8xf32>
    %cst_399 = arith.constant dense<0.000000e+00> : vector<8x128xf32>
    %442 = tpu.matmul %441, %439, %cst_399 {dimension_numbers = #tpu.dot_dimension_numbers<[1], [0], [0], [1], [0, 0, 1, 1], [], []>} : vector<8x8xf32>, vector<8x128xf32>, vector<8x128xf32> -> vector<8x128xf32>
    %c4_400 = arith.constant 4 : index
    %c3_401 = arith.constant 3 : index
    %c0_402 = arith.constant 0 : index
    %c0_403 = arith.constant 0 : index
    %443 = vector.load %arg6[%c4_400, %c3_401, %c0_402, %c0_403] : memref<6x5x8x1xf32, #tpu.memory_space<vmem>>, vector<1x1x8x1xf32>
    %444 = vector.shape_cast %443 : vector<1x1x8x1xf32> to vector<8x1xf32>
    %445 = vector.broadcast %444 : vector<8x1xf32> to vector<8x128xf32>
    %446 = arith.addf %442, %445 : vector<8x128xf32>
    %cst_404 = arith.constant 0.000000e+00 : f32
    %447 = vector.broadcast %cst_404 : f32 to vector<8x128xf32>
    %448 = arith.maximumf %446, %447 : vector<8x128xf32>
    %c4_405 = arith.constant 4 : index
    %c4_406 = arith.constant 4 : index
    %c0_407 = arith.constant 0 : index
    %c0_408 = arith.constant 0 : index
    %449 = vector.load %arg5[%c4_405, %c4_406, %c0_407, %c0_408] : memref<6x5x8x8xf32, #tpu.memory_space<vmem>>, vector<1x1x8x8xf32>
    %450 = vector.shape_cast %449 : vector<1x1x8x8xf32> to vector<8x8xf32>
    %cst_409 = arith.constant dense<0.000000e+00> : vector<8x128xf32>
    %451 = tpu.matmul %450, %448, %cst_409 {dimension_numbers = #tpu.dot_dimension_numbers<[1], [0], [0], [1], [0, 0, 1, 1], [], []>} : vector<8x8xf32>, vector<8x128xf32>, vector<8x128xf32> -> vector<8x128xf32>
    %c4_410 = arith.constant 4 : index
    %c4_411 = arith.constant 4 : index
    %c0_412 = arith.constant 0 : index
    %c0_413 = arith.constant 0 : index
    %452 = vector.load %arg6[%c4_410, %c4_411, %c0_412, %c0_413] : memref<6x5x8x1xf32, #tpu.memory_space<vmem>>, vector<1x1x8x1xf32>
    %453 = vector.shape_cast %452 : vector<1x1x8x1xf32> to vector<8x1xf32>
    %454 = vector.broadcast %453 : vector<8x1xf32> to vector<8x128xf32>
    %455 = arith.addf %451, %454 : vector<8x128xf32>
    %cst_414 = arith.constant 0.000000e+00 : f32
    %456 = vector.broadcast %cst_414 : f32 to vector<8x128xf32>
    %457 = arith.maximumf %455, %456 : vector<8x128xf32>
    %458 = vector.broadcast %0 : vector<1x128xf32> to vector<8x128xf32>
    %459 = arith.mulf %457, %458 : vector<8x128xf32>
    %cst_415 = arith.constant dense<0.000000e+00> : vector<8xf32>
    %460 = vector.multi_reduction <add>, %459, %cst_415 [1] : vector<8x128xf32> to vector<8xf32>
    %461 = vector.shape_cast %460 : vector<8xf32> to vector<8x1xf32>
    %cst_416 = arith.constant 0.00999999977 : f32
    %462 = vector.broadcast %cst_416 : f32 to vector<8x1xf32>
    %463 = arith.mulf %461, %462 : vector<8x1xf32>
    %464 = arith.mulf %459, %457 : vector<8x128xf32>
    %cst_417 = arith.constant dense<0.000000e+00> : vector<8xf32>
    %465 = vector.multi_reduction <add>, %464, %cst_417 [1] : vector<8x128xf32> to vector<8xf32>
    %466 = vector.shape_cast %465 : vector<8xf32> to vector<8x1xf32>
    %cst_418 = arith.constant 0.00999999977 : f32
    %467 = vector.broadcast %cst_418 : f32 to vector<8x1xf32>
    %468 = arith.mulf %466, %467 : vector<8x1xf32>
    %469 = arith.mulf %463, %463 : vector<8x1xf32>
    %470 = arith.subf %468, %469 : vector<8x1xf32>
    %cst_419 = arith.constant 0.000000e+00 : f32
    %471 = vector.broadcast %cst_419 : f32 to vector<8x1xf32>
    %472 = arith.maximumf %470, %471 : vector<8x1xf32>
    %473 = vector.broadcast %463 : vector<8x1xf32> to vector<8x128xf32>
    %474 = arith.subf %457, %473 : vector<8x128xf32>
    %cst_420 = arith.constant 9.99999974E-6 : f32
    %475 = vector.broadcast %cst_420 : f32 to vector<8x1xf32>
    %476 = arith.addf %472, %475 : vector<8x1xf32>
    %477 = math.rsqrt %476 : vector<8x1xf32>
    %478 = vector.broadcast %477 : vector<8x1xf32> to vector<8x128xf32>
    %479 = arith.mulf %474, %478 : vector<8x128xf32>
    %c5 = arith.constant 5 : index
    %c0_421 = arith.constant 0 : index
    %c0_422 = arith.constant 0 : index
    %c0_423 = arith.constant 0 : index
    %480 = vector.load %arg3[%c5, %c0_421, %c0_422, %c0_423] : memref<6x4x8x8xf32, #tpu.memory_space<vmem>>, vector<1x1x8x8xf32>
    %481 = vector.shape_cast %480 : vector<1x1x8x8xf32> to vector<8x8xf32>
    %cst_424 = arith.constant dense<0.000000e+00> : vector<8x128xf32>
    %482 = tpu.matmul %481, %479, %cst_424 {dimension_numbers = #tpu.dot_dimension_numbers<[1], [0], [0], [1], [0, 0, 1, 1], [], []>} : vector<8x8xf32>, vector<8x128xf32>, vector<8x128xf32> -> vector<8x128xf32>
    %cst_425 = arith.constant dense<0.000000e+00> : vector<8x128xf32>
    %483 = tpu.matmul %479, %1, %cst_425 {dimension_numbers = #tpu.dot_dimension_numbers<[1], [0], [0], [1], [0, 0, 1, 1], [], []>} : vector<8x128xf32>, vector<128x128xf32>, vector<8x128xf32> -> vector<8x128xf32>
    %c5_426 = arith.constant 5 : index
    %c1_427 = arith.constant 1 : index
    %c0_428 = arith.constant 0 : index
    %c0_429 = arith.constant 0 : index
    %484 = vector.load %arg3[%c5_426, %c1_427, %c0_428, %c0_429] : memref<6x4x8x8xf32, #tpu.memory_space<vmem>>, vector<1x1x8x8xf32>
    %485 = vector.shape_cast %484 : vector<1x1x8x8xf32> to vector<8x8xf32>
    %cst_430 = arith.constant dense<0.000000e+00> : vector<8x128xf32>
    %486 = tpu.matmul %485, %483, %cst_430 {dimension_numbers = #tpu.dot_dimension_numbers<[1], [0], [0], [1], [0, 0, 1, 1], [], []>} : vector<8x8xf32>, vector<8x128xf32>, vector<8x128xf32> -> vector<8x128xf32>
    %487 = arith.addf %482, %486 : vector<8x128xf32>
    %cst_431 = arith.constant dense<0.000000e+00> : vector<8x128xf32>
    %488 = tpu.matmul %483, %1, %cst_431 {dimension_numbers = #tpu.dot_dimension_numbers<[1], [0], [0], [1], [0, 0, 1, 1], [], []>} : vector<8x128xf32>, vector<128x128xf32>, vector<8x128xf32> -> vector<8x128xf32>
    %c5_432 = arith.constant 5 : index
    %c2_433 = arith.constant 2 : index
    %c0_434 = arith.constant 0 : index
    %c0_435 = arith.constant 0 : index
    %489 = vector.load %arg3[%c5_432, %c2_433, %c0_434, %c0_435] : memref<6x4x8x8xf32, #tpu.memory_space<vmem>>, vector<1x1x8x8xf32>
    %490 = vector.shape_cast %489 : vector<1x1x8x8xf32> to vector<8x8xf32>
    %cst_436 = arith.constant dense<0.000000e+00> : vector<8x128xf32>
    %491 = tpu.matmul %490, %488, %cst_436 {dimension_numbers = #tpu.dot_dimension_numbers<[1], [0], [0], [1], [0, 0, 1, 1], [], []>} : vector<8x8xf32>, vector<8x128xf32>, vector<8x128xf32> -> vector<8x128xf32>
    %492 = arith.addf %487, %491 : vector<8x128xf32>
    %cst_437 = arith.constant dense<0.000000e+00> : vector<8x128xf32>
    %493 = tpu.matmul %488, %1, %cst_437 {dimension_numbers = #tpu.dot_dimension_numbers<[1], [0], [0], [1], [0, 0, 1, 1], [], []>} : vector<8x128xf32>, vector<128x128xf32>, vector<8x128xf32> -> vector<8x128xf32>
    %c5_438 = arith.constant 5 : index
    %c3_439 = arith.constant 3 : index
    %c0_440 = arith.constant 0 : index
    %c0_441 = arith.constant 0 : index
    %494 = vector.load %arg3[%c5_438, %c3_439, %c0_440, %c0_441] : memref<6x4x8x8xf32, #tpu.memory_space<vmem>>, vector<1x1x8x8xf32>
    %495 = vector.shape_cast %494 : vector<1x1x8x8xf32> to vector<8x8xf32>
    %cst_442 = arith.constant dense<0.000000e+00> : vector<8x128xf32>
    %496 = tpu.matmul %495, %493, %cst_442 {dimension_numbers = #tpu.dot_dimension_numbers<[1], [0], [0], [1], [0, 0, 1, 1], [], []>} : vector<8x8xf32>, vector<8x128xf32>, vector<8x128xf32> -> vector<8x128xf32>
    %497 = arith.addf %492, %496 : vector<8x128xf32>
    %c5_443 = arith.constant 5 : index
    %c0_444 = arith.constant 0 : index
    %c0_445 = arith.constant 0 : index
    %498 = vector.load %arg4[%c5_443, %c0_444, %c0_445] : memref<6x8x1xf32, #tpu.memory_space<vmem>>, vector<1x8x1xf32>
    %499 = vector.shape_cast %498 : vector<1x8x1xf32> to vector<8x1xf32>
    %500 = vector.broadcast %499 : vector<8x1xf32> to vector<8x128xf32>
    %501 = arith.addf %497, %500 : vector<8x128xf32>
    %cst_446 = arith.constant 0.000000e+00 : f32
    %502 = vector.broadcast %cst_446 : f32 to vector<8x128xf32>
    %503 = arith.maximumf %501, %502 : vector<8x128xf32>
    %c5_447 = arith.constant 5 : index
    %c0_448 = arith.constant 0 : index
    %c0_449 = arith.constant 0 : index
    %c0_450 = arith.constant 0 : index
    %504 = vector.load %arg5[%c5_447, %c0_448, %c0_449, %c0_450] : memref<6x5x8x8xf32, #tpu.memory_space<vmem>>, vector<1x1x8x8xf32>
    %505 = vector.shape_cast %504 : vector<1x1x8x8xf32> to vector<8x8xf32>
    %cst_451 = arith.constant dense<0.000000e+00> : vector<8x128xf32>
    %506 = tpu.matmul %505, %503, %cst_451 {dimension_numbers = #tpu.dot_dimension_numbers<[1], [0], [0], [1], [0, 0, 1, 1], [], []>} : vector<8x8xf32>, vector<8x128xf32>, vector<8x128xf32> -> vector<8x128xf32>
    %c5_452 = arith.constant 5 : index
    %c0_453 = arith.constant 0 : index
    %c0_454 = arith.constant 0 : index
    %c0_455 = arith.constant 0 : index
    %507 = vector.load %arg6[%c5_452, %c0_453, %c0_454, %c0_455] : memref<6x5x8x1xf32, #tpu.memory_space<vmem>>, vector<1x1x8x1xf32>
    %508 = vector.shape_cast %507 : vector<1x1x8x1xf32> to vector<8x1xf32>
    %509 = vector.broadcast %508 : vector<8x1xf32> to vector<8x128xf32>
    %510 = arith.addf %506, %509 : vector<8x128xf32>
    %cst_456 = arith.constant 0.000000e+00 : f32
    %511 = vector.broadcast %cst_456 : f32 to vector<8x128xf32>
    %512 = arith.maximumf %510, %511 : vector<8x128xf32>
    %c5_457 = arith.constant 5 : index
    %c1_458 = arith.constant 1 : index
    %c0_459 = arith.constant 0 : index
    %c0_460 = arith.constant 0 : index
    %513 = vector.load %arg5[%c5_457, %c1_458, %c0_459, %c0_460] : memref<6x5x8x8xf32, #tpu.memory_space<vmem>>, vector<1x1x8x8xf32>
    %514 = vector.shape_cast %513 : vector<1x1x8x8xf32> to vector<8x8xf32>
    %cst_461 = arith.constant dense<0.000000e+00> : vector<8x128xf32>
    %515 = tpu.matmul %514, %512, %cst_461 {dimension_numbers = #tpu.dot_dimension_numbers<[1], [0], [0], [1], [0, 0, 1, 1], [], []>} : vector<8x8xf32>, vector<8x128xf32>, vector<8x128xf32> -> vector<8x128xf32>
    %c5_462 = arith.constant 5 : index
    %c1_463 = arith.constant 1 : index
    %c0_464 = arith.constant 0 : index
    %c0_465 = arith.constant 0 : index
    %516 = vector.load %arg6[%c5_462, %c1_463, %c0_464, %c0_465] : memref<6x5x8x1xf32, #tpu.memory_space<vmem>>, vector<1x1x8x1xf32>
    %517 = vector.shape_cast %516 : vector<1x1x8x1xf32> to vector<8x1xf32>
    %518 = vector.broadcast %517 : vector<8x1xf32> to vector<8x128xf32>
    %519 = arith.addf %515, %518 : vector<8x128xf32>
    %cst_466 = arith.constant 0.000000e+00 : f32
    %520 = vector.broadcast %cst_466 : f32 to vector<8x128xf32>
    %521 = arith.maximumf %519, %520 : vector<8x128xf32>
    %c5_467 = arith.constant 5 : index
    %c2_468 = arith.constant 2 : index
    %c0_469 = arith.constant 0 : index
    %c0_470 = arith.constant 0 : index
    %522 = vector.load %arg5[%c5_467, %c2_468, %c0_469, %c0_470] : memref<6x5x8x8xf32, #tpu.memory_space<vmem>>, vector<1x1x8x8xf32>
    %523 = vector.shape_cast %522 : vector<1x1x8x8xf32> to vector<8x8xf32>
    %cst_471 = arith.constant dense<0.000000e+00> : vector<8x128xf32>
    %524 = tpu.matmul %523, %521, %cst_471 {dimension_numbers = #tpu.dot_dimension_numbers<[1], [0], [0], [1], [0, 0, 1, 1], [], []>} : vector<8x8xf32>, vector<8x128xf32>, vector<8x128xf32> -> vector<8x128xf32>
    %c5_472 = arith.constant 5 : index
    %c2_473 = arith.constant 2 : index
    %c0_474 = arith.constant 0 : index
    %c0_475 = arith.constant 0 : index
    %525 = vector.load %arg6[%c5_472, %c2_473, %c0_474, %c0_475] : memref<6x5x8x1xf32, #tpu.memory_space<vmem>>, vector<1x1x8x1xf32>
    %526 = vector.shape_cast %525 : vector<1x1x8x1xf32> to vector<8x1xf32>
    %527 = vector.broadcast %526 : vector<8x1xf32> to vector<8x128xf32>
    %528 = arith.addf %524, %527 : vector<8x128xf32>
    %cst_476 = arith.constant 0.000000e+00 : f32
    %529 = vector.broadcast %cst_476 : f32 to vector<8x128xf32>
    %530 = arith.maximumf %528, %529 : vector<8x128xf32>
    %c5_477 = arith.constant 5 : index
    %c3_478 = arith.constant 3 : index
    %c0_479 = arith.constant 0 : index
    %c0_480 = arith.constant 0 : index
    %531 = vector.load %arg5[%c5_477, %c3_478, %c0_479, %c0_480] : memref<6x5x8x8xf32, #tpu.memory_space<vmem>>, vector<1x1x8x8xf32>
    %532 = vector.shape_cast %531 : vector<1x1x8x8xf32> to vector<8x8xf32>
    %cst_481 = arith.constant dense<0.000000e+00> : vector<8x128xf32>
    %533 = tpu.matmul %532, %530, %cst_481 {dimension_numbers = #tpu.dot_dimension_numbers<[1], [0], [0], [1], [0, 0, 1, 1], [], []>} : vector<8x8xf32>, vector<8x128xf32>, vector<8x128xf32> -> vector<8x128xf32>
    %c5_482 = arith.constant 5 : index
    %c3_483 = arith.constant 3 : index
    %c0_484 = arith.constant 0 : index
    %c0_485 = arith.constant 0 : index
    %534 = vector.load %arg6[%c5_482, %c3_483, %c0_484, %c0_485] : memref<6x5x8x1xf32, #tpu.memory_space<vmem>>, vector<1x1x8x1xf32>
    %535 = vector.shape_cast %534 : vector<1x1x8x1xf32> to vector<8x1xf32>
    %536 = vector.broadcast %535 : vector<8x1xf32> to vector<8x128xf32>
    %537 = arith.addf %533, %536 : vector<8x128xf32>
    %cst_486 = arith.constant 0.000000e+00 : f32
    %538 = vector.broadcast %cst_486 : f32 to vector<8x128xf32>
    %539 = arith.maximumf %537, %538 : vector<8x128xf32>
    %c5_487 = arith.constant 5 : index
    %c4_488 = arith.constant 4 : index
    %c0_489 = arith.constant 0 : index
    %c0_490 = arith.constant 0 : index
    %540 = vector.load %arg5[%c5_487, %c4_488, %c0_489, %c0_490] : memref<6x5x8x8xf32, #tpu.memory_space<vmem>>, vector<1x1x8x8xf32>
    %541 = vector.shape_cast %540 : vector<1x1x8x8xf32> to vector<8x8xf32>
    %cst_491 = arith.constant dense<0.000000e+00> : vector<8x128xf32>
    %542 = tpu.matmul %541, %539, %cst_491 {dimension_numbers = #tpu.dot_dimension_numbers<[1], [0], [0], [1], [0, 0, 1, 1], [], []>} : vector<8x8xf32>, vector<8x128xf32>, vector<8x128xf32> -> vector<8x128xf32>
    %c5_492 = arith.constant 5 : index
    %c4_493 = arith.constant 4 : index
    %c0_494 = arith.constant 0 : index
    %c0_495 = arith.constant 0 : index
    %543 = vector.load %arg6[%c5_492, %c4_493, %c0_494, %c0_495] : memref<6x5x8x1xf32, #tpu.memory_space<vmem>>, vector<1x1x8x1xf32>
    %544 = vector.shape_cast %543 : vector<1x1x8x1xf32> to vector<8x1xf32>
    %545 = vector.broadcast %544 : vector<8x1xf32> to vector<8x128xf32>
    %546 = arith.addf %542, %545 : vector<8x128xf32>
    %cst_496 = arith.constant 0.000000e+00 : f32
    %547 = vector.broadcast %cst_496 : f32 to vector<8x128xf32>
    %548 = arith.maximumf %546, %547 : vector<8x128xf32>
    %c0_497 = arith.constant 0 : index
    %c0_498 = arith.constant 0 : index
    %549 = vector.load %arg7[%c0_497, %c0_498] : memref<8x128xf32, #tpu.memory_space<vmem>>, vector<8x128xf32>
    tpu.vector_store %arg7[%c0_497, %c0_498], %548 {strides = array<i32>} : memref<8x128xf32, #tpu.memory_space<vmem>>, vector<8x128xf32>,
    return
  }
}

</mosaic_0001>

<llo_original>
// kernel: tpu_custom_call.1
$region0: #{tpu_custom_call.1}
  #allocation0 [shape = 'u32[]', space=smem, size = 0x4, offset = 0x4, fixed_abs, tag = 'smem constant byte address 0x4 - core index']
  #allocation1 [shape = 'u32[72,128]{1,0:T(1,128)}', space=vmem, size = 0x9000, scoped, tag = 'internal scratch']
  %s0 = inlined_call_operand.vmem [shape: f32[8,128], index: 0, kind: input, shape index: {}]
  %s1 = inlined_call_operand.hbm [shape: f32[128,128], index: 1, kind: input, shape index: {}]
  %s2 = inlined_call_operand.vmem [shape: f32[1,128], index: 2, kind: input, shape index: {}]
  %s3 = inlined_call_operand.hbm [shape: f32[6,4,8,8], index: 3, kind: input, shape index: {}]
  %s4 = inlined_call_operand.vmem [shape: f32[6,8,1], index: 4, kind: input, shape index: {}]
  %s5 = inlined_call_operand.vmem [shape: f32[6,5,8,8], index: 5, kind: input, shape index: {}]
  %s6 = inlined_call_operand.vmem [shape: f32[6,5,8,1], index: 6, kind: input, shape index: {}]
  %s7 = inlined_call_operand.hbm [shape: f32[8,128], index: 7, kind: output, shape index: {}]
  %s8 = sld [smem:[#allocation0]]
  $region46: #{tpu_custom_call.1} parent=0
    _
  %s10 = ssub.s32 1, %s8
  %s11 = scalar_select 0, %s10, %s8
  $region1: #{tpu_custom_call.1} parent=0
    #allocation2 [shape = 'u8[65536]{0}', space=vmem, size = 0x10000, scoped, tag = 'input window, operand 1, single buffered']
    #allocation3 [shape = 's32[1]{0}', space=sflag, size = 0x4, scoped, tag = 'scoped memory for tpu_custom_call.1']
    #allocation4 [shape = 's32[1]{0}', space=sflag, size = 0x4, scoped, tag = 'scoped memory for tpu_custom_call.1']
    #allocation5 [shape = 'u8[98304]{0}', space=vmem, size = 0x18000, scoped, tag = 'input window, operand 3, single buffered']
    #allocation6 [shape = 's32[1]{0}', space=sflag, size = 0x4, scoped, tag = 'scoped memory for tpu_custom_call.1']
    #allocation7 [shape = 'u8[4096]{0}', space=vmem, size = 0x1000, scoped, tag = 'output window, operand 0, single buffered']
    %12 = vsyncpa [#allocation3], 0
    %13 = vsyncpa [#allocation6], 0
    %14 = vsyncpa [#allocation4], 0
    // Predicated region
    $region2: #{tpu_custom_call.1} parent=1 // pred_check
      _
    $region3: #{tpu_custom_call.1} parent=1 // pred_check_branch
      %16 = sbr.rel (0) target = $region5
    $region4: #{tpu_custom_call.1} parent=1 // pred_region
      _
    $region5: #{tpu_custom_call.1} parent=1 // pred_fallthru
      _
    // Predicated region
    $region6: #{tpu_custom_call.1} parent=1 // pred_check
      _
    $region7: #{tpu_custom_call.1} parent=1 // pred_check_branch
      %18 = sbr.rel (0) target = $region9
    $region8: #{tpu_custom_call.1} parent=1 // pred_region
      %20 = vsyncadd [#allocation3], 0
      %s21 = sshll.u32 %s1, 4
      %s22 = int_to_ptr.hbm [resolvable:$true] %s21
      %s23 = sshll.u32 [#allocation2], 4
      %s24 = int_to_ptr.vmem [resolvable:$true] %s23
      %29 = dma.hbm_to_vmem [thread:$0]  %s22, 2048, %s24, [#allocation3], 128, 128, 8
    $region9: #{tpu_custom_call.1} parent=1 // pred_fallthru
      _
    // Predicated region
    $region10: #{tpu_custom_call.1} parent=1 // pred_check
      _
    $region11: #{tpu_custom_call.1} parent=1 // pred_check_branch
      %31 = sbr.rel (0) target = $region13
    $region12: #{tpu_custom_call.1} parent=1 // pred_region
      _
    $region13: #{tpu_custom_call.1} parent=1 // pred_fallthru
      _
    // Predicated region
    $region14: #{tpu_custom_call.1} parent=1 // pred_check
      _
    $region15: #{tpu_custom_call.1} parent=1 // pred_check_branch
      %33 = sbr.rel (0) target = $region17
    $region16: #{tpu_custom_call.1} parent=1 // pred_region
      %35 = vsyncadd [#allocation6], 0
      %s36 = sshll.u32 %s3, 4
      %s37 = int_to_ptr.hbm [resolvable:$true] %s36
      %s38 = sshll.u32 [#allocation5], 4
      %s39 = int_to_ptr.vmem [resolvable:$true] %s38
      %44 = dma.hbm_to_vmem [thread:$0]  %s37, 3072, %s39, [#allocation6], 128, 128, 8
    $region17: #{tpu_custom_call.1} parent=1 // pred_fallthru
      _
    // Predicated region
    $region18: #{tpu_custom_call.1} parent=1 // pred_check
      _
    $region19: #{tpu_custom_call.1} parent=1 // pred_check_branch
      %46 = sbr.rel (0) target = $region21
    $region20: #{tpu_custom_call.1} parent=1 // pred_region
      _
    $region21: #{tpu_custom_call.1} parent=1 // pred_fallthru
      _
    // Predicated region
    $region22: #{tpu_custom_call.1} parent=1 // pred_check
      _
    $region23: #{tpu_custom_call.1} parent=1 // pred_check_branch
      %48 = sbr.rel (0) target = $region25
    $region24: #{tpu_custom_call.1} parent=1 // pred_region
      _
    $region25: #{tpu_custom_call.1} parent=1 // pred_fallthru
      _
    // Predicated region
    $region26: #{tpu_custom_call.1} parent=1 // pred_check
      _
    $region27: #{tpu_custom_call.1} parent=1 // pred_check_branch
      %50 = sbr.rel (0) target = $region29
    $region28: #{tpu_custom_call.1} parent=1 // pred_region
      _
    $region29: #{tpu_custom_call.1} parent=1 // pred_fallthru
      _
    // Predicated region
    $region30: #{tpu_custom_call.1} parent=1 // pred_check
      _
    $region31: #{tpu_custom_call.1} parent=1 // pred_check_branch
      %52 = sbr.rel (0) target = $region33
    $region32: #{tpu_custom_call.1} parent=1 // pred_region
      %54 = dma.done [#allocation3], 2048
    $region33: #{tpu_custom_call.1} parent=1 // pred_fallthru
      _
    // Predicated region
    $region34: #{tpu_custom_call.1} parent=1 // pred_check
      _
    $region35: #{tpu_custom_call.1} parent=1 // pred_check_branch
      %56 = sbr.rel (0) target = $region37
    $region36: #{tpu_custom_call.1} parent=1 // pred_region
      %58 = dma.done [#allocation6], 3072
    $region37: #{tpu_custom_call.1} parent=1 // pred_fallthru
      _
    %v59 = vld [vmem:[%s2] sm:$0x1]
    %v60 = vld [vmem:[#allocation2] sm:$0xff]
    %v61 = vld [vmem:[#allocation2 + $0x8] sm:$0xff]
    %v62 = vld [vmem:[#allocation2 + $0x10] sm:$0xff]
    %v63 = vld [vmem:[#allocation2 + $0x18] sm:$0xff]
    %v64 = vld [vmem:[#allocation2 + $0x20] sm:$0xff]
    %v65 = vld [vmem:[#allocation2 + $0x28] sm:$0xff]
    %v66 = vld [vmem:[#allocation2 + $0x30] sm:$0xff]
    %v67 = vld [vmem:[#allocation2 + $0x38] sm:$0xff]
    %v68 = vld [vmem:[#allocation2 + $0x40] sm:$0xff]
    %v69 = vld [vmem:[#allocation2 + $0x48] sm:$0xff]
    %v70 = vld [vmem:[#allocation2 + $0x50] sm:$0xff]
    %v71 = vld [vmem:[#allocation2 + $0x58] sm:$0xff]
    %v72 = vld [vmem:[#allocation2 + $0x60] sm:$0xff]
    %v73 = vld [vmem:[#allocation2 + $0x68] sm:$0xff]
    %v74 = vld [vmem:[#allocation2 + $0x70] sm:$0xff]
    %v75 = vld [vmem:[#allocation2 + $0x78] sm:$0xff]
    %v76 = vld [vmem:[%s0] sm:$0xff]
    %v78 = vperm.slane %v59, 0
    %v80 = vmul.f32 %v76, %v78
    %81 = vadd.xlane.f32.xlu0 %v80
    %v82 = vpop.xlane.xlu0 %81
    %v83 = vmul.f32 %v82, 0.01
    %v84 = vmul.f32 %v80, %v76
    %85 = vadd.xlane.f32.xlu0 %v84
    %v86 = vpop.xlane.xlu0 %85
    %v87 = vmul.f32 %v86, 0.01
    %v88 = vmul.f32 %v83, %v83
    %v89 = vsub.f32 %v87, %v88
    %v90 = vmax.f32 %v89, 0.0
    %v91 = vsub.f32 %v76, %v83
    %v92 = vadd.f32 %v90, 1e-05
    %v93 = vrsqrt.pop %v92
    %v94 = vmul.f32 %v93, %v92
    %v95 = vmul.f32 %v94, %v93
    %v96 = vmul.f32 0.5, %v95
    %v97 = vsub.f32 1.5, %v96
    %v98 = vmul.f32 %v93, %v97
    %vm99 = vweird.f32 %v92
    %vm100 = vweird.f32 %v93
    %vm101 = vmor %vm99, %vm100
    %v102 = vsel %vm101, %v93, %v98
    %v103 = vmul.f32 %v91, %v102
    %v104 = vld [vmem:[#allocation5] sm:$0xff]
    %105 = vmatpush.msra.mxu0 %v75
    %106 = vmatpush.msra.mxu0 %v74
    %107 = vmatpush.msra.mxu0 %v73
    %108 = vmatpush.msra.mxu0 %v72
    %109 = vmatpush.msra.mxu0 %v71
    %110 = vmatpush.msra.mxu0 %v70
    %111 = vmatpush.msra.mxu0 %v69
    %112 = vmatpush.msra.mxu0 %v68
    %113 = vmatpush.msra.mxu0 %v67
    %114 = vmatpush.msra.mxu0 %v66
    %115 = vmatpush.msra.mxu0 %v65
    %116 = vmatpush.msra.mxu0 %v64
    %117 = vmatpush.msra.mxu0 %v63
    %118 = vmatpush.msra.mxu0 %v62
    %119 = vmatpush.msra.mxu0 %v61
    %120 = vmatpush.msra.mxu0 %v60
    %121 = vmatmul.f32.gmra.mxu0 %v103
    %v122 = vpop.f32.mrf.mxu0
    %v123 = vadd.f32 0.0, %v122
    %124 = vdwg.mxu0
    %s125 = scalar_lea.vmem [#allocation5], 8
    %v126 = vld [vmem:[%s125] sm:$0xff]
    %vm127 = vcmask 64512
    %v129 = vsel %vm127, %v126, 0
    %131 = vmatpush.msra.mxu0 0.0
    %132 = vmatpush.msra.mxu0 0.0
    %133 = vmatpush.msra.mxu0 0.0
    %134 = vmatpush.msra.mxu0 0.0
    %135 = vmatpush.msra.mxu0 0.0
    %136 = vmatpush.msra.mxu0 0.0
    %137 = vmatpush.msra.mxu0 0.0
    %138 = vmatpush.msra.mxu0 0.0
    %139 = vmatpush.msra.mxu0 0.0
    %140 = vmatpush.msra.mxu0 0.0
    %141 = vmatpush.msra.mxu0 0.0
    %142 = vmatpush.msra.mxu0 0.0
    %143 = vmatpush.msra.mxu0 0.0
    %144 = vmatpush.msra.mxu0 0.0
    %145 = vmatpush.msra.mxu0 0.0
    %146 = vmatpush.msra.mxu0 %v123
    %147 = vmatmul.f32.gmra.mxu0 %v129
    %v148 = vpop.f32.mrf.mxu0
    %v149 = vadd.f32 0.0, %v148
    %150 = vdwg.mxu0
    %v152 = vsel %vm127, %v104, 0
    %154 = vmatpush.msra.mxu0 0.0
    %155 = vmatpush.msra.mxu0 0.0
    %156 = vmatpush.msra.mxu0 0.0
    %157 = vmatpush.msra.mxu0 0.0
    %158 = vmatpush.msra.mxu0 0.0
    %159 = vmatpush.msra.mxu0 0.0
    %160 = vmatpush.msra.mxu0 0.0
    %161 = vmatpush.msra.mxu0 0.0
    %162 = vmatpush.msra.mxu0 0.0
    %163 = vmatpush.msra.mxu0 0.0
    %164 = vmatpush.msra.mxu0 0.0
    %165 = vmatpush.msra.mxu0 0.0
    %166 = vmatpush.msra.mxu0 0.0
    %167 = vmatpush.msra.mxu0 0.0
    %168 = vmatpush.msra.mxu0 0.0
    %169 = vmatpush.msra.mxu0 %v103
    %170 = vmatmul.f32.gmra.mxu0 %v152
    %v171 = vpop.f32.mrf.mxu0
    %v172 = vadd.f32 %v149, %v171
    %173 = vdwg.mxu0
    %174 = vmatpush.msra.mxu0 %v75
    %175 = vmatpush.msra.mxu0 %v74
    %176 = vmatpush.msra.mxu0 %v73
    %177 = vmatpush.msra.mxu0 %v72
    %178 = vmatpush.msra.mxu0 %v71
    %179 = vmatpush.msra.mxu0 %v70
    %180 = vmatpush.msra.mxu0 %v69
    %181 = vmatpush.msra.mxu0 %v68
    %182 = vmatpush.msra.mxu0 %v67
    %183 = vmatpush.msra.mxu0 %v66
    %184 = vmatpush.msra.mxu0 %v65
    %185 = vmatpush.msra.mxu0 %v64
    %186 = vmatpush.msra.mxu0 %v63
    %187 = vmatpush.msra.mxu0 %v62
    %188 = vmatpush.msra.mxu0 %v61
    %189 = vmatpush.msra.mxu0 %v60
    %190 = vmatmul.f32.gmra.mxu0 %v123
    %v191 = vpop.f32.mrf.mxu0
    %v192 = vadd.f32 0.0, %v191
    %193 = vdwg.mxu0
    %s194 = scalar_lea.vmem [#allocation5], 16
    %v195 = vld [vmem:[%s194] sm:$0xff]
    %v197 = vsel %vm127, %v195, 0
    %199 = vmatpush.msra.mxu0 0.0
    %200 = vmatpush.msra.mxu0 0.0
    %201 = vmatpush.msra.mxu0 0.0
    %202 = vmatpush.msra.mxu0 0.0
    %203 = vmatpush.msra.mxu0 0.0
    %204 = vmatpush.msra.mxu0 0.0
    %205 = vmatpush.msra.mxu0 0.0
    %206 = vmatpush.msra.mxu0 0.0
    %207 = vmatpush.msra.mxu0 0.0
    %208 = vmatpush.msra.mxu0 0.0
    %209 = vmatpush.msra.mxu0 0.0
    %210 = vmatpush.msra.mxu0 0.0
    %211 = vmatpush.msra.mxu0 0.0
    %212 = vmatpush.msra.mxu0 0.0
    %213 = vmatpush.msra.mxu0 0.0
    %214 = vmatpush.msra.mxu0 %v192
    %215 = vmatmul.f32.gmra.mxu0 %v197
    %v216 = vpop.f32.mrf.mxu0
    %v217 = vadd.f32 0.0, %v216
    %218 = vdwg.mxu0
    %v219 = vadd.f32 %v172, %v217
    %220 = vmatpush.msra.mxu0 %v75
    %221 = vmatpush.msra.mxu0 %v74
    %222 = vmatpush.msra.mxu0 %v73
    %223 = vmatpush.msra.mxu0 %v72
    %224 = vmatpush.msra.mxu0 %v71
    %225 = vmatpush.msra.mxu0 %v70
    %226 = vmatpush.msra.mxu0 %v69
    %227 = vmatpush.msra.mxu0 %v68
    %228 = vmatpush.msra.mxu0 %v67
    %229 = vmatpush.msra.mxu0 %v66
    %230 = vmatpush.msra.mxu0 %v65
    %231 = vmatpush.msra.mxu0 %v64
    %232 = vmatpush.msra.mxu0 %v63
    %233 = vmatpush.msra.mxu0 %v62
    %234 = vmatpush.msra.mxu0 %v61
    %235 = vmatpush.msra.mxu0 %v60
    %236 = vmatmul.f32.gmra.mxu0 %v192
    %v237 = vpop.f32.mrf.mxu0
    %v238 = vadd.f32 0.0, %v237
    %239 = vdwg.mxu0
    %s240 = scalar_lea.vmem [#allocation5], 24
    %v241 = vld [vmem:[%s240] sm:$0xff]
    %v243 = vsel %vm127, %v241, 0
    %245 = vmatpush.msra.mxu0 0.0
    %246 = vmatpush.msra.mxu0 0.0
    %247 = vmatpush.msra.mxu0 0.0
    %248 = vmatpush.msra.mxu0 0.0
    %249 = vmatpush.msra.mxu0 0.0
    %250 = vmatpush.msra.mxu0 0.0
    %251 = vmatpush.msra.mxu0 0.0
    %252 = vmatpush.msra.mxu0 0.0
    %253 = vmatpush.msra.mxu0 0.0
    %254 = vmatpush.msra.mxu0 0.0
    %255 = vmatpush.msra.mxu0 0.0
    %256 = vmatpush.msra.mxu0 0.0
    %257 = vmatpush.msra.mxu0 0.0
    %258 = vmatpush.msra.mxu0 0.0
    %259 = vmatpush.msra.mxu0 0.0
    %260 = vmatpush.msra.mxu0 %v238
    %261 = vmatmul.f32.gmra.mxu0 %v243
    %v262 = vpop.f32.mrf.mxu0
    %v263 = vadd.f32 0.0, %v262
    %264 = vdwg.mxu0
    %v265 = vadd.f32 %v219, %v263
    %v266 = vld [vmem:[%s4] sm:$0xff]
    %268 = vset.pattern.permute.xlu0 0
    %269 = vperm.xlu0 %268, %v266
    %v270 = vpop.permute.xlu0 %269
    %v272 = vadd.f32 %v265, %v270
    %v273 = vmax.f32 %v272, 0.0
    %v274 = vld [vmem:[%s5] sm:$0xff]
    %v275 = vld [vmem:[%s6] sm:$0xff]
    %277 = vset.pattern.permute.xlu0 0
    %278 = vperm.xlu0 %277, %v275
    %v279 = vpop.permute.xlu0 %278
    %v282 = vsel %vm127, %v274, 0
    %284 = vmatpush.msra.mxu0 0.0
    %285 = vmatpush.msra.mxu0 0.0
    %286 = vmatpush.msra.mxu0 0.0
    %287 = vmatpush.msra.mxu0 0.0
    %288 = vmatpush.msra.mxu0 0.0
    %289 = vmatpush.msra.mxu0 0.0
    %290 = vmatpush.msra.mxu0 0.0
    %291 = vmatpush.msra.mxu0 0.0
    %292 = vmatpush.msra.mxu0 0.0
    %293 = vmatpush.msra.mxu0 0.0
    %294 = vmatpush.msra.mxu0 0.0
    %295 = vmatpush.msra.mxu0 0.0
    %296 = vmatpush.msra.mxu0 0.0
    %297 = vmatpush.msra.mxu0 0.0
    %298 = vmatpush.msra.mxu0 0.0
    %299 = vmatpush.msra.mxu0 %v273
    %300 = vmatmul.f32.gmra.mxu0 %v282
    %v301 = vpop.f32.mrf.mxu0
    %v302 = vadd.f32 %v279, %v301
    %303 = vdwg.mxu0
    %v304 = vmax.f32 %v302, 0.0
    %s305 = scalar_lea.vmem %s5, 8
    %v306 = vld [vmem:[%s305] sm:$0xff]
    %s307 = scalar_lea.vmem %s6, 8
    %v308 = vld [vmem:[%s307] sm:$0xff]
    %310 = vset.pattern.permute.xlu0 0
    %311 = vperm.xlu0 %310, %v308
    %v312 = vpop.permute.xlu0 %311
    %v315 = vsel %vm127, %v306, 0
    %317 = vmatpush.msra.mxu0 0.0
    %318 = vmatpush.msra.mxu0 0.0
    %319 = vmatpush.msra.mxu0 0.0
    %320 = vmatpush.msra.mxu0 0.0
    %321 = vmatpush.msra.mxu0 0.0
    %322 = vmatpush.msra.mxu0 0.0
    %323 = vmatpush.msra.mxu0 0.0
    %324 = vmatpush.msra.mxu0 0.0
    %325 = vmatpush.msra.mxu0 0.0
    %326 = vmatpush.msra.mxu0 0.0
    %327 = vmatpush.msra.mxu0 0.0
    %328 = vmatpush.msra.mxu0 0.0
    %329 = vmatpush.msra.mxu0 0.0
    %330 = vmatpush.msra.mxu0 0.0
    %331 = vmatpush.msra.mxu0 0.0
    %332 = vmatpush.msra.mxu0 %v304
    %333 = vmatmul.f32.gmra.mxu0 %v315
    %v334 = vpop.f32.mrf.mxu0
    %v335 = vadd.f32 %v312, %v334
    %336 = vdwg.mxu0
    %v337 = vmax.f32 %v335, 0.0
    %s338 = scalar_lea.vmem %s5, 16
    %v339 = vld [vmem:[%s338] sm:$0xff]
    %s340 = scalar_lea.vmem %s6, 16
    %v341 = vld [vmem:[%s340] sm:$0xff]
    %343 = vset.pattern.permute.xlu0 0
    %344 = vperm.xlu0 %343, %v341
    %v345 = vpop.permute.xlu0 %344
    %v348 = vsel %vm127, %v339, 0
    %350 = vmatpush.msra.mxu0 0.0
    %351 = vmatpush.msra.mxu0 0.0
    %352 = vmatpush.msra.mxu0 0.0
    %353 = vmatpush.msra.mxu0 0.0
    %354 = vmatpush.msra.mxu0 0.0
    %355 = vmatpush.msra.mxu0 0.0
    %356 = vmatpush.msra.mxu0 0.0
    %357 = vmatpush.msra.mxu0 0.0
    %358 = vmatpush.msra.mxu0 0.0
    %359 = vmatpush.msra.mxu0 0.0
    %360 = vmatpush.msra.mxu0 0.0
    %361 = vmatpush.msra.mxu0 0.0
    %362 = vmatpush.msra.mxu0 0.0
    %363 = vmatpush.msra.mxu0 0.0
    %364 = vmatpush.msra.mxu0 0.0
    %365 = vmatpush.msra.mxu0 %v337
    %366 = vmatmul.f32.gmra.mxu0 %v348
    %v367 = vpop.f32.mrf.mxu0
    %v368 = vadd.f32 %v345, %v367
    %369 = vdwg.mxu0
    %v370 = vmax.f32 %v368, 0.0
    %s371 = scalar_lea.vmem %s5, 24
    %v372 = vld [vmem:[%s371] sm:$0xff]
    %s373 = scalar_lea.vmem %s6, 24
    %v374 = vld [vmem:[%s373] sm:$0xff]
    %376 = vset.pattern.permute.xlu0 0
    %377 = vperm.xlu0 %376, %v374
    %v378 = vpop.permute.xlu0 %377
    %v381 = vsel %vm127, %v372, 0
    %383 = vmatpush.msra.mxu0 0.0
    %384 = vmatpush.msra.mxu0 0.0
    %385 = vmatpush.msra.mxu0 0.0
    %386 = vmatpush.msra.mxu0 0.0
    %387 = vmatpush.msra.mxu0 0.0
    %388 = vmatpush.msra.mxu0 0.0
    %389 = vmatpush.msra.mxu0 0.0
    %390 = vmatpush.msra.mxu0 0.0
    %391 = vmatpush.msra.mxu0 0.0
    %392 = vmatpush.msra.mxu0 0.0
    %393 = vmatpush.msra.mxu0 0.0
    %394 = vmatpush.msra.mxu0 0.0
    %395 = vmatpush.msra.mxu0 0.0
    %396 = vmatpush.msra.mxu0 0.0
    %397 = vmatpush.msra.mxu0 0.0
    %398 = vmatpush.msra.mxu0 %v370
    %399 = vmatmul.f32.gmra.mxu0 %v381
    %v400 = vpop.f32.mrf.mxu0
    %v401 = vadd.f32 %v378, %v400
    %402 = vdwg.mxu0
    %v403 = vmax.f32 %v401, 0.0
    %s404 = scalar_lea.vmem %s5, 32
    %v405 = vld [vmem:[%s404] sm:$0xff]
    %s406 = scalar_lea.vmem %s6, 32
    %v407 = vld [vmem:[%s406] sm:$0xff]
    %409 = vset.pattern.permute.xlu0 0
    %410 = vperm.xlu0 %409, %v407
    %v411 = vpop.permute.xlu0 %410
    %v414 = vsel %vm127, %v405, 0
    %416 = vmatpush.msra.mxu0 0.0
    %417 = vmatpush.msra.mxu0 0.0
    %418 = vmatpush.msra.mxu0 0.0
    %419 = vmatpush.msra.mxu0 0.0
    %420 = vmatpush.msra.mxu0 0.0
    %421 = vmatpush.msra.mxu0 0.0
    %422 = vmatpush.msra.mxu0 0.0
    %423 = vmatpush.msra.mxu0 0.0
    %424 = vmatpush.msra.mxu0 0.0
    %425 = vmatpush.msra.mxu0 0.0
    %426 = vmatpush.msra.mxu0 0.0
    %427 = vmatpush.msra.mxu0 0.0
    %428 = vmatpush.msra.mxu0 0.0
    %429 = vmatpush.msra.mxu0 0.0
    %430 = vmatpush.msra.mxu0 0.0
    %431 = vmatpush.msra.mxu0 %v403
    %432 = vmatmul.f32.gmra.mxu0 %v414
    %v433 = vpop.f32.mrf.mxu0
    %v434 = vadd.f32 %v411, %v433
    %435 = vdwg.mxu0
    %v436 = vmax.f32 %v434, 0.0
    %v437 = vmul.f32 %v436, %v78
    %438 = vadd.xlane.f32.xlu0 %v437
    %v439 = vpop.xlane.xlu0 %438
    %v440 = vmul.f32 %v439, 0.01
    %v441 = vmul.f32 %v437, %v436
    %442 = vadd.xlane.f32.xlu0 %v441
    %v443 = vpop.xlane.xlu0 %442
    %v444 = vmul.f32 %v443, 0.01
    %v445 = vmul.f32 %v440, %v440
    %v446 = vsub.f32 %v444, %v445
    %v447 = vmax.f32 %v446, 0.0
    %v448 = vsub.f32 %v436, %v440
    %v449 = vadd.f32 %v447, 1e-05
    %v450 = vrsqrt.pop %v449
    %v451 = vmul.f32 %v450, %v449
    %v452 = vmul.f32 %v451, %v450
    %v453 = vmul.f32 0.5, %v452
    %v454 = vsub.f32 1.5, %v453
    %v455 = vmul.f32 %v450, %v454
    %vm456 = vweird.f32 %v449
    %vm457 = vweird.f32 %v450
    %vm458 = vmor %vm456, %vm457
    %v459 = vsel %vm458, %v450, %v455
    %v460 = vmul.f32 %v448, %v459
    %s461 = scalar_lea.vmem [#allocation5], 32
    %v462 = vld [vmem:[%s461] sm:$0xff]
    %463 = vmatpush.msra.mxu0 %v75
    %464 = vmatpush.msra.mxu0 %v74
    %465 = vmatpush.msra.mxu0 %v73
    %466 = vmatpush.msra.mxu0 %v72
    %467 = vmatpush.msra.mxu0 %v71
    %468 = vmatpush.msra.mxu0 %v70
    %469 = vmatpush.msra.mxu0 %v69
    %470 = vmatpush.msra.mxu0 %v68
    %471 = vmatpush.msra.mxu0 %v67
    %472 = vmatpush.msra.mxu0 %v66
    %473 = vmatpush.msra.mxu0 %v65
    %474 = vmatpush.msra.mxu0 %v64
    %475 = vmatpush.msra.mxu0 %v63
    %476 = vmatpush.msra.mxu0 %v62
    %477 = vmatpush.msra.mxu0 %v61
    %478 = vmatpush.msra.mxu0 %v60
    %479 = vmatmul.f32.gmra.mxu0 %v460
    %v480 = vpop.f32.mrf.mxu0
    %v481 = vadd.f32 0.0, %v480
    %482 = vdwg.mxu0
    %s483 = scalar_lea.vmem [#allocation5], 40
    %v484 = vld [vmem:[%s483] sm:$0xff]
    %v486 = vsel %vm127, %v484, 0
    %488 = vmatpush.msra.mxu0 0.0
    %489 = vmatpush.msra.mxu0 0.0
    %490 = vmatpush.msra.mxu0 0.0
    %491 = vmatpush.msra.mxu0 0.0
    %492 = vmatpush.msra.mxu0 0.0
    %493 = vmatpush.msra.mxu0 0.0
    %494 = vmatpush.msra.mxu0 0.0
    %495 = vmatpush.msra.mxu0 0.0
    %496 = vmatpush.msra.mxu0 0.0
    %497 = vmatpush.msra.mxu0 0.0
    %498 = vmatpush.msra.mxu0 0.0
    %499 = vmatpush.msra.mxu0 0.0
    %500 = vmatpush.msra.mxu0 0.0
    %501 = vmatpush.msra.mxu0 0.0
    %502 = vmatpush.msra.mxu0 0.0
    %503 = vmatpush.msra.mxu0 %v481
    %504 = vmatmul.f32.gmra.mxu0 %v486
    %v505 = vpop.f32.mrf.mxu0
    %v506 = vadd.f32 0.0, %v505
    %507 = vdwg.mxu0
    %v509 = vsel %vm127, %v462, 0
    %511 = vmatpush.msra.mxu0 0.0
    %512 = vmatpush.msra.mxu0 0.0
    %513 = vmatpush.msra.mxu0 0.0
    %514 = vmatpush.msra.mxu0 0.0
    %515 = vmatpush.msra.mxu0 0.0
    %516 = vmatpush.msra.mxu0 0.0
    %517 = vmatpush.msra.mxu0 0.0
    %518 = vmatpush.msra.mxu0 0.0
    %519 = vmatpush.msra.mxu0 0.0
    %520 = vmatpush.msra.mxu0 0.0
    %521 = vmatpush.msra.mxu0 0.0
    %522 = vmatpush.msra.mxu0 0.0
    %523 = vmatpush.msra.mxu0 0.0
    %524 = vmatpush.msra.mxu0 0.0
    %525 = vmatpush.msra.mxu0 0.0
    %526 = vmatpush.msra.mxu0 %v460
    %527 = vmatmul.f32.gmra.mxu0 %v509
    %v528 = vpop.f32.mrf.mxu0
    %v529 = vadd.f32 %v506, %v528
    %530 = vdwg.mxu0
    %531 = vmatpush.msra.mxu0 %v75
    %532 = vmatpush.msra.mxu0 %v74
    %533 = vmatpush.msra.mxu0 %v73
    %534 = vmatpush.msra.mxu0 %v72
    %535 = vmatpush.msra.mxu0 %v71
    %536 = vmatpush.msra.mxu0 %v70
    %537 = vmatpush.msra.mxu0 %v69
    %538 = vmatpush.msra.mxu0 %v68
    %539 = vmatpush.msra.mxu0 %v67
    %540 = vmatpush.msra.mxu0 %v66
    %541 = vmatpush.msra.mxu0 %v65
    %542 = vmatpush.msra.mxu0 %v64
    %543 = vmatpush.msra.mxu0 %v63
    %544 = vmatpush.msra.mxu0 %v62
    %545 = vmatpush.msra.mxu0 %v61
    %546 = vmatpush.msra.mxu0 %v60
    %547 = vmatmul.f32.gmra.mxu0 %v481
    %v548 = vpop.f32.mrf.mxu0
    %v549 = vadd.f32 0.0, %v548
    %550 = vdwg.mxu0
    %s551 = scalar_lea.vmem [#allocation5], 48
    %v552 = vld [vmem:[%s551] sm:$0xff]
    %v554 = vsel %vm127, %v552, 0
    %556 = vmatpush.msra.mxu0 0.0
    %557 = vmatpush.msra.mxu0 0.0
    %558 = vmatpush.msra.mxu0 0.0
    %559 = vmatpush.msra.mxu0 0.0
    %560 = vmatpush.msra.mxu0 0.0
    %561 = vmatpush.msra.mxu0 0.0
    %562 = vmatpush.msra.mxu0 0.0
    %563 = vmatpush.msra.mxu0 0.0
    %564 = vmatpush.msra.mxu0 0.0
    %565 = vmatpush.msra.mxu0 0.0
    %566 = vmatpush.msra.mxu0 0.0
    %567 = vmatpush.msra.mxu0 0.0
    %568 = vmatpush.msra.mxu0 0.0
    %569 = vmatpush.msra.mxu0 0.0
    %570 = vmatpush.msra.mxu0 0.0
    %571 = vmatpush.msra.mxu0 %v549
    %572 = vmatmul.f32.gmra.mxu0 %v554
    %v573 = vpop.f32.mrf.mxu0
    %v574 = vadd.f32 0.0, %v573
    %575 = vdwg.mxu0
    %v576 = vadd.f32 %v529, %v574
    %577 = vmatpush.msra.mxu0 %v75
    %578 = vmatpush.msra.mxu0 %v74
    %579 = vmatpush.msra.mxu0 %v73
    %580 = vmatpush.msra.mxu0 %v72
    %581 = vmatpush.msra.mxu0 %v71
    %582 = vmatpush.msra.mxu0 %v70
    %583 = vmatpush.msra.mxu0 %v69
    %584 = vmatpush.msra.mxu0 %v68
    %585 = vmatpush.msra.mxu0 %v67
    %586 = vmatpush.msra.mxu0 %v66
    %587 = vmatpush.msra.mxu0 %v65
    %588 = vmatpush.msra.mxu0 %v64
    %589 = vmatpush.msra.mxu0 %v63
    %590 = vmatpush.msra.mxu0 %v62
    %591 = vmatpush.msra.mxu0 %v61
    %592 = vmatpush.msra.mxu0 %v60
    %593 = vmatmul.f32.gmra.mxu0 %v549
    %v594 = vpop.f32.mrf.mxu0
    %v595 = vadd.f32 0.0, %v594
    %596 = vdwg.mxu0
    %s597 = scalar_lea.vmem [#allocation5], 56
    %v598 = vld [vmem:[%s597] sm:$0xff]
    %v600 = vsel %vm127, %v598, 0
    %602 = vmatpush.msra.mxu0 0.0
    %603 = vmatpush.msra.mxu0 0.0
    %604 = vmatpush.msra.mxu0 0.0
    %605 = vmatpush.msra.mxu0 0.0
    %606 = vmatpush.msra.mxu0 0.0
    %607 = vmatpush.msra.mxu0 0.0
    %608 = vmatpush.msra.mxu0 0.0
    %609 = vmatpush.msra.mxu0 0.0
    %610 = vmatpush.msra.mxu0 0.0
    %611 = vmatpush.msra.mxu0 0.0
    %612 = vmatpush.msra.mxu0 0.0
    %613 = vmatpush.msra.mxu0 0.0
    %614 = vmatpush.msra.mxu0 0.0
    %615 = vmatpush.msra.mxu0 0.0
    %616 = vmatpush.msra.mxu0 0.0
    %617 = vmatpush.msra.mxu0 %v595
    %618 = vmatmul.f32.gmra.mxu0 %v600
    %v619 = vpop.f32.mrf.mxu0
    %v620 = vadd.f32 0.0, %v619
    %621 = vdwg.mxu0
    %v622 = vadd.f32 %v576, %v620
    %s623 = scalar_lea.vmem %s4, 8
    %v624 = vld [vmem:[%s623] sm:$0xff]
    %626 = vset.pattern.permute.xlu0 0
    %627 = vperm.xlu0 %626, %v624
    %v628 = vpop.permute.xlu0 %627
    %v630 = vadd.f32 %v622, %v628
    %v631 = vmax.f32 %v630, 0.0
    %s632 = scalar_lea.vmem %s5, 40
    %v633 = vld [vmem:[%s632] sm:$0xff]
    %s634 = scalar_lea.vmem %s6, 40
    %v635 = vld [vmem:[%s634] sm:$0xff]
    %637 = vset.pattern.permute.xlu0 0
    %638 = vperm.xlu0 %637, %v635
    %v639 = vpop.permute.xlu0 %638
    %v642 = vsel %vm127, %v633, 0
    %644 = vmatpush.msra.mxu0 0.0
    %645 = vmatpush.msra.mxu0 0.0
    %646 = vmatpush.msra.mxu0 0.0
    %647 = vmatpush.msra.mxu0 0.0
    %648 = vmatpush.msra.mxu0 0.0
    %649 = vmatpush.msra.mxu0 0.0
    %650 = vmatpush.msra.mxu0 0.0
    %651 = vmatpush.msra.mxu0 0.0
    %652 = vmatpush.msra.mxu0 0.0
    %653 = vmatpush.msra.mxu0 0.0
    %654 = vmatpush.msra.mxu0 0.0
    %655 = vmatpush.msra.mxu0 0.0
    %656 = vmatpush.msra.mxu0 0.0
    %657 = vmatpush.msra.mxu0 0.0
    %658 = vmatpush.msra.mxu0 0.0
    %659 = vmatpush.msra.mxu0 %v631
    %660 = vmatmul.f32.gmra.mxu0 %v642
    %v661 = vpop.f32.mrf.mxu0
    %v662 = vadd.f32 %v639, %v661
    %663 = vdwg.mxu0
    %v664 = vmax.f32 %v662, 0.0
    %s665 = scalar_lea.vmem %s5, 48
    %v666 = vld [vmem:[%s665] sm:$0xff]
    %s667 = scalar_lea.vmem %s6, 48
    %v668 = vld [vmem:[%s667] sm:$0xff]
    %670 = vset.pattern.permute.xlu0 0
    %671 = vperm.xlu0 %670, %v668
    %v672 = vpop.permute.xlu0 %671
    %v675 = vsel %vm127, %v666, 0
    %677 = vmatpush.msra.mxu0 0.0
    %678 = vmatpush.msra.mxu0 0.0
    %679 = vmatpush.msra.mxu0 0.0
    %680 = vmatpush.msra.mxu0 0.0
    %681 = vmatpush.msra.mxu0 0.0
    %682 = vmatpush.msra.mxu0 0.0
    %683 = vmatpush.msra.mxu0 0.0
    %684 = vmatpush.msra.mxu0 0.0
    %685 = vmatpush.msra.mxu0 0.0
    %686 = vmatpush.msra.mxu0 0.0
    %687 = vmatpush.msra.mxu0 0.0
    %688 = vmatpush.msra.mxu0 0.0
    %689 = vmatpush.msra.mxu0 0.0
    %690 = vmatpush.msra.mxu0 0.0
    %691 = vmatpush.msra.mxu0 0.0
    %692 = vmatpush.msra.mxu0 %v664
    %693 = vmatmul.f32.gmra.mxu0 %v675
    %v694 = vpop.f32.mrf.mxu0
    %v695 = vadd.f32 %v672, %v694
    %696 = vdwg.mxu0
    %v697 = vmax.f32 %v695, 0.0
    %s698 = scalar_lea.vmem %s5, 56
    %v699 = vld [vmem:[%s698] sm:$0xff]
    %s700 = scalar_lea.vmem %s6, 56
    %v701 = vld [vmem:[%s700] sm:$0xff]
    %703 = vset.pattern.permute.xlu0 0
    %704 = vperm.xlu0 %703, %v701
    %v705 = vpop.permute.xlu0 %704
    %v708 = vsel %vm127, %v699, 0
    %710 = vmatpush.msra.mxu0 0.0
    %711 = vmatpush.msra.mxu0 0.0
    %712 = vmatpush.msra.mxu0 0.0
    %713 = vmatpush.msra.mxu0 0.0
    %714 = vmatpush.msra.mxu0 0.0
    %715 = vmatpush.msra.mxu0 0.0
    %716 = vmatpush.msra.mxu0 0.0
    %717 = vmatpush.msra.mxu0 0.0
    %718 = vmatpush.msra.mxu0 0.0
    %719 = vmatpush.msra.mxu0 0.0
    %720 = vmatpush.msra.mxu0 0.0
    %721 = vmatpush.msra.mxu0 0.0
    %722 = vmatpush.msra.mxu0 0.0
    %723 = vmatpush.msra.mxu0 0.0
    %724 = vmatpush.msra.mxu0 0.0
    %725 = vmatpush.msra.mxu0 %v697
    %726 = vmatmul.f32.gmra.mxu0 %v708
    %v727 = vpop.f32.mrf.mxu0
    %v728 = vadd.f32 %v705, %v727
    %729 = vdwg.mxu0
    %v730 = vmax.f32 %v728, 0.0
    %s731 = scalar_lea.vmem %s5, 64
    %v732 = vld [vmem:[%s731] sm:$0xff]
    %s733 = scalar_lea.vmem %s6, 64
    %v734 = vld [vmem:[%s733] sm:$0xff]
    %736 = vset.pattern.permute.xlu0 0
    %737 = vperm.xlu0 %736, %v734
    %v738 = vpop.permute.xlu0 %737
    %v741 = vsel %vm127, %v732, 0
    %743 = vmatpush.msra.mxu0 0.0
    %744 = vmatpush.msra.mxu0 0.0
    %745 = vmatpush.msra.mxu0 0.0
    %746 = vmatpush.msra.mxu0 0.0
    %747 = vmatpush.msra.mxu0 0.0
    %748 = vmatpush.msra.mxu0 0.0
    %749 = vmatpush.msra.mxu0 0.0
    %750 = vmatpush.msra.mxu0 0.0
    %751 = vmatpush.msra.mxu0 0.0
    %752 = vmatpush.msra.mxu0 0.0
    %753 = vmatpush.msra.mxu0 0.0
    %754 = vmatpush.msra.mxu0 0.0
    %755 = vmatpush.msra.mxu0 0.0
    %756 = vmatpush.msra.mxu0 0.0
    %757 = vmatpush.msra.mxu0 0.0
    %758 = vmatpush.msra.mxu0 %v730
    %759 = vmatmul.f32.gmra.mxu0 %v741
    %v760 = vpop.f32.mrf.mxu0
    %v761 = vadd.f32 %v738, %v760
    %762 = vdwg.mxu0
    %v763 = vmax.f32 %v761, 0.0
    %s764 = scalar_lea.vmem %s5, 72
    %v765 = vld [vmem:[%s764] sm:$0xff]
    %s766 = scalar_lea.vmem %s6, 72
    %v767 = vld [vmem:[%s766] sm:$0xff]
    %769 = vset.pattern.permute.xlu0 0
    %770 = vperm.xlu0 %769, %v767
    %v771 = vpop.permute.xlu0 %770
    %v774 = vsel %vm127, %v765, 0
    %776 = vmatpush.msra.mxu0 0.0
    %777 = vmatpush.msra.mxu0 0.0
    %778 = vmatpush.msra.mxu0 0.0
    %779 = vmatpush.msra.mxu0 0.0
    %780 = vmatpush.msra.mxu0 0.0
    %781 = vmatpush.msra.mxu0 0.0
    %782 = vmatpush.msra.mxu0 0.0
    %783 = vmatpush.msra.mxu0 0.0
    %784 = vmatpush.msra.mxu0 0.0
    %785 = vmatpush.msra.mxu0 0.0
    %786 = vmatpush.msra.mxu0 0.0
    %787 = vmatpush.msra.mxu0 0.0
    %788 = vmatpush.msra.mxu0 0.0
    %789 = vmatpush.msra.mxu0 0.0
    %790 = vmatpush.msra.mxu0 0.0
    %791 = vmatpush.msra.mxu0 %v763
    %792 = vmatmul.f32.gmra.mxu0 %v774
    %v793 = vpop.f32.mrf.mxu0
    %v794 = vadd.f32 %v771, %v793
    %795 = vdwg.mxu0
    %v796 = vmax.f32 %v794, 0.0
    %v797 = vmul.f32 %v796, %v78
    %798 = vadd.xlane.f32.xlu0 %v797
    %v799 = vpop.xlane.xlu0 %798
    %v800 = vmul.f32 %v799, 0.01
    %v801 = vmul.f32 %v797, %v796
    %802 = vadd.xlane.f32.xlu0 %v801
    %v803 = vpop.xlane.xlu0 %802
    %v804 = vmul.f32 %v803, 0.01
    %v805 = vmul.f32 %v800, %v800
    %v806 = vsub.f32 %v804, %v805
    %v807 = vmax.f32 %v806, 0.0
    %v808 = vsub.f32 %v796, %v800
    %v809 = vadd.f32 %v807, 1e-05
    %v810 = vrsqrt.pop %v809
    %v811 = vmul.f32 %v810, %v809
    %v812 = vmul.f32 %v811, %v810
    %v813 = vmul.f32 0.5, %v812
    %v814 = vsub.f32 1.5, %v813
    %v815 = vmul.f32 %v810, %v814
    %vm816 = vweird.f32 %v809
    %vm817 = vweird.f32 %v810
    %vm818 = vmor %vm816, %vm817
    %v819 = vsel %vm818, %v810, %v815
    %v820 = vmul.f32 %v808, %v819
    %s821 = scalar_lea.vmem [#allocation5], 64
    %v822 = vld [vmem:[%s821] sm:$0xff]
    %823 = vmatpush.msra.mxu0 %v75
    %824 = vmatpush.msra.mxu0 %v74
    %825 = vmatpush.msra.mxu0 %v73
    %826 = vmatpush.msra.mxu0 %v72
    %827 = vmatpush.msra.mxu0 %v71
    %828 = vmatpush.msra.mxu0 %v70
    %829 = vmatpush.msra.mxu0 %v69
    %830 = vmatpush.msra.mxu0 %v68
    %831 = vmatpush.msra.mxu0 %v67
    %832 = vmatpush.msra.mxu0 %v66
    %833 = vmatpush.msra.mxu0 %v65
    %834 = vmatpush.msra.mxu0 %v64
    %835 = vmatpush.msra.mxu0 %v63
    %836 = vmatpush.msra.mxu0 %v62
    %837 = vmatpush.msra.mxu0 %v61
    %838 = vmatpush.msra.mxu0 %v60
    %839 = vmatmul.f32.gmra.mxu0 %v820
    %v840 = vpop.f32.mrf.mxu0
    %v841 = vadd.f32 0.0, %v840
    %842 = vdwg.mxu0
    %s843 = scalar_lea.vmem [#allocation5], 72
    %v844 = vld [vmem:[%s843] sm:$0xff]
    %v846 = vsel %vm127, %v844, 0
    %848 = vmatpush.msra.mxu0 0.0
    %849 = vmatpush.msra.mxu0 0.0
    %850 = vmatpush.msra.mxu0 0.0
    %851 = vmatpush.msra.mxu0 0.0
    %852 = vmatpush.msra.mxu0 0.0
    %853 = vmatpush.msra.mxu0 0.0
    %854 = vmatpush.msra.mxu0 0.0
    %855 = vmatpush.msra.mxu0 0.0
    %856 = vmatpush.msra.mxu0 0.0
    %857 = vmatpush.msra.mxu0 0.0
    %858 = vmatpush.msra.mxu0 0.0
    %859 = vmatpush.msra.mxu0 0.0
    %860 = vmatpush.msra.mxu0 0.0
    %861 = vmatpush.msra.mxu0 0.0
    %862 = vmatpush.msra.mxu0 0.0
    %863 = vmatpush.msra.mxu0 %v841
    %864 = vmatmul.f32.gmra.mxu0 %v846
    %v865 = vpop.f32.mrf.mxu0
    %v866 = vadd.f32 0.0, %v865
    %867 = vdwg.mxu0
    %v869 = vsel %vm127, %v822, 0
    %871 = vmatpush.msra.mxu0 0.0
    %872 = vmatpush.msra.mxu0 0.0
    %873 = vmatpush.msra.mxu0 0.0
    %874 = vmatpush.msra.mxu0 0.0
    %875 = vmatpush.msra.mxu0 0.0
    %876 = vmatpush.msra.mxu0 0.0
    %877 = vmatpush.msra.mxu0 0.0
    %878 = vmatpush.msra.mxu0 0.0
    %879 = vmatpush.msra.mxu0 0.0
    %880 = vmatpush.msra.mxu0 0.0
    %881 = vmatpush.msra.mxu0 0.0
    %882 = vmatpush.msra.mxu0 0.0
    %883 = vmatpush.msra.mxu0 0.0
    %884 = vmatpush.msra.mxu0 0.0
    %885 = vmatpush.msra.mxu0 0.0
    %886 = vmatpush.msra.mxu0 %v820
    %887 = vmatmul.f32.gmra.mxu0 %v869
    %v888 = vpop.f32.mrf.mxu0
    %v889 = vadd.f32 %v866, %v888
    %890 = vdwg.mxu0
    %891 = vmatpush.msra.mxu0 %v75
    %892 = vmatpush.msra.mxu0 %v74
    %893 = vmatpush.msra.mxu0 %v73
    %894 = vmatpush.msra.mxu0 %v72
    %895 = vmatpush.msra.mxu0 %v71
    %896 = vmatpush.msra.mxu0 %v70
    %897 = vmatpush.msra.mxu0 %v69
    %898 = vmatpush.msra.mxu0 %v68
    %899 = vmatpush.msra.mxu0 %v67
    %900 = vmatpush.msra.mxu0 %v66
    %901 = vmatpush.msra.mxu0 %v65
    %902 = vmatpush.msra.mxu0 %v64
    %903 = vmatpush.msra.mxu0 %v63
    %904 = vmatpush.msra.mxu0 %v62
    %905 = vmatpush.msra.mxu0 %v61
    %906 = vmatpush.msra.mxu0 %v60
    %907 = vmatmul.f32.gmra.mxu0 %v841
    %v908 = vpop.f32.mrf.mxu0
    %v909 = vadd.f32 0.0, %v908
    %910 = vdwg.mxu0
    %s911 = scalar_lea.vmem [#allocation5], 80
    %v912 = vld [vmem:[%s911] sm:$0xff]
    %v914 = vsel %vm127, %v912, 0
    %916 = vmatpush.msra.mxu0 0.0
    %917 = vmatpush.msra.mxu0 0.0
    %918 = vmatpush.msra.mxu0 0.0
    %919 = vmatpush.msra.mxu0 0.0
    %920 = vmatpush.msra.mxu0 0.0
    %921 = vmatpush.msra.mxu0 0.0
    %922 = vmatpush.msra.mxu0 0.0
    %923 = vmatpush.msra.mxu0 0.0
    %924 = vmatpush.msra.mxu0 0.0
    %925 = vmatpush.msra.mxu0 0.0
    %926 = vmatpush.msra.mxu0 0.0
    %927 = vmatpush.msra.mxu0 0.0
    %928 = vmatpush.msra.mxu0 0.0
    %929 = vmatpush.msra.mxu0 0.0
    %930 = vmatpush.msra.mxu0 0.0
    %931 = vmatpush.msra.mxu0 %v909
    %932 = vmatmul.f32.gmra.mxu0 %v914
    %v933 = vpop.f32.mrf.mxu0
    %v934 = vadd.f32 0.0, %v933
    %935 = vdwg.mxu0
    %v936 = vadd.f32 %v889, %v934
    %937 = vmatpush.msra.mxu0 %v75
    %938 = vmatpush.msra.mxu0 %v74
    %939 = vmatpush.msra.mxu0 %v73
    %940 = vmatpush.msra.mxu0 %v72
    %941 = vmatpush.msra.mxu0 %v71
    %942 = vmatpush.msra.mxu0 %v70
    %943 = vmatpush.msra.mxu0 %v69
    %944 = vmatpush.msra.mxu0 %v68
    %945 = vmatpush.msra.mxu0 %v67
    %946 = vmatpush.msra.mxu0 %v66
    %947 = vmatpush.msra.mxu0 %v65
    %948 = vmatpush.msra.mxu0 %v64
    %949 = vmatpush.msra.mxu0 %v63
    %950 = vmatpush.msra.mxu0 %v62
    %951 = vmatpush.msra.mxu0 %v61
    %952 = vmatpush.msra.mxu0 %v60
    %953 = vmatmul.f32.gmra.mxu0 %v909
    %v954 = vpop.f32.mrf.mxu0
    %v955 = vadd.f32 0.0, %v954
    %956 = vdwg.mxu0
    %s957 = scalar_lea.vmem [#allocation5], 88
    %v958 = vld [vmem:[%s957] sm:$0xff]
    %v960 = vsel %vm127, %v958, 0
    %962 = vmatpush.msra.mxu0 0.0
    %963 = vmatpush.msra.mxu0 0.0
    %964 = vmatpush.msra.mxu0 0.0
    %965 = vmatpush.msra.mxu0 0.0
    %966 = vmatpush.msra.mxu0 0.0
    %967 = vmatpush.msra.mxu0 0.0
    %968 = vmatpush.msra.mxu0 0.0
    %969 = vmatpush.msra.mxu0 0.0
    %970 = vmatpush.msra.mxu0 0.0
    %971 = vmatpush.msra.mxu0 0.0
    %972 = vmatpush.msra.mxu0 0.0
    %973 = vmatpush.msra.mxu0 0.0
    %974 = vmatpush.msra.mxu0 0.0
    %975 = vmatpush.msra.mxu0 0.0
    %976 = vmatpush.msra.mxu0 0.0
    %977 = vmatpush.msra.mxu0 %v955
    %978 = vmatmul.f32.gmra.mxu0 %v960
    %v979 = vpop.f32.mrf.mxu0
    %v980 = vadd.f32 0.0, %v979
    %981 = vdwg.mxu0
    %v982 = vadd.f32 %v936, %v980
    %s983 = scalar_lea.vmem %s4, 16
    %v984 = vld [vmem:[%s983] sm:$0xff]
    %986 = vset.pattern.permute.xlu0 0
    %987 = vperm.xlu0 %986, %v984
    %v988 = vpop.permute.xlu0 %987
    %v990 = vadd.f32 %v982, %v988
    %v991 = vmax.f32 %v990, 0.0
    %s992 = scalar_lea.vmem %s5, 80
    %v993 = vld [vmem:[%s992] sm:$0xff]
    %s994 = scalar_lea.vmem %s6, 80
    %v995 = vld [vmem:[%s994] sm:$0xff]
    %997 = vset.pattern.permute.xlu0 0
    %998 = vperm.xlu0 %997, %v995
    %v999 = vpop.permute.xlu0 %998
    %v1002 = vsel %vm127, %v993, 0
    %1004 = vmatpush.msra.mxu0 0.0
    %1005 = vmatpush.msra.mxu0 0.0
    %1006 = vmatpush.msra.mxu0 0.0
    %1007 = vmatpush.msra.mxu0 0.0
    %1008 = vmatpush.msra.mxu0 0.0
    %1009 = vmatpush.msra.mxu0 0.0
    %1010 = vmatpush.msra.mxu0 0.0
    %1011 = vmatpush.msra.mxu0 0.0
    %1012 = vmatpush.msra.mxu0 0.0
    %1013 = vmatpush.msra.mxu0 0.0
    %1014 = vmatpush.msra.mxu0 0.0
    %1015 = vmatpush.msra.mxu0 0.0
    %1016 = vmatpush.msra.mxu0 0.0
    %1017 = vmatpush.msra.mxu0 0.0
    %1018 = vmatpush.msra.mxu0 0.0
    %1019 = vmatpush.msra.mxu0 %v991
    %1020 = vmatmul.f32.gmra.mxu0 %v1002
    %v1021 = vpop.f32.mrf.mxu0
    %v1022 = vadd.f32 %v999, %v1021
    %1023 = vdwg.mxu0
    %v1024 = vmax.f32 %v1022, 0.0
    %s1025 = scalar_lea.vmem %s5, 88
    %v1026 = vld [vmem:[%s1025] sm:$0xff]
    %s1027 = scalar_lea.vmem %s6, 88
    %v1028 = vld [vmem:[%s1027] sm:$0xff]
    %1030 = vset.pattern.permute.xlu0 0
    %1031 = vperm.xlu0 %1030, %v1028
    %v1032 = vpop.permute.xlu0 %1031
    %v1035 = vsel %vm127, %v1026, 0
    %1037 = vmatpush.msra.mxu0 0.0
    %1038 = vmatpush.msra.mxu0 0.0
    %1039 = vmatpush.msra.mxu0 0.0
    %1040 = vmatpush.msra.mxu0 0.0
    %1041 = vmatpush.msra.mxu0 0.0
    %1042 = vmatpush.msra.mxu0 0.0
    %1043 = vmatpush.msra.mxu0 0.0
    %1044 = vmatpush.msra.mxu0 0.0
    %1045 = vmatpush.msra.mxu0 0.0
    %1046 = vmatpush.msra.mxu0 0.0
    %1047 = vmatpush.msra.mxu0 0.0
    %1048 = vmatpush.msra.mxu0 0.0
    %1049 = vmatpush.msra.mxu0 0.0
    %1050 = vmatpush.msra.mxu0 0.0
    %1051 = vmatpush.msra.mxu0 0.0
    %1052 = vmatpush.msra.mxu0 %v1024
    %1053 = vmatmul.f32.gmra.mxu0 %v1035
    %v1054 = vpop.f32.mrf.mxu0
    %v1055 = vadd.f32 %v1032, %v1054
    %1056 = vdwg.mxu0
    %v1057 = vmax.f32 %v1055, 0.0
    %s1058 = scalar_lea.vmem %s5, 96
    %v1059 = vld [vmem:[%s1058] sm:$0xff]
    %s1060 = scalar_lea.vmem %s6, 96
    %v1061 = vld [vmem:[%s1060] sm:$0xff]
    %1063 = vset.pattern.permute.xlu0 0
    %1064 = vperm.xlu0 %1063, %v1061
    %v1065 = vpop.permute.xlu0 %1064
    %v1068 = vsel %vm127, %v1059, 0
    %1070 = vmatpush.msra.mxu0 0.0
    %1071 = vmatpush.msra.mxu0 0.0
    %1072 = vmatpush.msra.mxu0 0.0
    %1073 = vmatpush.msra.mxu0 0.0
    %1074 = vmatpush.msra.mxu0 0.0
    %1075 = vmatpush.msra.mxu0 0.0
    %1076 = vmatpush.msra.mxu0 0.0
    %1077 = vmatpush.msra.mxu0 0.0
    %1078 = vmatpush.msra.mxu0 0.0
    %1079 = vmatpush.msra.mxu0 0.0
    %1080 = vmatpush.msra.mxu0 0.0
    %1081 = vmatpush.msra.mxu0 0.0
    %1082 = vmatpush.msra.mxu0 0.0
    %1083 = vmatpush.msra.mxu0 0.0
    %1084 = vmatpush.msra.mxu0 0.0
    %1085 = vmatpush.msra.mxu0 %v1057
    %1086 = vmatmul.f32.gmra.mxu0 %v1068
    %v1087 = vpop.f32.mrf.mxu0
    %v1088 = vadd.f32 %v1065, %v1087
    %1089 = vdwg.mxu0
    %v1090 = vmax.f32 %v1088, 0.0
    %s1091 = scalar_lea.vmem %s5, 104
    %v1092 = vld [vmem:[%s1091] sm:$0xff]
    %s1093 = scalar_lea.vmem %s6, 104
    %v1094 = vld [vmem:[%s1093] sm:$0xff]
    %1096 = vset.pattern.permute.xlu0 0
    %1097 = vperm.xlu0 %1096, %v1094
    %v1098 = vpop.permute.xlu0 %1097
    %v1101 = vsel %vm127, %v1092, 0
    %1103 = vmatpush.msra.mxu0 0.0
    %1104 = vmatpush.msra.mxu0 0.0
    %1105 = vmatpush.msra.mxu0 0.0
    %1106 = vmatpush.msra.mxu0 0.0
    %1107 = vmatpush.msra.mxu0 0.0
    %1108 = vmatpush.msra.mxu0 0.0
    %1109 = vmatpush.msra.mxu0 0.0
    %1110 = vmatpush.msra.mxu0 0.0
    %1111 = vmatpush.msra.mxu0 0.0
    %1112 = vmatpush.msra.mxu0 0.0
    %1113 = vmatpush.msra.mxu0 0.0
    %1114 = vmatpush.msra.mxu0 0.0
    %1115 = vmatpush.msra.mxu0 0.0
    %1116 = vmatpush.msra.mxu0 0.0
    %1117 = vmatpush.msra.mxu0 0.0
    %1118 = vmatpush.msra.mxu0 %v1090
    %1119 = vmatmul.f32.gmra.mxu0 %v1101
    %v1120 = vpop.f32.mrf.mxu0
    %v1121 = vadd.f32 %v1098, %v1120
    %1122 = vdwg.mxu0
    %v1123 = vmax.f32 %v1121, 0.0
    %s1124 = scalar_lea.vmem %s5, 112
    %v1125 = vld [vmem:[%s1124] sm:$0xff]
    %s1126 = scalar_lea.vmem %s6, 112
    %v1127 = vld [vmem:[%s1126] sm:$0xff]
    %1129 = vset.pattern.permute.xlu0 0
    %1130 = vperm.xlu0 %1129, %v1127
    %v1131 = vpop.permute.xlu0 %1130
    %v1134 = vsel %vm127, %v1125, 0
    %1136 = vmatpush.msra.mxu0 0.0
    %1137 = vmatpush.msra.mxu0 0.0
    %1138 = vmatpush.msra.mxu0 0.0
    %1139 = vmatpush.msra.mxu0 0.0
    %1140 = vmatpush.msra.mxu0 0.0
    %1141 = vmatpush.msra.mxu0 0.0
    %1142 = vmatpush.msra.mxu0 0.0
    %1143 = vmatpush.msra.mxu0 0.0
    %1144 = vmatpush.msra.mxu0 0.0
    %1145 = vmatpush.msra.mxu0 0.0
    %1146 = vmatpush.msra.mxu0 0.0
    %1147 = vmatpush.msra.mxu0 0.0
    %1148 = vmatpush.msra.mxu0 0.0
    %1149 = vmatpush.msra.mxu0 0.0
    %1150 = vmatpush.msra.mxu0 0.0
    %1151 = vmatpush.msra.mxu0 %v1123
    %1152 = vmatmul.f32.gmra.mxu0 %v1134
    %v1153 = vpop.f32.mrf.mxu0
    %v1154 = vadd.f32 %v1131, %v1153
    %1155 = vdwg.mxu0
    %v1156 = vmax.f32 %v1154, 0.0
    %v1157 = vmul.f32 %v1156, %v78
    %1158 = vadd.xlane.f32.xlu0 %v1157
    %v1159 = vpop.xlane.xlu0 %1158
    %v1160 = vmul.f32 %v1159, 0.01
    %v1161 = vmul.f32 %v1157, %v1156
    %1162 = vadd.xlane.f32.xlu0 %v1161
    %v1163 = vpop.xlane.xlu0 %1162
    %v1164 = vmul.f32 %v1163, 0.01
    %v1165 = vmul.f32 %v1160, %v1160
    %v1166 = vsub.f32 %v1164, %v1165
    %v1167 = vmax.f32 %v1166, 0.0
    %v1168 = vsub.f32 %v1156, %v1160
    %v1169 = vadd.f32 %v1167, 1e-05
    %v1170 = vrsqrt.pop %v1169
    %v1171 = vmul.f32 %v1170, %v1169
    %v1172 = vmul.f32 %v1171, %v1170
    %v1173 = vmul.f32 0.5, %v1172
    %v1174 = vsub.f32 1.5, %v1173
    %v1175 = vmul.f32 %v1170, %v1174
    %vm1176 = vweird.f32 %v1169
    %vm1177 = vweird.f32 %v1170
    %vm1178 = vmor %vm1176, %vm1177
    %v1179 = vsel %vm1178, %v1170, %v1175
    %v1180 = vmul.f32 %v1168, %v1179
    %s1181 = scalar_lea.vmem [#allocation5], 96
    %v1182 = vld [vmem:[%s1181] sm:$0xff]
    %1183 = vmatpush.msra.mxu0 %v75
    %1184 = vmatpush.msra.mxu0 %v74
    %1185 = vmatpush.msra.mxu0 %v73
    %1186 = vmatpush.msra.mxu0 %v72
    %1187 = vmatpush.msra.mxu0 %v71
    %1188 = vmatpush.msra.mxu0 %v70
    %1189 = vmatpush.msra.mxu0 %v69
    %1190 = vmatpush.msra.mxu0 %v68
    %1191 = vmatpush.msra.mxu0 %v67
    %1192 = vmatpush.msra.mxu0 %v66
    %1193 = vmatpush.msra.mxu0 %v65
    %1194 = vmatpush.msra.mxu0 %v64
    %1195 = vmatpush.msra.mxu0 %v63
    %1196 = vmatpush.msra.mxu0 %v62
    %1197 = vmatpush.msra.mxu0 %v61
    %1198 = vmatpush.msra.mxu0 %v60
    %1199 = vmatmul.f32.gmra.mxu0 %v1180
    %v1200 = vpop.f32.mrf.mxu0
    %v1201 = vadd.f32 0.0, %v1200
    %1202 = vdwg.mxu0
    %s1203 = scalar_lea.vmem [#allocation5], 104
    %v1204 = vld [vmem:[%s1203] sm:$0xff]
    %v1206 = vsel %vm127, %v1204, 0
    %1208 = vmatpush.msra.mxu0 0.0
    %1209 = vmatpush.msra.mxu0 0.0
    %1210 = vmatpush.msra.mxu0 0.0
    %1211 = vmatpush.msra.mxu0 0.0
    %1212 = vmatpush.msra.mxu0 0.0
    %1213 = vmatpush.msra.mxu0 0.0
    %1214 = vmatpush.msra.mxu0 0.0
    %1215 = vmatpush.msra.mxu0 0.0
    %1216 = vmatpush.msra.mxu0 0.0
    %1217 = vmatpush.msra.mxu0 0.0
    %1218 = vmatpush.msra.mxu0 0.0
    %1219 = vmatpush.msra.mxu0 0.0
    %1220 = vmatpush.msra.mxu0 0.0
    %1221 = vmatpush.msra.mxu0 0.0
    %1222 = vmatpush.msra.mxu0 0.0
    %1223 = vmatpush.msra.mxu0 %v1201
    %1224 = vmatmul.f32.gmra.mxu0 %v1206
    %v1225 = vpop.f32.mrf.mxu0
    %v1226 = vadd.f32 0.0, %v1225
    %1227 = vdwg.mxu0
    %v1229 = vsel %vm127, %v1182, 0
    %1231 = vmatpush.msra.mxu0 0.0
    %1232 = vmatpush.msra.mxu0 0.0
    %1233 = vmatpush.msra.mxu0 0.0
    %1234 = vmatpush.msra.mxu0 0.0
    %1235 = vmatpush.msra.mxu0 0.0
    %1236 = vmatpush.msra.mxu0 0.0
    %1237 = vmatpush.msra.mxu0 0.0
    %1238 = vmatpush.msra.mxu0 0.0
    %1239 = vmatpush.msra.mxu0 0.0
    %1240 = vmatpush.msra.mxu0 0.0
    %1241 = vmatpush.msra.mxu0 0.0
    %1242 = vmatpush.msra.mxu0 0.0
    %1243 = vmatpush.msra.mxu0 0.0
    %1244 = vmatpush.msra.mxu0 0.0
    %1245 = vmatpush.msra.mxu0 0.0
    %1246 = vmatpush.msra.mxu0 %v1180
    %1247 = vmatmul.f32.gmra.mxu0 %v1229
    %v1248 = vpop.f32.mrf.mxu0
    %v1249 = vadd.f32 %v1226, %v1248
    %1250 = vdwg.mxu0
    %1251 = vmatpush.msra.mxu0 %v75
    %1252 = vmatpush.msra.mxu0 %v74
    %1253 = vmatpush.msra.mxu0 %v73
    %1254 = vmatpush.msra.mxu0 %v72
    %1255 = vmatpush.msra.mxu0 %v71
    %1256 = vmatpush.msra.mxu0 %v70
    %1257 = vmatpush.msra.mxu0 %v69
    %1258 = vmatpush.msra.mxu0 %v68
    %1259 = vmatpush.msra.mxu0 %v67
    %1260 = vmatpush.msra.mxu0 %v66
    %1261 = vmatpush.msra.mxu0 %v65
    %1262 = vmatpush.msra.mxu0 %v64
    %1263 = vmatpush.msra.mxu0 %v63
    %1264 = vmatpush.msra.mxu0 %v62
    %1265 = vmatpush.msra.mxu0 %v61
    %1266 = vmatpush.msra.mxu0 %v60
    %1267 = vmatmul.f32.gmra.mxu0 %v1201
    %v1268 = vpop.f32.mrf.mxu0
    %v1269 = vadd.f32 0.0, %v1268
    %1270 = vdwg.mxu0
    %s1271 = scalar_lea.vmem [#allocation5], 112
    %v1272 = vld [vmem:[%s1271] sm:$0xff]
    %v1274 = vsel %vm127, %v1272, 0
    %1276 = vmatpush.msra.mxu0 0.0
    %1277 = vmatpush.msra.mxu0 0.0
    %1278 = vmatpush.msra.mxu0 0.0
    %1279 = vmatpush.msra.mxu0 0.0
    %1280 = vmatpush.msra.mxu0 0.0
    %1281 = vmatpush.msra.mxu0 0.0
    %1282 = vmatpush.msra.mxu0 0.0
    %1283 = vmatpush.msra.mxu0 0.0
    %1284 = vmatpush.msra.mxu0 0.0
    %1285 = vmatpush.msra.mxu0 0.0
    %1286 = vmatpush.msra.mxu0 0.0
    %1287 = vmatpush.msra.mxu0 0.0
    %1288 = vmatpush.msra.mxu0 0.0
    %1289 = vmatpush.msra.mxu0 0.0
    %1290 = vmatpush.msra.mxu0 0.0
    %1291 = vmatpush.msra.mxu0 %v1269
    %1292 = vmatmul.f32.gmra.mxu0 %v1274
    %v1293 = vpop.f32.mrf.mxu0
    %v1294 = vadd.f32 0.0, %v1293
    %1295 = vdwg.mxu0
    %v1296 = vadd.f32 %v1249, %v1294
    %1297 = vmatpush.msra.mxu0 %v75
    %1298 = vmatpush.msra.mxu0 %v74
    %1299 = vmatpush.msra.mxu0 %v73
    %1300 = vmatpush.msra.mxu0 %v72
    %1301 = vmatpush.msra.mxu0 %v71
    %1302 = vmatpush.msra.mxu0 %v70
    %1303 = vmatpush.msra.mxu0 %v69
    %1304 = vmatpush.msra.mxu0 %v68
    %1305 = vmatpush.msra.mxu0 %v67
    %1306 = vmatpush.msra.mxu0 %v66
    %1307 = vmatpush.msra.mxu0 %v65
    %1308 = vmatpush.msra.mxu0 %v64
    %1309 = vmatpush.msra.mxu0 %v63
    %1310 = vmatpush.msra.mxu0 %v62
    %1311 = vmatpush.msra.mxu0 %v61
    %1312 = vmatpush.msra.mxu0 %v60
    %1313 = vmatmul.f32.gmra.mxu0 %v1269
    %v1314 = vpop.f32.mrf.mxu0
    %v1315 = vadd.f32 0.0, %v1314
    %1316 = vdwg.mxu0
    %s1317 = scalar_lea.vmem [#allocation5], 120
    %v1318 = vld [vmem:[%s1317] sm:$0xff]
    %v1320 = vsel %vm127, %v1318, 0
    %1322 = vmatpush.msra.mxu0 0.0
    %1323 = vmatpush.msra.mxu0 0.0
    %1324 = vmatpush.msra.mxu0 0.0
    %1325 = vmatpush.msra.mxu0 0.0
    %1326 = vmatpush.msra.mxu0 0.0
    %1327 = vmatpush.msra.mxu0 0.0
    %1328 = vmatpush.msra.mxu0 0.0
    %1329 = vmatpush.msra.mxu0 0.0
    %1330 = vmatpush.msra.mxu0 0.0
    %1331 = vmatpush.msra.mxu0 0.0
    %1332 = vmatpush.msra.mxu0 0.0
    %1333 = vmatpush.msra.mxu0 0.0
    %1334 = vmatpush.msra.mxu0 0.0
    %1335 = vmatpush.msra.mxu0 0.0
    %1336 = vmatpush.msra.mxu0 0.0
    %1337 = vmatpush.msra.mxu0 %v1315
    %1338 = vmatmul.f32.gmra.mxu0 %v1320
    %v1339 = vpop.f32.mrf.mxu0
    %v1340 = vadd.f32 0.0, %v1339
    %1341 = vdwg.mxu0
    %v1342 = vadd.f32 %v1296, %v1340
    %s1343 = scalar_lea.vmem %s4, 24
    %v1344 = vld [vmem:[%s1343] sm:$0xff]
    %1346 = vset.pattern.permute.xlu0 0
    %1347 = vperm.xlu0 %1346, %v1344
    %v1348 = vpop.permute.xlu0 %1347
    %v1350 = vadd.f32 %v1342, %v1348
    %v1351 = vmax.f32 %v1350, 0.0
    %s1352 = scalar_lea.vmem %s5, 120
    %v1353 = vld [vmem:[%s1352] sm:$0xff]
    %s1354 = scalar_lea.vmem %s6, 120
    %v1355 = vld [vmem:[%s1354] sm:$0xff]
    %1357 = vset.pattern.permute.xlu0 0
    %1358 = vperm.xlu0 %1357, %v1355
    %v1359 = vpop.permute.xlu0 %1358
    %v1362 = vsel %vm127, %v1353, 0
    %1364 = vmatpush.msra.mxu0 0.0
    %1365 = vmatpush.msra.mxu0 0.0
    %1366 = vmatpush.msra.mxu0 0.0
    %1367 = vmatpush.msra.mxu0 0.0
    %1368 = vmatpush.msra.mxu0 0.0
    %1369 = vmatpush.msra.mxu0 0.0
    %1370 = vmatpush.msra.mxu0 0.0
    %1371 = vmatpush.msra.mxu0 0.0
    %1372 = vmatpush.msra.mxu0 0.0
    %1373 = vmatpush.msra.mxu0 0.0
    %1374 = vmatpush.msra.mxu0 0.0
    %1375 = vmatpush.msra.mxu0 0.0
    %1376 = vmatpush.msra.mxu0 0.0
    %1377 = vmatpush.msra.mxu0 0.0
    %1378 = vmatpush.msra.mxu0 0.0
    %1379 = vmatpush.msra.mxu0 %v1351
    %1380 = vmatmul.f32.gmra.mxu0 %v1362
    %v1381 = vpop.f32.mrf.mxu0
    %v1382 = vadd.f32 %v1359, %v1381
    %1383 = vdwg.mxu0
    %v1384 = vmax.f32 %v1382, 0.0
    %s1385 = scalar_lea.vmem %s5, 128
    %v1386 = vld [vmem:[%s1385] sm:$0xff]
    %s1387 = scalar_lea.vmem %s6, 128
    %v1388 = vld [vmem:[%s1387] sm:$0xff]
    %1390 = vset.pattern.permute.xlu0 0
    %1391 = vperm.xlu0 %1390, %v1388
    %v1392 = vpop.permute.xlu0 %1391
    %v1395 = vsel %vm127, %v1386, 0
    %1397 = vmatpush.msra.mxu0 0.0
    %1398 = vmatpush.msra.mxu0 0.0
    %1399 = vmatpush.msra.mxu0 0.0
    %1400 = vmatpush.msra.mxu0 0.0
    %1401 = vmatpush.msra.mxu0 0.0
    %1402 = vmatpush.msra.mxu0 0.0
    %1403 = vmatpush.msra.mxu0 0.0
    %1404 = vmatpush.msra.mxu0 0.0
    %1405 = vmatpush.msra.mxu0 0.0
    %1406 = vmatpush.msra.mxu0 0.0
    %1407 = vmatpush.msra.mxu0 0.0
    %1408 = vmatpush.msra.mxu0 0.0
    %1409 = vmatpush.msra.mxu0 0.0
    %1410 = vmatpush.msra.mxu0 0.0
    %1411 = vmatpush.msra.mxu0 0.0
    %1412 = vmatpush.msra.mxu0 %v1384
    %1413 = vmatmul.f32.gmra.mxu0 %v1395
    %v1414 = vpop.f32.mrf.mxu0
    %v1415 = vadd.f32 %v1392, %v1414
    %1416 = vdwg.mxu0
    %v1417 = vmax.f32 %v1415, 0.0
    %s1418 = scalar_lea.vmem %s5, 136
    %v1419 = vld [vmem:[%s1418] sm:$0xff]
    %s1420 = scalar_lea.vmem %s6, 136
    %v1421 = vld [vmem:[%s1420] sm:$0xff]
    %1423 = vset.pattern.permute.xlu0 0
    %1424 = vperm.xlu0 %1423, %v1421
    %v1425 = vpop.permute.xlu0 %1424
    %v1428 = vsel %vm127, %v1419, 0
    %1430 = vmatpush.msra.mxu0 0.0
    %1431 = vmatpush.msra.mxu0 0.0
    %1432 = vmatpush.msra.mxu0 0.0
    %1433 = vmatpush.msra.mxu0 0.0
    %1434 = vmatpush.msra.mxu0 0.0
    %1435 = vmatpush.msra.mxu0 0.0
    %1436 = vmatpush.msra.mxu0 0.0
    %1437 = vmatpush.msra.mxu0 0.0
    %1438 = vmatpush.msra.mxu0 0.0
    %1439 = vmatpush.msra.mxu0 0.0
    %1440 = vmatpush.msra.mxu0 0.0
    %1441 = vmatpush.msra.mxu0 0.0
    %1442 = vmatpush.msra.mxu0 0.0
    %1443 = vmatpush.msra.mxu0 0.0
    %1444 = vmatpush.msra.mxu0 0.0
    %1445 = vmatpush.msra.mxu0 %v1417
    %1446 = vmatmul.f32.gmra.mxu0 %v1428
    %v1447 = vpop.f32.mrf.mxu0
    %v1448 = vadd.f32 %v1425, %v1447
    %1449 = vdwg.mxu0
    %v1450 = vmax.f32 %v1448, 0.0
    %s1451 = scalar_lea.vmem %s5, 144
    %v1452 = vld [vmem:[%s1451] sm:$0xff]
    %s1453 = scalar_lea.vmem %s6, 144
    %v1454 = vld [vmem:[%s1453] sm:$0xff]
    %1456 = vset.pattern.permute.xlu0 0
    %1457 = vperm.xlu0 %1456, %v1454
    %v1458 = vpop.permute.xlu0 %1457
    %v1461 = vsel %vm127, %v1452, 0
    %1463 = vmatpush.msra.mxu0 0.0
    %1464 = vmatpush.msra.mxu0 0.0
    %1465 = vmatpush.msra.mxu0 0.0
    %1466 = vmatpush.msra.mxu0 0.0
    %1467 = vmatpush.msra.mxu0 0.0
    %1468 = vmatpush.msra.mxu0 0.0
    %1469 = vmatpush.msra.mxu0 0.0
    %1470 = vmatpush.msra.mxu0 0.0
    %1471 = vmatpush.msra.mxu0 0.0
    %1472 = vmatpush.msra.mxu0 0.0
    %1473 = vmatpush.msra.mxu0 0.0
    %1474 = vmatpush.msra.mxu0 0.0
    %1475 = vmatpush.msra.mxu0 0.0
    %1476 = vmatpush.msra.mxu0 0.0
    %1477 = vmatpush.msra.mxu0 0.0
    %1478 = vmatpush.msra.mxu0 %v1450
    %1479 = vmatmul.f32.gmra.mxu0 %v1461
    %v1480 = vpop.f32.mrf.mxu0
    %v1481 = vadd.f32 %v1458, %v1480
    %1482 = vdwg.mxu0
    %v1483 = vmax.f32 %v1481, 0.0
    %s1484 = scalar_lea.vmem %s5, 152
    %v1485 = vld [vmem:[%s1484] sm:$0xff]
    %s1486 = scalar_lea.vmem %s6, 152
    %v1487 = vld [vmem:[%s1486] sm:$0xff]
    %1489 = vset.pattern.permute.xlu0 0
    %1490 = vperm.xlu0 %1489, %v1487
    %v1491 = vpop.permute.xlu0 %1490
    %v1494 = vsel %vm127, %v1485, 0
    %1496 = vmatpush.msra.mxu0 0.0
    %1497 = vmatpush.msra.mxu0 0.0
    %1498 = vmatpush.msra.mxu0 0.0
    %1499 = vmatpush.msra.mxu0 0.0
    %1500 = vmatpush.msra.mxu0 0.0
    %1501 = vmatpush.msra.mxu0 0.0
    %1502 = vmatpush.msra.mxu0 0.0
    %1503 = vmatpush.msra.mxu0 0.0
    %1504 = vmatpush.msra.mxu0 0.0
    %1505 = vmatpush.msra.mxu0 0.0
    %1506 = vmatpush.msra.mxu0 0.0
    %1507 = vmatpush.msra.mxu0 0.0
    %1508 = vmatpush.msra.mxu0 0.0
    %1509 = vmatpush.msra.mxu0 0.0
    %1510 = vmatpush.msra.mxu0 0.0
    %1511 = vmatpush.msra.mxu0 %v1483
    %1512 = vmatmul.f32.gmra.mxu0 %v1494
    %v1513 = vpop.f32.mrf.mxu0
    %v1514 = vadd.f32 %v1491, %v1513
    %1515 = vdwg.mxu0
    %v1516 = vmax.f32 %v1514, 0.0
    %v1517 = vmul.f32 %v1516, %v78
    %1518 = vadd.xlane.f32.xlu0 %v1517
    %v1519 = vpop.xlane.xlu0 %1518
    %v1520 = vmul.f32 %v1519, 0.01
    %v1521 = vmul.f32 %v1517, %v1516
    %1522 = vadd.xlane.f32.xlu0 %v1521
    %v1523 = vpop.xlane.xlu0 %1522
    %v1524 = vmul.f32 %v1523, 0.01
    %v1525 = vmul.f32 %v1520, %v1520
    %v1526 = vsub.f32 %v1524, %v1525
    %v1527 = vmax.f32 %v1526, 0.0
    %v1528 = vsub.f32 %v1516, %v1520
    %v1529 = vadd.f32 %v1527, 1e-05
    %v1530 = vrsqrt.pop %v1529
    %v1531 = vmul.f32 %v1530, %v1529
    %v1532 = vmul.f32 %v1531, %v1530
    %v1533 = vmul.f32 0.5, %v1532
    %v1534 = vsub.f32 1.5, %v1533
    %v1535 = vmul.f32 %v1530, %v1534
    %vm1536 = vweird.f32 %v1529
    %vm1537 = vweird.f32 %v1530
    %vm1538 = vmor %vm1536, %vm1537
    %v1539 = vsel %vm1538, %v1530, %v1535
    %v1540 = vmul.f32 %v1528, %v1539
    %s1541 = scalar_lea.vmem [#allocation5], 128
    %v1542 = vld [vmem:[%s1541] sm:$0xff]
    %1543 = vmatpush.msra.mxu0 %v75
    %1544 = vmatpush.msra.mxu0 %v74
    %1545 = vmatpush.msra.mxu0 %v73
    %1546 = vmatpush.msra.mxu0 %v72
    %1547 = vmatpush.msra.mxu0 %v71
    %1548 = vmatpush.msra.mxu0 %v70
    %1549 = vmatpush.msra.mxu0 %v69
    %1550 = vmatpush.msra.mxu0 %v68
    %1551 = vmatpush.msra.mxu0 %v67
    %1552 = vmatpush.msra.mxu0 %v66
    %1553 = vmatpush.msra.mxu0 %v65
    %1554 = vmatpush.msra.mxu0 %v64
    %1555 = vmatpush.msra.mxu0 %v63
    %1556 = vmatpush.msra.mxu0 %v62
    %1557 = vmatpush.msra.mxu0 %v61
    %1558 = vmatpush.msra.mxu0 %v60
    %1559 = vmatmul.f32.gmra.mxu0 %v1540
    %v1560 = vpop.f32.mrf.mxu0
    %v1561 = vadd.f32 0.0, %v1560
    %1562 = vdwg.mxu0
    %s1563 = scalar_lea.vmem [#allocation5], 136
    %v1564 = vld [vmem:[%s1563] sm:$0xff]
    %v1566 = vsel %vm127, %v1564, 0
    %1568 = vmatpush.msra.mxu0 0.0
    %1569 = vmatpush.msra.mxu0 0.0
    %1570 = vmatpush.msra.mxu0 0.0
    %1571 = vmatpush.msra.mxu0 0.0
    %1572 = vmatpush.msra.mxu0 0.0
    %1573 = vmatpush.msra.mxu0 0.0
    %1574 = vmatpush.msra.mxu0 0.0
    %1575 = vmatpush.msra.mxu0 0.0
    %1576 = vmatpush.msra.mxu0 0.0
    %1577 = vmatpush.msra.mxu0 0.0
    %1578 = vmatpush.msra.mxu0 0.0
    %1579 = vmatpush.msra.mxu0 0.0
    %1580 = vmatpush.msra.mxu0 0.0
    %1581 = vmatpush.msra.mxu0 0.0
    %1582 = vmatpush.msra.mxu0 0.0
    %1583 = vmatpush.msra.mxu0 %v1561
    %1584 = vmatmul.f32.gmra.mxu0 %v1566
    %v1585 = vpop.f32.mrf.mxu0
    %v1586 = vadd.f32 0.0, %v1585
    %1587 = vdwg.mxu0
    %v1589 = vsel %vm127, %v1542, 0
    %1591 = vmatpush.msra.mxu0 0.0
    %1592 = vmatpush.msra.mxu0 0.0
    %1593 = vmatpush.msra.mxu0 0.0
    %1594 = vmatpush.msra.mxu0 0.0
    %1595 = vmatpush.msra.mxu0 0.0
    %1596 = vmatpush.msra.mxu0 0.0
    %1597 = vmatpush.msra.mxu0 0.0
    %1598 = vmatpush.msra.mxu0 0.0
    %1599 = vmatpush.msra.mxu0 0.0
    %1600 = vmatpush.msra.mxu0 0.0
    %1601 = vmatpush.msra.mxu0 0.0
    %1602 = vmatpush.msra.mxu0 0.0
    %1603 = vmatpush.msra.mxu0 0.0
    %1604 = vmatpush.msra.mxu0 0.0
    %1605 = vmatpush.msra.mxu0 0.0
    %1606 = vmatpush.msra.mxu0 %v1540
    %1607 = vmatmul.f32.gmra.mxu0 %v1589
    %v1608 = vpop.f32.mrf.mxu0
    %v1609 = vadd.f32 %v1586, %v1608
    %1610 = vdwg.mxu0
    %1611 = vmatpush.msra.mxu0 %v75
    %1612 = vmatpush.msra.mxu0 %v74
    %1613 = vmatpush.msra.mxu0 %v73
    %1614 = vmatpush.msra.mxu0 %v72
    %1615 = vmatpush.msra.mxu0 %v71
    %1616 = vmatpush.msra.mxu0 %v70
    %1617 = vmatpush.msra.mxu0 %v69
    %1618 = vmatpush.msra.mxu0 %v68
    %1619 = vmatpush.msra.mxu0 %v67
    %1620 = vmatpush.msra.mxu0 %v66
    %1621 = vmatpush.msra.mxu0 %v65
    %1622 = vmatpush.msra.mxu0 %v64
    %1623 = vmatpush.msra.mxu0 %v63
    %1624 = vmatpush.msra.mxu0 %v62
    %1625 = vmatpush.msra.mxu0 %v61
    %1626 = vmatpush.msra.mxu0 %v60
    %1627 = vmatmul.f32.gmra.mxu0 %v1561
    %v1628 = vpop.f32.mrf.mxu0
    %v1629 = vadd.f32 0.0, %v1628
    %1630 = vdwg.mxu0
    %s1631 = scalar_lea.vmem [#allocation5], 144
    %v1632 = vld [vmem:[%s1631] sm:$0xff]
    %v1634 = vsel %vm127, %v1632, 0
    %1636 = vmatpush.msra.mxu0 0.0
    %1637 = vmatpush.msra.mxu0 0.0
    %1638 = vmatpush.msra.mxu0 0.0
    %1639 = vmatpush.msra.mxu0 0.0
    %1640 = vmatpush.msra.mxu0 0.0
    %1641 = vmatpush.msra.mxu0 0.0
    %1642 = vmatpush.msra.mxu0 0.0
    %1643 = vmatpush.msra.mxu0 0.0
    %1644 = vmatpush.msra.mxu0 0.0
    %1645 = vmatpush.msra.mxu0 0.0
    %1646 = vmatpush.msra.mxu0 0.0
    %1647 = vmatpush.msra.mxu0 0.0
    %1648 = vmatpush.msra.mxu0 0.0
    %1649 = vmatpush.msra.mxu0 0.0
    %1650 = vmatpush.msra.mxu0 0.0
    %1651 = vmatpush.msra.mxu0 %v1629
    %1652 = vmatmul.f32.gmra.mxu0 %v1634
    %v1653 = vpop.f32.mrf.mxu0
    %v1654 = vadd.f32 0.0, %v1653
    %1655 = vdwg.mxu0
    %v1656 = vadd.f32 %v1609, %v1654
    %1657 = vmatpush.msra.mxu0 %v75
    %1658 = vmatpush.msra.mxu0 %v74
    %1659 = vmatpush.msra.mxu0 %v73
    %1660 = vmatpush.msra.mxu0 %v72
    %1661 = vmatpush.msra.mxu0 %v71
    %1662 = vmatpush.msra.mxu0 %v70
    %1663 = vmatpush.msra.mxu0 %v69
    %1664 = vmatpush.msra.mxu0 %v68
    %1665 = vmatpush.msra.mxu0 %v67
    %1666 = vmatpush.msra.mxu0 %v66
    %1667 = vmatpush.msra.mxu0 %v65
    %1668 = vmatpush.msra.mxu0 %v64
    %1669 = vmatpush.msra.mxu0 %v63
    %1670 = vmatpush.msra.mxu0 %v62
    %1671 = vmatpush.msra.mxu0 %v61
    %1672 = vmatpush.msra.mxu0 %v60
    %1673 = vmatmul.f32.gmra.mxu0 %v1629
    %v1674 = vpop.f32.mrf.mxu0
    %v1675 = vadd.f32 0.0, %v1674
    %1676 = vdwg.mxu0
    %s1677 = scalar_lea.vmem [#allocation5], 152
    %v1678 = vld [vmem:[%s1677] sm:$0xff]
    %v1680 = vsel %vm127, %v1678, 0
    %1682 = vmatpush.msra.mxu0 0.0
    %1683 = vmatpush.msra.mxu0 0.0
    %1684 = vmatpush.msra.mxu0 0.0
    %1685 = vmatpush.msra.mxu0 0.0
    %1686 = vmatpush.msra.mxu0 0.0
    %1687 = vmatpush.msra.mxu0 0.0
    %1688 = vmatpush.msra.mxu0 0.0
    %1689 = vmatpush.msra.mxu0 0.0
    %1690 = vmatpush.msra.mxu0 0.0
    %1691 = vmatpush.msra.mxu0 0.0
    %1692 = vmatpush.msra.mxu0 0.0
    %1693 = vmatpush.msra.mxu0 0.0
    %1694 = vmatpush.msra.mxu0 0.0
    %1695 = vmatpush.msra.mxu0 0.0
    %1696 = vmatpush.msra.mxu0 0.0
    %1697 = vmatpush.msra.mxu0 %v1675
    %1698 = vmatmul.f32.gmra.mxu0 %v1680
    %v1699 = vpop.f32.mrf.mxu0
    %v1700 = vadd.f32 0.0, %v1699
    %1701 = vdwg.mxu0
    %v1702 = vadd.f32 %v1656, %v1700
    %s1703 = scalar_lea.vmem %s4, 32
    %v1704 = vld [vmem:[%s1703] sm:$0xff]
    %1706 = vset.pattern.permute.xlu0 0
    %1707 = vperm.xlu0 %1706, %v1704
    %v1708 = vpop.permute.xlu0 %1707
    %v1710 = vadd.f32 %v1702, %v1708
    %v1711 = vmax.f32 %v1710, 0.0
    %s1712 = scalar_lea.vmem %s5, 160
    %v1713 = vld [vmem:[%s1712] sm:$0xff]
    %s1714 = scalar_lea.vmem %s6, 160
    %v1715 = vld [vmem:[%s1714] sm:$0xff]
    %1717 = vset.pattern.permute.xlu0 0
    %1718 = vperm.xlu0 %1717, %v1715
    %v1719 = vpop.permute.xlu0 %1718
    %v1722 = vsel %vm127, %v1713, 0
    %1724 = vmatpush.msra.mxu0 0.0
    %1725 = vmatpush.msra.mxu0 0.0
    %1726 = vmatpush.msra.mxu0 0.0
    %1727 = vmatpush.msra.mxu0 0.0
    %1728 = vmatpush.msra.mxu0 0.0
    %1729 = vmatpush.msra.mxu0 0.0
    %1730 = vmatpush.msra.mxu0 0.0
    %1731 = vmatpush.msra.mxu0 0.0
    %1732 = vmatpush.msra.mxu0 0.0
    %1733 = vmatpush.msra.mxu0 0.0
    %1734 = vmatpush.msra.mxu0 0.0
    %1735 = vmatpush.msra.mxu0 0.0
    %1736 = vmatpush.msra.mxu0 0.0
    %1737 = vmatpush.msra.mxu0 0.0
    %1738 = vmatpush.msra.mxu0 0.0
    %1739 = vmatpush.msra.mxu0 %v1711
    %1740 = vmatmul.f32.gmra.mxu0 %v1722
    %v1741 = vpop.f32.mrf.mxu0
    %v1742 = vadd.f32 %v1719, %v1741
    %1743 = vdwg.mxu0
    %v1744 = vmax.f32 %v1742, 0.0
    %s1745 = scalar_lea.vmem %s5, 168
    %v1746 = vld [vmem:[%s1745] sm:$0xff]
    %s1747 = scalar_lea.vmem %s6, 168
    %v1748 = vld [vmem:[%s1747] sm:$0xff]
    %1750 = vset.pattern.permute.xlu0 0
    %1751 = vperm.xlu0 %1750, %v1748
    %v1752 = vpop.permute.xlu0 %1751
    %v1755 = vsel %vm127, %v1746, 0
    %1757 = vmatpush.msra.mxu0 0.0
    %1758 = vmatpush.msra.mxu0 0.0
    %1759 = vmatpush.msra.mxu0 0.0
    %1760 = vmatpush.msra.mxu0 0.0
    %1761 = vmatpush.msra.mxu0 0.0
    %1762 = vmatpush.msra.mxu0 0.0
    %1763 = vmatpush.msra.mxu0 0.0
    %1764 = vmatpush.msra.mxu0 0.0
    %1765 = vmatpush.msra.mxu0 0.0
    %1766 = vmatpush.msra.mxu0 0.0
    %1767 = vmatpush.msra.mxu0 0.0
    %1768 = vmatpush.msra.mxu0 0.0
    %1769 = vmatpush.msra.mxu0 0.0
    %1770 = vmatpush.msra.mxu0 0.0
    %1771 = vmatpush.msra.mxu0 0.0
    %1772 = vmatpush.msra.mxu0 %v1744
    %1773 = vmatmul.f32.gmra.mxu0 %v1755
    %v1774 = vpop.f32.mrf.mxu0
    %v1775 = vadd.f32 %v1752, %v1774
    %1776 = vdwg.mxu0
    %v1777 = vmax.f32 %v1775, 0.0
    %s1778 = scalar_lea.vmem %s5, 176
    %v1779 = vld [vmem:[%s1778] sm:$0xff]
    %s1780 = scalar_lea.vmem %s6, 176
    %v1781 = vld [vmem:[%s1780] sm:$0xff]
    %1783 = vset.pattern.permute.xlu0 0
    %1784 = vperm.xlu0 %1783, %v1781
    %v1785 = vpop.permute.xlu0 %1784
    %v1788 = vsel %vm127, %v1779, 0
    %1790 = vmatpush.msra.mxu0 0.0
    %1791 = vmatpush.msra.mxu0 0.0
    %1792 = vmatpush.msra.mxu0 0.0
    %1793 = vmatpush.msra.mxu0 0.0
    %1794 = vmatpush.msra.mxu0 0.0
    %1795 = vmatpush.msra.mxu0 0.0
    %1796 = vmatpush.msra.mxu0 0.0
    %1797 = vmatpush.msra.mxu0 0.0
    %1798 = vmatpush.msra.mxu0 0.0
    %1799 = vmatpush.msra.mxu0 0.0
    %1800 = vmatpush.msra.mxu0 0.0
    %1801 = vmatpush.msra.mxu0 0.0
    %1802 = vmatpush.msra.mxu0 0.0
    %1803 = vmatpush.msra.mxu0 0.0
    %1804 = vmatpush.msra.mxu0 0.0
    %1805 = vmatpush.msra.mxu0 %v1777
    %1806 = vmatmul.f32.gmra.mxu0 %v1788
    %v1807 = vpop.f32.mrf.mxu0
    %v1808 = vadd.f32 %v1785, %v1807
    %1809 = vdwg.mxu0
    %v1810 = vmax.f32 %v1808, 0.0
    %s1811 = scalar_lea.vmem %s5, 184
    %v1812 = vld [vmem:[%s1811] sm:$0xff]
    %s1813 = scalar_lea.vmem %s6, 184
    %v1814 = vld [vmem:[%s1813] sm:$0xff]
    %1816 = vset.pattern.permute.xlu0 0
    %1817 = vperm.xlu0 %1816, %v1814
    %v1818 = vpop.permute.xlu0 %1817
    %v1821 = vsel %vm127, %v1812, 0
    %1823 = vmatpush.msra.mxu0 0.0
    %1824 = vmatpush.msra.mxu0 0.0
    %1825 = vmatpush.msra.mxu0 0.0
    %1826 = vmatpush.msra.mxu0 0.0
    %1827 = vmatpush.msra.mxu0 0.0
    %1828 = vmatpush.msra.mxu0 0.0
    %1829 = vmatpush.msra.mxu0 0.0
    %1830 = vmatpush.msra.mxu0 0.0
    %1831 = vmatpush.msra.mxu0 0.0
    %1832 = vmatpush.msra.mxu0 0.0
    %1833 = vmatpush.msra.mxu0 0.0
    %1834 = vmatpush.msra.mxu0 0.0
    %1835 = vmatpush.msra.mxu0 0.0
    %1836 = vmatpush.msra.mxu0 0.0
    %1837 = vmatpush.msra.mxu0 0.0
    %1838 = vmatpush.msra.mxu0 %v1810
    %1839 = vmatmul.f32.gmra.mxu0 %v1821
    %v1840 = vpop.f32.mrf.mxu0
    %v1841 = vadd.f32 %v1818, %v1840
    %1842 = vdwg.mxu0
    %v1843 = vmax.f32 %v1841, 0.0
    %s1844 = scalar_lea.vmem %s5, 192
    %v1845 = vld [vmem:[%s1844] sm:$0xff]
    %s1846 = scalar_lea.vmem %s6, 192
    %v1847 = vld [vmem:[%s1846] sm:$0xff]
    %1849 = vset.pattern.permute.xlu0 0
    %1850 = vperm.xlu0 %1849, %v1847
    %v1851 = vpop.permute.xlu0 %1850
    %v1854 = vsel %vm127, %v1845, 0
    %1856 = vmatpush.msra.mxu0 0.0
    %1857 = vmatpush.msra.mxu0 0.0
    %1858 = vmatpush.msra.mxu0 0.0
    %1859 = vmatpush.msra.mxu0 0.0
    %1860 = vmatpush.msra.mxu0 0.0
    %1861 = vmatpush.msra.mxu0 0.0
    %1862 = vmatpush.msra.mxu0 0.0
    %1863 = vmatpush.msra.mxu0 0.0
    %1864 = vmatpush.msra.mxu0 0.0
    %1865 = vmatpush.msra.mxu0 0.0
    %1866 = vmatpush.msra.mxu0 0.0
    %1867 = vmatpush.msra.mxu0 0.0
    %1868 = vmatpush.msra.mxu0 0.0
    %1869 = vmatpush.msra.mxu0 0.0
    %1870 = vmatpush.msra.mxu0 0.0
    %1871 = vmatpush.msra.mxu0 %v1843
    %1872 = vmatmul.f32.gmra.mxu0 %v1854
    %v1873 = vpop.f32.mrf.mxu0
    %v1874 = vadd.f32 %v1851, %v1873
    %1875 = vdwg.mxu0
    %v1876 = vmax.f32 %v1874, 0.0
    %v1877 = vmul.f32 %v1876, %v78
    %1878 = vadd.xlane.f32.xlu0 %v1877
    %v1879 = vpop.xlane.xlu0 %1878
    %v1880 = vmul.f32 %v1879, 0.01
    %v1881 = vmul.f32 %v1877, %v1876
    %1882 = vadd.xlane.f32.xlu0 %v1881
    %v1883 = vpop.xlane.xlu0 %1882
    %v1884 = vmul.f32 %v1883, 0.01
    %v1885 = vmul.f32 %v1880, %v1880
    %v1886 = vsub.f32 %v1884, %v1885
    %v1887 = vmax.f32 %v1886, 0.0
    %v1888 = vsub.f32 %v1876, %v1880
    %v1889 = vadd.f32 %v1887, 1e-05
    %v1890 = vrsqrt.pop %v1889
    %v1891 = vmul.f32 %v1890, %v1889
    %v1892 = vmul.f32 %v1891, %v1890
    %v1893 = vmul.f32 0.5, %v1892
    %v1894 = vsub.f32 1.5, %v1893
    %v1895 = vmul.f32 %v1890, %v1894
    %vm1896 = vweird.f32 %v1889
    %vm1897 = vweird.f32 %v1890
    %vm1898 = vmor %vm1896, %vm1897
    %v1899 = vsel %vm1898, %v1890, %v1895
    %v1900 = vmul.f32 %v1888, %v1899
    %s1901 = scalar_lea.vmem [#allocation5], 160
    %v1902 = vld [vmem:[%s1901] sm:$0xff]
    %1903 = vmatpush.msra.mxu0 %v75
    %1904 = vmatpush.msra.mxu0 %v74
    %1905 = vmatpush.msra.mxu0 %v73
    %1906 = vmatpush.msra.mxu0 %v72
    %1907 = vmatpush.msra.mxu0 %v71
    %1908 = vmatpush.msra.mxu0 %v70
    %1909 = vmatpush.msra.mxu0 %v69
    %1910 = vmatpush.msra.mxu0 %v68
    %1911 = vmatpush.msra.mxu0 %v67
    %1912 = vmatpush.msra.mxu0 %v66
    %1913 = vmatpush.msra.mxu0 %v65
    %1914 = vmatpush.msra.mxu0 %v64
    %1915 = vmatpush.msra.mxu0 %v63
    %1916 = vmatpush.msra.mxu0 %v62
    %1917 = vmatpush.msra.mxu0 %v61
    %1918 = vmatpush.msra.mxu0 %v60
    %1919 = vmatmul.f32.gmra.mxu0 %v1900
    %v1920 = vpop.f32.mrf.mxu0
    %v1921 = vadd.f32 0.0, %v1920
    %1922 = vdwg.mxu0
    %s1923 = scalar_lea.vmem [#allocation5], 168
    %v1924 = vld [vmem:[%s1923] sm:$0xff]
    %v1926 = vsel %vm127, %v1924, 0
    %1928 = vmatpush.msra.mxu0 0.0
    %1929 = vmatpush.msra.mxu0 0.0
    %1930 = vmatpush.msra.mxu0 0.0
    %1931 = vmatpush.msra.mxu0 0.0
    %1932 = vmatpush.msra.mxu0 0.0
    %1933 = vmatpush.msra.mxu0 0.0
    %1934 = vmatpush.msra.mxu0 0.0
    %1935 = vmatpush.msra.mxu0 0.0
    %1936 = vmatpush.msra.mxu0 0.0
    %1937 = vmatpush.msra.mxu0 0.0
    %1938 = vmatpush.msra.mxu0 0.0
    %1939 = vmatpush.msra.mxu0 0.0
    %1940 = vmatpush.msra.mxu0 0.0
    %1941 = vmatpush.msra.mxu0 0.0
    %1942 = vmatpush.msra.mxu0 0.0
    %1943 = vmatpush.msra.mxu0 %v1921
    %1944 = vmatmul.f32.gmra.mxu0 %v1926
    %v1945 = vpop.f32.mrf.mxu0
    %v1946 = vadd.f32 0.0, %v1945
    %1947 = vdwg.mxu0
    %v1949 = vsel %vm127, %v1902, 0
    %1951 = vmatpush.msra.mxu0 0.0
    %1952 = vmatpush.msra.mxu0 0.0
    %1953 = vmatpush.msra.mxu0 0.0
    %1954 = vmatpush.msra.mxu0 0.0
    %1955 = vmatpush.msra.mxu0 0.0
    %1956 = vmatpush.msra.mxu0 0.0
    %1957 = vmatpush.msra.mxu0 0.0
    %1958 = vmatpush.msra.mxu0 0.0
    %1959 = vmatpush.msra.mxu0 0.0
    %1960 = vmatpush.msra.mxu0 0.0
    %1961 = vmatpush.msra.mxu0 0.0
    %1962 = vmatpush.msra.mxu0 0.0
    %1963 = vmatpush.msra.mxu0 0.0
    %1964 = vmatpush.msra.mxu0 0.0
    %1965 = vmatpush.msra.mxu0 0.0
    %1966 = vmatpush.msra.mxu0 %v1900
    %1967 = vmatmul.f32.gmra.mxu0 %v1949
    %v1968 = vpop.f32.mrf.mxu0
    %v1969 = vadd.f32 %v1946, %v1968
    %1970 = vdwg.mxu0
    %1971 = vmatpush.msra.mxu0 %v75
    %1972 = vmatpush.msra.mxu0 %v74
    %1973 = vmatpush.msra.mxu0 %v73
    %1974 = vmatpush.msra.mxu0 %v72
    %1975 = vmatpush.msra.mxu0 %v71
    %1976 = vmatpush.msra.mxu0 %v70
    %1977 = vmatpush.msra.mxu0 %v69
    %1978 = vmatpush.msra.mxu0 %v68
    %1979 = vmatpush.msra.mxu0 %v67
    %1980 = vmatpush.msra.mxu0 %v66
    %1981 = vmatpush.msra.mxu0 %v65
    %1982 = vmatpush.msra.mxu0 %v64
    %1983 = vmatpush.msra.mxu0 %v63
    %1984 = vmatpush.msra.mxu0 %v62
    %1985 = vmatpush.msra.mxu0 %v61
    %1986 = vmatpush.msra.mxu0 %v60
    %1987 = vmatmul.f32.gmra.mxu0 %v1921
    %v1988 = vpop.f32.mrf.mxu0
    %v1989 = vadd.f32 0.0, %v1988
    %1990 = vdwg.mxu0
    %s1991 = scalar_lea.vmem [#allocation5], 176
    %v1992 = vld [vmem:[%s1991] sm:$0xff]
    %v1994 = vsel %vm127, %v1992, 0
    %1996 = vmatpush.msra.mxu0 0.0
    %1997 = vmatpush.msra.mxu0 0.0
    %1998 = vmatpush.msra.mxu0 0.0
    %1999 = vmatpush.msra.mxu0 0.0
    %2000 = vmatpush.msra.mxu0 0.0
    %2001 = vmatpush.msra.mxu0 0.0
    %2002 = vmatpush.msra.mxu0 0.0
    %2003 = vmatpush.msra.mxu0 0.0
    %2004 = vmatpush.msra.mxu0 0.0
    %2005 = vmatpush.msra.mxu0 0.0
    %2006 = vmatpush.msra.mxu0 0.0
    %2007 = vmatpush.msra.mxu0 0.0
    %2008 = vmatpush.msra.mxu0 0.0
    %2009 = vmatpush.msra.mxu0 0.0
    %2010 = vmatpush.msra.mxu0 0.0
    %2011 = vmatpush.msra.mxu0 %v1989
    %2012 = vmatmul.f32.gmra.mxu0 %v1994
    %v2013 = vpop.f32.mrf.mxu0
    %v2014 = vadd.f32 0.0, %v2013
    %2015 = vdwg.mxu0
    %v2016 = vadd.f32 %v1969, %v2014
    %2017 = vmatpush.msra.mxu0 %v75
    %2018 = vmatpush.msra.mxu0 %v74
    %2019 = vmatpush.msra.mxu0 %v73
    %2020 = vmatpush.msra.mxu0 %v72
    %2021 = vmatpush.msra.mxu0 %v71
    %2022 = vmatpush.msra.mxu0 %v70
    %2023 = vmatpush.msra.mxu0 %v69
    %2024 = vmatpush.msra.mxu0 %v68
    %2025 = vmatpush.msra.mxu0 %v67
    %2026 = vmatpush.msra.mxu0 %v66
    %2027 = vmatpush.msra.mxu0 %v65
    %2028 = vmatpush.msra.mxu0 %v64
    %2029 = vmatpush.msra.mxu0 %v63
    %2030 = vmatpush.msra.mxu0 %v62
    %2031 = vmatpush.msra.mxu0 %v61
    %2032 = vmatpush.msra.mxu0 %v60
    %2033 = vmatmul.f32.gmra.mxu0 %v1989
    %v2034 = vpop.f32.mrf.mxu0
    %v2035 = vadd.f32 0.0, %v2034
    %2036 = vdwg.mxu0
    %s2037 = scalar_lea.vmem [#allocation5], 184
    %v2038 = vld [vmem:[%s2037] sm:$0xff]
    %v2040 = vsel %vm127, %v2038, 0
    %2042 = vmatpush.msra.mxu0 0.0
    %2043 = vmatpush.msra.mxu0 0.0
    %2044 = vmatpush.msra.mxu0 0.0
    %2045 = vmatpush.msra.mxu0 0.0
    %2046 = vmatpush.msra.mxu0 0.0
    %2047 = vmatpush.msra.mxu0 0.0
    %2048 = vmatpush.msra.mxu0 0.0
    %2049 = vmatpush.msra.mxu0 0.0
    %2050 = vmatpush.msra.mxu0 0.0
    %2051 = vmatpush.msra.mxu0 0.0
    %2052 = vmatpush.msra.mxu0 0.0
    %2053 = vmatpush.msra.mxu0 0.0
    %2054 = vmatpush.msra.mxu0 0.0
    %2055 = vmatpush.msra.mxu0 0.0
    %2056 = vmatpush.msra.mxu0 0.0
    %2057 = vmatpush.msra.mxu0 %v2035
    %2058 = vmatmul.f32.gmra.mxu0 %v2040
    %v2059 = vpop.f32.mrf.mxu0
    %v2060 = vadd.f32 0.0, %v2059
    %2061 = vdwg.mxu0
    %v2062 = vadd.f32 %v2016, %v2060
    %s2063 = scalar_lea.vmem %s4, 40
    %v2064 = vld [vmem:[%s2063] sm:$0xff]
    %2066 = vset.pattern.permute.xlu0 0
    %2067 = vperm.xlu0 %2066, %v2064
    %v2068 = vpop.permute.xlu0 %2067
    %v2070 = vadd.f32 %v2062, %v2068
    %v2071 = vmax.f32 %v2070, 0.0
    %s2072 = scalar_lea.vmem %s5, 200
    %v2073 = vld [vmem:[%s2072] sm:$0xff]
    %s2074 = scalar_lea.vmem %s6, 200
    %v2075 = vld [vmem:[%s2074] sm:$0xff]
    %2077 = vset.pattern.permute.xlu0 0
    %2078 = vperm.xlu0 %2077, %v2075
    %v2079 = vpop.permute.xlu0 %2078
    %v2082 = vsel %vm127, %v2073, 0
    %2084 = vmatpush.msra.mxu0 0.0
    %2085 = vmatpush.msra.mxu0 0.0
    %2086 = vmatpush.msra.mxu0 0.0
    %2087 = vmatpush.msra.mxu0 0.0
    %2088 = vmatpush.msra.mxu0 0.0
    %2089 = vmatpush.msra.mxu0 0.0
    %2090 = vmatpush.msra.mxu0 0.0
    %2091 = vmatpush.msra.mxu0 0.0
    %2092 = vmatpush.msra.mxu0 0.0
    %2093 = vmatpush.msra.mxu0 0.0
    %2094 = vmatpush.msra.mxu0 0.0
    %2095 = vmatpush.msra.mxu0 0.0
    %2096 = vmatpush.msra.mxu0 0.0
    %2097 = vmatpush.msra.mxu0 0.0
    %2098 = vmatpush.msra.mxu0 0.0
    %2099 = vmatpush.msra.mxu0 %v2071
    %2100 = vmatmul.f32.gmra.mxu0 %v2082
    %v2101 = vpop.f32.mrf.mxu0
    %v2102 = vadd.f32 %v2079, %v2101
    %2103 = vdwg.mxu0
    %v2104 = vmax.f32 %v2102, 0.0
    %s2105 = scalar_lea.vmem %s5, 208
    %v2106 = vld [vmem:[%s2105] sm:$0xff]
    %s2107 = scalar_lea.vmem %s6, 208
    %v2108 = vld [vmem:[%s2107] sm:$0xff]
    %2110 = vset.pattern.permute.xlu0 0
    %2111 = vperm.xlu0 %2110, %v2108
    %v2112 = vpop.permute.xlu0 %2111
    %v2115 = vsel %vm127, %v2106, 0
    %2117 = vmatpush.msra.mxu0 0.0
    %2118 = vmatpush.msra.mxu0 0.0
    %2119 = vmatpush.msra.mxu0 0.0
    %2120 = vmatpush.msra.mxu0 0.0
    %2121 = vmatpush.msra.mxu0 0.0
    %2122 = vmatpush.msra.mxu0 0.0
    %2123 = vmatpush.msra.mxu0 0.0
    %2124 = vmatpush.msra.mxu0 0.0
    %2125 = vmatpush.msra.mxu0 0.0
    %2126 = vmatpush.msra.mxu0 0.0
    %2127 = vmatpush.msra.mxu0 0.0
    %2128 = vmatpush.msra.mxu0 0.0
    %2129 = vmatpush.msra.mxu0 0.0
    %2130 = vmatpush.msra.mxu0 0.0
    %2131 = vmatpush.msra.mxu0 0.0
    %2132 = vmatpush.msra.mxu0 %v2104
    %2133 = vmatmul.f32.gmra.mxu0 %v2115
    %v2134 = vpop.f32.mrf.mxu0
    %v2135 = vadd.f32 %v2112, %v2134
    %2136 = vdwg.mxu0
    %v2137 = vmax.f32 %v2135, 0.0
    %s2138 = scalar_lea.vmem %s5, 216
    %v2139 = vld [vmem:[%s2138] sm:$0xff]
    %s2140 = scalar_lea.vmem %s6, 216
    %v2141 = vld [vmem:[%s2140] sm:$0xff]
    %2143 = vset.pattern.permute.xlu0 0
    %2144 = vperm.xlu0 %2143, %v2141
    %v2145 = vpop.permute.xlu0 %2144
    %v2148 = vsel %vm127, %v2139, 0
    %2150 = vmatpush.msra.mxu0 0.0
    %2151 = vmatpush.msra.mxu0 0.0
    %2152 = vmatpush.msra.mxu0 0.0
    %2153 = vmatpush.msra.mxu0 0.0
    %2154 = vmatpush.msra.mxu0 0.0
    %2155 = vmatpush.msra.mxu0 0.0
    %2156 = vmatpush.msra.mxu0 0.0
    %2157 = vmatpush.msra.mxu0 0.0
    %2158 = vmatpush.msra.mxu0 0.0
    %2159 = vmatpush.msra.mxu0 0.0
    %2160 = vmatpush.msra.mxu0 0.0
    %2161 = vmatpush.msra.mxu0 0.0
    %2162 = vmatpush.msra.mxu0 0.0
    %2163 = vmatpush.msra.mxu0 0.0
    %2164 = vmatpush.msra.mxu0 0.0
    %2165 = vmatpush.msra.mxu0 %v2137
    %2166 = vmatmul.f32.gmra.mxu0 %v2148
    %v2167 = vpop.f32.mrf.mxu0
    %v2168 = vadd.f32 %v2145, %v2167
    %2169 = vdwg.mxu0
    %v2170 = vmax.f32 %v2168, 0.0
    %s2171 = scalar_lea.vmem %s5, 224
    %v2172 = vld [vmem:[%s2171] sm:$0xff]
    %s2173 = scalar_lea.vmem %s6, 224
    %v2174 = vld [vmem:[%s2173] sm:$0xff]
    %2176 = vset.pattern.permute.xlu0 0
    %2177 = vperm.xlu0 %2176, %v2174
    %v2178 = vpop.permute.xlu0 %2177
    %v2181 = vsel %vm127, %v2172, 0
    %2183 = vmatpush.msra.mxu0 0.0
    %2184 = vmatpush.msra.mxu0 0.0
    %2185 = vmatpush.msra.mxu0 0.0
    %2186 = vmatpush.msra.mxu0 0.0
    %2187 = vmatpush.msra.mxu0 0.0
    %2188 = vmatpush.msra.mxu0 0.0
    %2189 = vmatpush.msra.mxu0 0.0
    %2190 = vmatpush.msra.mxu0 0.0
    %2191 = vmatpush.msra.mxu0 0.0
    %2192 = vmatpush.msra.mxu0 0.0
    %2193 = vmatpush.msra.mxu0 0.0
    %2194 = vmatpush.msra.mxu0 0.0
    %2195 = vmatpush.msra.mxu0 0.0
    %2196 = vmatpush.msra.mxu0 0.0
    %2197 = vmatpush.msra.mxu0 0.0
    %2198 = vmatpush.msra.mxu0 %v2170
    %2199 = vmatmul.f32.gmra.mxu0 %v2181
    %v2200 = vpop.f32.mrf.mxu0
    %v2201 = vadd.f32 %v2178, %v2200
    %2202 = vdwg.mxu0
    %v2203 = vmax.f32 %v2201, 0.0
    %s2204 = scalar_lea.vmem %s5, 232
    %v2205 = vld [vmem:[%s2204] sm:$0xff]
    %s2206 = scalar_lea.vmem %s6, 232
    %v2207 = vld [vmem:[%s2206] sm:$0xff]
    %2209 = vset.pattern.permute.xlu0 0
    %2210 = vperm.xlu0 %2209, %v2207
    %v2211 = vpop.permute.xlu0 %2210
    %v2214 = vsel %vm127, %v2205, 0
    %2216 = vmatpush.msra.mxu0 0.0
    %2217 = vmatpush.msra.mxu0 0.0
    %2218 = vmatpush.msra.mxu0 0.0
    %2219 = vmatpush.msra.mxu0 0.0
    %2220 = vmatpush.msra.mxu0 0.0
    %2221 = vmatpush.msra.mxu0 0.0
    %2222 = vmatpush.msra.mxu0 0.0
    %2223 = vmatpush.msra.mxu0 0.0
    %2224 = vmatpush.msra.mxu0 0.0
    %2225 = vmatpush.msra.mxu0 0.0
    %2226 = vmatpush.msra.mxu0 0.0
    %2227 = vmatpush.msra.mxu0 0.0
    %2228 = vmatpush.msra.mxu0 0.0
    %2229 = vmatpush.msra.mxu0 0.0
    %2230 = vmatpush.msra.mxu0 0.0
    %2231 = vmatpush.msra.mxu0 %v2203
    %2232 = vmatmul.f32.gmra.mxu0 %v2214
    %v2233 = vpop.f32.mrf.mxu0
    %v2234 = vadd.f32 %v2211, %v2233
    %2235 = vdwg.mxu0
    %v2236 = vmax.f32 %v2234, 0.0
    %2237 = vst [vmem:[#allocation7] sm:$0xff] %v2236
    // Predicated region
    $region38: #{tpu_custom_call.1} parent=1 // pred_check
      _
    $region39: #{tpu_custom_call.1} parent=1 // pred_check_branch
      %2239 = sbr.rel (0) target = $region41
    $region40: #{tpu_custom_call.1} parent=1 // pred_region
      %2241 = vsyncadd [#allocation4], 0
      %s2243 = sshll.u32 [#allocation7], 4
      %s2244 = int_to_ptr.vmem [resolvable:$true] %s2243
      %s2245 = sshll.u32 %s7, 4
      %s2246 = int_to_ptr.hbm [resolvable:$true] %s2245
      %2248 = dma.vmem_to_hbm [thread:$0]  %s2244, 128, %s2246, [#allocation4]
    $region41: #{tpu_custom_call.1} parent=1 // pred_fallthru
      _
    // Predicated region
    $region42: #{tpu_custom_call.1} parent=1 // pred_check
      _
    $region43: #{tpu_custom_call.1} parent=1 // pred_check_branch
      %2250 = sbr.rel (0) target = $region45
    $region44: #{tpu_custom_call.1} parent=1 // pred_region
      %2252 = dma.done [#allocation4], 128
    $region45: #{tpu_custom_call.1} parent=1 // pred_fallthru
      _
    %2253 = vsyncpa [#allocation3], 1
    %2254 = vsyncpa [#allocation6], 1
    %2255 = vsyncpa [#allocation4], 1

</llo_original>
